<compile_context>
chip_gen: v7x
topology: tpu7x:2x2x1
jax: 0.10.0
libtpu: 0.0.40
codegen_flags: <defaults>
</compile_context>

<pallas_src>
import jax
import jax.numpy as jnp
from jax.experimental import pallas as pl
from jax.experimental.pallas import tpu as pltpu

N, H, W = 2, 28, 28            # input spatial implied by fc(588 = 3*14*14) -> 28x28
C_OUT = 3
PH, PW = H // 2, W // 2        # 14 x 14 pooled spatial
FC_IN = C_OUT * PH * PW        # 588
FC_OUT = 10
BN_EPS = 1e-5
HE, WE = H + 1, W + 1          # 29x29 extended conv domain (extra row/col lets the
                               # 2x2 pool read plain unit-stride shifted views)


def net_kernel(x_ref, cw_ref, cb_ref, g_ref, bt_ref, wsc_ref, fb_ref, o_ref):
    """Whole forward in one kernel: conv + ReLU + BN + 2x2 maxpool + flatten + FC.

    x_ref:   (N, H+3, W+3) f32 VMEM   zero-padded input (rows/cols -1 .. H+1)
    cw_ref:  (27,)  f32 SMEM          conv weight flattened as [c, kh, kw]
    cb_ref:  (3,)   f32 SMEM          conv bias
    g_ref:   (3,)   f32 SMEM          BN gamma
    bt_ref:  (3,)   f32 SMEM          BN beta
    wsc_ref: (3, 14, 28, 10) f32 VMEM scattered FC weight:
             wsc[c, i, 2j, o] = fc_w[o, c*196 + i*14 + j], odd lanes are 0.
    fb_ref:  (1, 10) f32 VMEM         FC bias
    o_ref:   (N, 10) f32 VMEM
    """
    x = x_ref[...]                                        # (N, 31, 31)

    # ---- Conv2d(1->3, k=3, pad=1) on the 29x29 extended domain --------------
    # Each of the 9 shifted views is sliced ONCE and shared by all channels;
    # bias is folded into the first multiply-accumulate.
    acc = [None] * C_OUT
    for t in range(9):
        kh, kw = divmod(t, 3)
        tap = x[:, kh:kh + HE, kw:kw + WE]                # (N, 29, 29) unit-stride view
        for c in range(C_OUT):
            w = cw_ref[9 * c + t]
            if t == 0:
                acc[c] = tap * w + cb_ref[c]
            else:
                acc[c] = acc[c] + tap * w

    out = jnp.zeros((N, FC_OUT), jnp.float32)
    for c in range(C_OUT):
        a = jnp.maximum(acc[c], 0.0)                      # ReLU, (N, 29, 29)

        # BatchNorm2d training-mode stats over the valid 28x28 region only,
        # folded into a single scale/shift (scalar precompute rides the scalar unit).
        v = a[:, :H, :W]
        mean = jnp.mean(v)
        var = jnp.maximum(jnp.mean(v * v) - mean * mean, 0.0)
        scale = jax.lax.rsqrt(var + BN_EPS) * g_ref[c]
        shift = bt_ref[c] - mean * scale
        y = a * scale + shift                             # (N, 29, 29)

        # 2x2 max at every position via four unit-stride shifted views; only the
        # even (i, j) entries are real pooled outputs, the junk entries get
        # multiplied by the zero lanes of the scattered FC weight.
        cm = jnp.maximum(jnp.maximum(y[:, :H, :W], y[:, :H, 1:WE]),
                         jnp.maximum(y[:, 1:HE, :W], y[:, 1:HE, 1:WE]))  # (N, 28, 28)

        # Fused FC: contract each even row against its scattered weight slab on
        # the (otherwise idle) MXU; flatten/compaction is absorbed into wsc.
        for i in range(PH):
            out = out + jnp.dot(cm[:, 2 * i, :], wsc_ref[c, i],
                                preferred_element_type=jnp.float32)

    o_ref[...] = out + fb_ref[...]


def prepare_params(conv_w, conv_b, bn_gamma, bn_beta, fc_w, fc_b):
    """One-time parameter re-layout, done OUTSIDE the jitted forward (no per-call
    transpose/reshape HLOs)."""
    cw_flat = conv_w.reshape(-1)                                          # (27,) [c, kh, kw]
    # Scatter fc_w so the "max at even positions" activations can be consumed
    # without any in-kernel compaction/reshape.
    w_r = jnp.transpose(fc_w.reshape(FC_OUT, C_OUT, PH, PW), (1, 2, 3, 0))  # (3, 14, 14, 10)
    wsc = jnp.zeros((C_OUT, PH, W, FC_OUT), fc_w.dtype).at[:, :, 0::2, :].set(w_r)
    return cw_flat, conv_b, bn_gamma, bn_beta, wsc, fc_b.reshape(1, FC_OUT)


@jax.jit
def net_forward(x, cw_flat, conv_b, bn_gamma, bn_beta, wsc, fb):
    # TODO(synk): the zero-pad stays as one tiny XLA glue op; doing it in-kernel
    # would need an unaligned lane-offset store into a VMEM scratch, which does
    # not lower reliably at this layout.
    x_pad = jnp.pad(x[:, 0, :, :], ((0, 0), (1, 2), (1, 2)))              # (N, 31, 31)
    return pl.pallas_call(
        net_kernel,
        out_shape=jax.ShapeDtypeStruct((N, FC_OUT), jnp.float32),
        in_specs=[
            pl.BlockSpec(memory_space=pltpu.MemorySpace.VMEM),   # padded input
            pl.BlockSpec(memory_space=pltpu.MemorySpace.SMEM),   # conv w (27,)
            pl.BlockSpec(memory_space=pltpu.MemorySpace.SMEM),   # conv b (3,)
            pl.BlockSpec(memory_space=pltpu.MemorySpace.SMEM),   # bn gamma (3,)
            pl.BlockSpec(memory_space=pltpu.MemorySpace.SMEM),   # bn beta (3,)
            pl.BlockSpec(memory_space=pltpu.MemorySpace.VMEM),   # scattered fc w
            pl.BlockSpec(memory_space=pltpu.MemorySpace.VMEM),   # fc bias (1, 10)
        ],
        out_specs=pl.BlockSpec(memory_space=pltpu.MemorySpace.VMEM),
        # No grid: the whole problem (<100 KB) lives in VMEM in one invocation.
        # TODO(synk): for real batch sizes, add a grid over N with
        # dimension_semantics=("parallel",) to use v7x's second TensorCore; BN
        # stats would then need a cross-tile reduction.
    )(x_pad, cw_flat, conv_b, bn_gamma, bn_beta, wsc, fb)


def reference_forward(x, conv_w, conv_b, bn_gamma, bn_beta, fc_w, fc_b):
    """Pure-JAX reference of the PyTorch forward (training-mode BN)."""
    h = jax.lax.conv_general_dilated(
        x, conv_w, window_strides=(1, 1), padding=((1, 1), (1, 1)),
        dimension_numbers=('NCHW', 'OIHW', 'NCHW'),
        precision=jax.lax.Precision.HIGHEST)
    h = h + conv_b[None, :, None, None]
    h = jnp.maximum(h, 0.0)
    mean = h.mean(axis=(0, 2, 3), keepdims=True)
    var = ((h - mean) ** 2).mean(axis=(0, 2, 3), keepdims=True)
    h = (h - mean) * jax.lax.rsqrt(var + BN_EPS)
    h = h * bn_gamma[None, :, None, None] + bn_beta[None, :, None, None]
    h = h.reshape(N, C_OUT, PH, 2, PW, 2).max(axis=(3, 5))
    h = h.reshape(N, FC_IN)
    return jnp.dot(h, fc_w.T, precision=jax.lax.Precision.HIGHEST) + fc_b


if __name__ == "__main__":
    key = jax.random.PRNGKey(0)
    kx, kw, kb, kfw, kfb = jax.random.split(key, 5)

    # Deterministic synthetic parameters (PyTorch-layout shapes).
    x = jax.random.normal(kx, (N, 1, H, W), jnp.float32)
    conv_w = jax.random.normal(kw, (C_OUT, 1, 3, 3), jnp.float32) * 0.2   # (out, in, kh, kw)
    conv_b = jax.random.normal(kb, (C_OUT,), jnp.float32) * 0.1
    bn_gamma = jnp.ones((C_OUT,), jnp.float32)    # nn.BatchNorm2d default init
    bn_beta = jnp.zeros((C_OUT,), jnp.float32)
    fc_w = jax.random.normal(kfw, (FC_OUT, FC_IN), jnp.float32) * 0.05    # (out, in)
    fc_b = jax.random.normal(kfb, (FC_OUT,), jnp.float32) * 0.05

    params = prepare_params(conv_w, conv_b, bn_gamma, bn_beta, fc_w, fc_b)
    out = jax.block_until_ready(net_forward(x, *params))

    ref = reference_forward(x, conv_w, conv_b, bn_gamma, bn_beta, fc_w, fc_b)
    assert out.shape == (N, FC_OUT)
    assert bool(jnp.all(jnp.isfinite(out)))
    assert jnp.allclose(out, ref, atol=2e-2, rtol=2e-2), (out, ref)
    print("KERNEL_OK")
</pallas_src>

<mosaic_0001>
module attributes {stable_mosaic.version = 11 : i64} {
  func.func @net_kernel(%arg0: memref<2x31x31xf32, #tpu.memory_space<vmem>>, %arg1: memref<27xf32, #tpu.memory_space<smem>>, %arg2: memref<3xf32, #tpu.memory_space<smem>>, %arg3: memref<3xf32, #tpu.memory_space<smem>>, %arg4: memref<3xf32, #tpu.memory_space<smem>>, %arg5: memref<3x14x28x10xf32, #tpu.memory_space<vmem>>, %arg6: memref<1x10xf32, #tpu.memory_space<vmem>>, %arg7: memref<2x10xf32, #tpu.memory_space<vmem>>) attributes {dimension_semantics = [], scalar_prefetch = 0 : i64, scratch_operands = 0 : i64, tpu.core_type = #tpu.core_type<tc>} {
    %c0 = arith.constant 0 : index
    %c0_0 = arith.constant 0 : index
    %c0_1 = arith.constant 0 : index
    %0 = vector.load %arg0[%c0, %c0_0, %c0_1] : memref<2x31x31xf32, #tpu.memory_space<vmem>>, vector<2x31x31xf32>
    %1 = vector.extract_strided_slice %0 {offsets = [0, 0, 0], sizes = [2, 29, 29], strides = [1, 1, 1]} : vector<2x31x31xf32> to vector<2x29x29xf32>
    %c0_2 = arith.constant 0 : index
    %2 = memref.load %arg1[%c0_2] : memref<27xf32, #tpu.memory_space<smem>>
    %3 = vector.broadcast %2 : f32 to vector<2x29x29xf32>
    %4 = arith.mulf %1, %3 : vector<2x29x29xf32>
    %c0_3 = arith.constant 0 : index
    %5 = memref.load %arg2[%c0_3] : memref<3xf32, #tpu.memory_space<smem>>
    %6 = vector.broadcast %5 : f32 to vector<2x29x29xf32>
    %7 = arith.addf %4, %6 : vector<2x29x29xf32>
    %c9 = arith.constant 9 : index
    %8 = memref.load %arg1[%c9] : memref<27xf32, #tpu.memory_space<smem>>
    %9 = vector.broadcast %8 : f32 to vector<2x29x29xf32>
    %10 = arith.mulf %1, %9 : vector<2x29x29xf32>
    %c1 = arith.constant 1 : index
    %11 = memref.load %arg2[%c1] : memref<3xf32, #tpu.memory_space<smem>>
    %12 = vector.broadcast %11 : f32 to vector<2x29x29xf32>
    %13 = arith.addf %10, %12 : vector<2x29x29xf32>
    %c18 = arith.constant 18 : index
    %14 = memref.load %arg1[%c18] : memref<27xf32, #tpu.memory_space<smem>>
    %15 = vector.broadcast %14 : f32 to vector<2x29x29xf32>
    %16 = arith.mulf %1, %15 : vector<2x29x29xf32>
    %c2 = arith.constant 2 : index
    %17 = memref.load %arg2[%c2] : memref<3xf32, #tpu.memory_space<smem>>
    %18 = vector.broadcast %17 : f32 to vector<2x29x29xf32>
    %19 = arith.addf %16, %18 : vector<2x29x29xf32>
    %20 = vector.extract_strided_slice %0 {offsets = [0, 0, 1], sizes = [2, 29, 29], strides = [1, 1, 1]} : vector<2x31x31xf32> to vector<2x29x29xf32>
    %c1_4 = arith.constant 1 : index
    %21 = memref.load %arg1[%c1_4] : memref<27xf32, #tpu.memory_space<smem>>
    %22 = vector.broadcast %21 : f32 to vector<2x29x29xf32>
    %23 = arith.mulf %20, %22 : vector<2x29x29xf32>
    %24 = arith.addf %7, %23 : vector<2x29x29xf32>
    %c10 = arith.constant 10 : index
    %25 = memref.load %arg1[%c10] : memref<27xf32, #tpu.memory_space<smem>>
    %26 = vector.broadcast %25 : f32 to vector<2x29x29xf32>
    %27 = arith.mulf %20, %26 : vector<2x29x29xf32>
    %28 = arith.addf %13, %27 : vector<2x29x29xf32>
    %c19 = arith.constant 19 : index
    %29 = memref.load %arg1[%c19] : memref<27xf32, #tpu.memory_space<smem>>
    %30 = vector.broadcast %29 : f32 to vector<2x29x29xf32>
    %31 = arith.mulf %20, %30 : vector<2x29x29xf32>
    %32 = arith.addf %19, %31 : vector<2x29x29xf32>
    %33 = vector.extract_strided_slice %0 {offsets = [0, 0, 2], sizes = [2, 29, 29], strides = [1, 1, 1]} : vector<2x31x31xf32> to vector<2x29x29xf32>
    %c2_5 = arith.constant 2 : index
    %34 = memref.load %arg1[%c2_5] : memref<27xf32, #tpu.memory_space<smem>>
    %35 = vector.broadcast %34 : f32 to vector<2x29x29xf32>
    %36 = arith.mulf %33, %35 : vector<2x29x29xf32>
    %37 = arith.addf %24, %36 : vector<2x29x29xf32>
    %c11 = arith.constant 11 : index
    %38 = memref.load %arg1[%c11] : memref<27xf32, #tpu.memory_space<smem>>
    %39 = vector.broadcast %38 : f32 to vector<2x29x29xf32>
    %40 = arith.mulf %33, %39 : vector<2x29x29xf32>
    %41 = arith.addf %28, %40 : vector<2x29x29xf32>
    %c20 = arith.constant 20 : index
    %42 = memref.load %arg1[%c20] : memref<27xf32, #tpu.memory_space<smem>>
    %43 = vector.broadcast %42 : f32 to vector<2x29x29xf32>
    %44 = arith.mulf %33, %43 : vector<2x29x29xf32>
    %45 = arith.addf %32, %44 : vector<2x29x29xf32>
    %46 = vector.extract_strided_slice %0 {offsets = [0, 1, 0], sizes = [2, 29, 29], strides = [1, 1, 1]} : vector<2x31x31xf32> to vector<2x29x29xf32>
    %c3 = arith.constant 3 : index
    %47 = memref.load %arg1[%c3] : memref<27xf32, #tpu.memory_space<smem>>
    %48 = vector.broadcast %47 : f32 to vector<2x29x29xf32>
    %49 = arith.mulf %46, %48 : vector<2x29x29xf32>
    %50 = arith.addf %37, %49 : vector<2x29x29xf32>
    %c12 = arith.constant 12 : index
    %51 = memref.load %arg1[%c12] : memref<27xf32, #tpu.memory_space<smem>>
    %52 = vector.broadcast %51 : f32 to vector<2x29x29xf32>
    %53 = arith.mulf %46, %52 : vector<2x29x29xf32>
    %54 = arith.addf %41, %53 : vector<2x29x29xf32>
    %c21 = arith.constant 21 : index
    %55 = memref.load %arg1[%c21] : memref<27xf32, #tpu.memory_space<smem>>
    %56 = vector.broadcast %55 : f32 to vector<2x29x29xf32>
    %57 = arith.mulf %46, %56 : vector<2x29x29xf32>
    %58 = arith.addf %45, %57 : vector<2x29x29xf32>
    %59 = vector.extract_strided_slice %0 {offsets = [0, 1, 1], sizes = [2, 29, 29], strides = [1, 1, 1]} : vector<2x31x31xf32> to vector<2x29x29xf32>
    %c4 = arith.constant 4 : index
    %60 = memref.load %arg1[%c4] : memref<27xf32, #tpu.memory_space<smem>>
    %61 = vector.broadcast %60 : f32 to vector<2x29x29xf32>
    %62 = arith.mulf %59, %61 : vector<2x29x29xf32>
    %63 = arith.addf %50, %62 : vector<2x29x29xf32>
    %c13 = arith.constant 13 : index
    %64 = memref.load %arg1[%c13] : memref<27xf32, #tpu.memory_space<smem>>
    %65 = vector.broadcast %64 : f32 to vector<2x29x29xf32>
    %66 = arith.mulf %59, %65 : vector<2x29x29xf32>
    %67 = arith.addf %54, %66 : vector<2x29x29xf32>
    %c22 = arith.constant 22 : index
    %68 = memref.load %arg1[%c22] : memref<27xf32, #tpu.memory_space<smem>>
    %69 = vector.broadcast %68 : f32 to vector<2x29x29xf32>
    %70 = arith.mulf %59, %69 : vector<2x29x29xf32>
    %71 = arith.addf %58, %70 : vector<2x29x29xf32>
    %72 = vector.extract_strided_slice %0 {offsets = [0, 1, 2], sizes = [2, 29, 29], strides = [1, 1, 1]} : vector<2x31x31xf32> to vector<2x29x29xf32>
    %c5 = arith.constant 5 : index
    %73 = memref.load %arg1[%c5] : memref<27xf32, #tpu.memory_space<smem>>
    %74 = vector.broadcast %73 : f32 to vector<2x29x29xf32>
    %75 = arith.mulf %72, %74 : vector<2x29x29xf32>
    %76 = arith.addf %63, %75 : vector<2x29x29xf32>
    %c14 = arith.constant 14 : index
    %77 = memref.load %arg1[%c14] : memref<27xf32, #tpu.memory_space<smem>>
    %78 = vector.broadcast %77 : f32 to vector<2x29x29xf32>
    %79 = arith.mulf %72, %78 : vector<2x29x29xf32>
    %80 = arith.addf %67, %79 : vector<2x29x29xf32>
    %c23 = arith.constant 23 : index
    %81 = memref.load %arg1[%c23] : memref<27xf32, #tpu.memory_space<smem>>
    %82 = vector.broadcast %81 : f32 to vector<2x29x29xf32>
    %83 = arith.mulf %72, %82 : vector<2x29x29xf32>
    %84 = arith.addf %71, %83 : vector<2x29x29xf32>
    %85 = vector.extract_strided_slice %0 {offsets = [0, 2, 0], sizes = [2, 29, 29], strides = [1, 1, 1]} : vector<2x31x31xf32> to vector<2x29x29xf32>
    %c6 = arith.constant 6 : index
    %86 = memref.load %arg1[%c6] : memref<27xf32, #tpu.memory_space<smem>>
    %87 = vector.broadcast %86 : f32 to vector<2x29x29xf32>
    %88 = arith.mulf %85, %87 : vector<2x29x29xf32>
    %89 = arith.addf %76, %88 : vector<2x29x29xf32>
    %c15 = arith.constant 15 : index
    %90 = memref.load %arg1[%c15] : memref<27xf32, #tpu.memory_space<smem>>
    %91 = vector.broadcast %90 : f32 to vector<2x29x29xf32>
    %92 = arith.mulf %85, %91 : vector<2x29x29xf32>
    %93 = arith.addf %80, %92 : vector<2x29x29xf32>
    %c24 = arith.constant 24 : index
    %94 = memref.load %arg1[%c24] : memref<27xf32, #tpu.memory_space<smem>>
    %95 = vector.broadcast %94 : f32 to vector<2x29x29xf32>
    %96 = arith.mulf %85, %95 : vector<2x29x29xf32>
    %97 = arith.addf %84, %96 : vector<2x29x29xf32>
    %98 = vector.extract_strided_slice %0 {offsets = [0, 2, 1], sizes = [2, 29, 29], strides = [1, 1, 1]} : vector<2x31x31xf32> to vector<2x29x29xf32>
    %c7 = arith.constant 7 : index
    %99 = memref.load %arg1[%c7] : memref<27xf32, #tpu.memory_space<smem>>
    %100 = vector.broadcast %99 : f32 to vector<2x29x29xf32>
    %101 = arith.mulf %98, %100 : vector<2x29x29xf32>
    %102 = arith.addf %89, %101 : vector<2x29x29xf32>
    %c16 = arith.constant 16 : index
    %103 = memref.load %arg1[%c16] : memref<27xf32, #tpu.memory_space<smem>>
    %104 = vector.broadcast %103 : f32 to vector<2x29x29xf32>
    %105 = arith.mulf %98, %104 : vector<2x29x29xf32>
    %106 = arith.addf %93, %105 : vector<2x29x29xf32>
    %c25 = arith.constant 25 : index
    %107 = memref.load %arg1[%c25] : memref<27xf32, #tpu.memory_space<smem>>
    %108 = vector.broadcast %107 : f32 to vector<2x29x29xf32>
    %109 = arith.mulf %98, %108 : vector<2x29x29xf32>
    %110 = arith.addf %97, %109 : vector<2x29x29xf32>
    %111 = vector.extract_strided_slice %0 {offsets = [0, 2, 2], sizes = [2, 29, 29], strides = [1, 1, 1]} : vector<2x31x31xf32> to vector<2x29x29xf32>
    %c8 = arith.constant 8 : index
    %112 = memref.load %arg1[%c8] : memref<27xf32, #tpu.memory_space<smem>>
    %113 = vector.broadcast %112 : f32 to vector<2x29x29xf32>
    %114 = arith.mulf %111, %113 : vector<2x29x29xf32>
    %115 = arith.addf %102, %114 : vector<2x29x29xf32>
    %c17 = arith.constant 17 : index
    %116 = memref.load %arg1[%c17] : memref<27xf32, #tpu.memory_space<smem>>
    %117 = vector.broadcast %116 : f32 to vector<2x29x29xf32>
    %118 = arith.mulf %111, %117 : vector<2x29x29xf32>
    %119 = arith.addf %106, %118 : vector<2x29x29xf32>
    %c26 = arith.constant 26 : index
    %120 = memref.load %arg1[%c26] : memref<27xf32, #tpu.memory_space<smem>>
    %121 = vector.broadcast %120 : f32 to vector<2x29x29xf32>
    %122 = arith.mulf %111, %121 : vector<2x29x29xf32>
    %123 = arith.addf %110, %122 : vector<2x29x29xf32>
    %cst = arith.constant 0.000000e+00 : f32
    %124 = vector.broadcast %cst : f32 to vector<2x10xf32>
    %cst_6 = arith.constant 0.000000e+00 : f32
    %125 = vector.broadcast %cst_6 : f32 to vector<2x29x29xf32>
    %126 = arith.maximumf %115, %125 : vector<2x29x29xf32>
    %127 = vector.extract_strided_slice %126 {offsets = [0, 0, 0], sizes = [2, 28, 28], strides = [1, 1, 1]} : vector<2x29x29xf32> to vector<2x28x28xf32>
    %128 = vector.shape_cast %127 : vector<2x28x28xf32> to vector<1x2x28x28xf32>
    %cst_7 = arith.constant dense<0.000000e+00> : vector<1xf32>
    %129 = vector.multi_reduction <add>, %128, %cst_7 [1, 2, 3] : vector<1x2x28x28xf32> to vector<1xf32>
    %130 = vector.shape_cast %129 : vector<1xf32> to vector<1x1x1x1xf32>
    %131 = vector.extract %130[0, 0, 0, 0] : f32 from vector<1x1x1x1xf32>
    %cst_8 = arith.constant 1.568000e+03 : f32
    %132 = arith.divf %131, %cst_8 : f32
    %133 = arith.mulf %127, %127 : vector<2x28x28xf32>
    %134 = vector.shape_cast %133 : vector<2x28x28xf32> to vector<1x2x28x28xf32>
    %cst_9 = arith.constant dense<0.000000e+00> : vector<1xf32>
    %135 = vector.multi_reduction <add>, %134, %cst_9 [1, 2, 3] : vector<1x2x28x28xf32> to vector<1xf32>
    %136 = vector.shape_cast %135 : vector<1xf32> to vector<1x1x1x1xf32>
    %137 = vector.extract %136[0, 0, 0, 0] : f32 from vector<1x1x1x1xf32>
    %cst_10 = arith.constant 1.568000e+03 : f32
    %138 = arith.divf %137, %cst_10 : f32
    %139 = arith.mulf %132, %132 : f32
    %140 = arith.subf %138, %139 : f32
    %cst_11 = arith.constant 0.000000e+00 : f32
    %141 = arith.maximumf %140, %cst_11 : f32
    %cst_12 = arith.constant 9.99999974E-6 : f32
    %142 = arith.addf %141, %cst_12 : f32
    %143 = math.rsqrt %142 : f32
    %c0_13 = arith.constant 0 : index
    %144 = memref.load %arg3[%c0_13] : memref<3xf32, #tpu.memory_space<smem>>
    %145 = arith.mulf %143, %144 : f32
    %c0_14 = arith.constant 0 : index
    %146 = memref.load %arg4[%c0_14] : memref<3xf32, #tpu.memory_space<smem>>
    %147 = arith.mulf %132, %145 : f32
    %148 = arith.subf %146, %147 : f32
    %149 = vector.broadcast %145 : f32 to vector<2x29x29xf32>
    %150 = arith.mulf %126, %149 : vector<2x29x29xf32>
    %151 = vector.broadcast %148 : f32 to vector<2x29x29xf32>
    %152 = arith.addf %150, %151 : vector<2x29x29xf32>
    %153 = vector.extract_strided_slice %152 {offsets = [0, 0, 0], sizes = [2, 28, 28], strides = [1, 1, 1]} : vector<2x29x29xf32> to vector<2x28x28xf32>
    %154 = vector.extract_strided_slice %152 {offsets = [0, 0, 1], sizes = [2, 28, 28], strides = [1, 1, 1]} : vector<2x29x29xf32> to vector<2x28x28xf32>
    %155 = arith.maximumf %153, %154 : vector<2x28x28xf32>
    %156 = vector.extract_strided_slice %152 {offsets = [0, 1, 0], sizes = [2, 28, 28], strides = [1, 1, 1]} : vector<2x29x29xf32> to vector<2x28x28xf32>
    %157 = vector.extract_strided_slice %152 {offsets = [0, 1, 1], sizes = [2, 28, 28], strides = [1, 1, 1]} : vector<2x29x29xf32> to vector<2x28x28xf32>
    %158 = arith.maximumf %156, %157 : vector<2x28x28xf32>
    %159 = arith.maximumf %155, %158 : vector<2x28x28xf32>
    %160 = vector.extract_strided_slice %159 {offsets = [0, 0, 0], sizes = [2, 1, 28], strides = [1, 1, 1]} : vector<2x28x28xf32> to vector<2x1x28xf32>
    %161 = vector.shape_cast %160 : vector<2x1x28xf32> to vector<2x28xf32>
    %c0_15 = arith.constant 0 : index
    %c0_16 = arith.constant 0 : index
    %c0_17 = arith.constant 0 : index
    %c0_18 = arith.constant 0 : index
    %162 = vector.load %arg5[%c0_15, %c0_16, %c0_17, %c0_18] : memref<3x14x28x10xf32, #tpu.memory_space<vmem>>, vector<1x1x28x10xf32>
    %163 = vector.shape_cast %162 : vector<1x1x28x10xf32> to vector<28x10xf32>
    %cst_19 = arith.constant dense<0.000000e+00> : vector<2x10xf32>
    %164 = tpu.matmul %161, %163, %cst_19 {dimension_numbers = #tpu.dot_dimension_numbers<[1], [0], [0], [1], [0, 0, 1, 1], [], []>} : vector<2x28xf32>, vector<28x10xf32>, vector<2x10xf32> -> vector<2x10xf32>
    %165 = arith.addf %124, %164 : vector<2x10xf32>
    %166 = vector.extract_strided_slice %159 {offsets = [0, 2, 0], sizes = [2, 1, 28], strides = [1, 1, 1]} : vector<2x28x28xf32> to vector<2x1x28xf32>
    %167 = vector.shape_cast %166 : vector<2x1x28xf32> to vector<2x28xf32>
    %c0_20 = arith.constant 0 : index
    %c1_21 = arith.constant 1 : index
    %c0_22 = arith.constant 0 : index
    %c0_23 = arith.constant 0 : index
    %168 = vector.load %arg5[%c0_20, %c1_21, %c0_22, %c0_23] : memref<3x14x28x10xf32, #tpu.memory_space<vmem>>, vector<1x1x28x10xf32>
    %169 = vector.shape_cast %168 : vector<1x1x28x10xf32> to vector<28x10xf32>
    %cst_24 = arith.constant dense<0.000000e+00> : vector<2x10xf32>
    %170 = tpu.matmul %167, %169, %cst_24 {dimension_numbers = #tpu.dot_dimension_numbers<[1], [0], [0], [1], [0, 0, 1, 1], [], []>} : vector<2x28xf32>, vector<28x10xf32>, vector<2x10xf32> -> vector<2x10xf32>
    %171 = arith.addf %165, %170 : vector<2x10xf32>
    %172 = vector.extract_strided_slice %159 {offsets = [0, 4, 0], sizes = [2, 1, 28], strides = [1, 1, 1]} : vector<2x28x28xf32> to vector<2x1x28xf32>
    %173 = vector.shape_cast %172 : vector<2x1x28xf32> to vector<2x28xf32>
    %c0_25 = arith.constant 0 : index
    %c2_26 = arith.constant 2 : index
    %c0_27 = arith.constant 0 : index
    %c0_28 = arith.constant 0 : index
    %174 = vector.load %arg5[%c0_25, %c2_26, %c0_27, %c0_28] : memref<3x14x28x10xf32, #tpu.memory_space<vmem>>, vector<1x1x28x10xf32>
    %175 = vector.shape_cast %174 : vector<1x1x28x10xf32> to vector<28x10xf32>
    %cst_29 = arith.constant dense<0.000000e+00> : vector<2x10xf32>
    %176 = tpu.matmul %173, %175, %cst_29 {dimension_numbers = #tpu.dot_dimension_numbers<[1], [0], [0], [1], [0, 0, 1, 1], [], []>} : vector<2x28xf32>, vector<28x10xf32>, vector<2x10xf32> -> vector<2x10xf32>
    %177 = arith.addf %171, %176 : vector<2x10xf32>
    %178 = vector.extract_strided_slice %159 {offsets = [0, 6, 0], sizes = [2, 1, 28], strides = [1, 1, 1]} : vector<2x28x28xf32> to vector<2x1x28xf32>
    %179 = vector.shape_cast %178 : vector<2x1x28xf32> to vector<2x28xf32>
    %c0_30 = arith.constant 0 : index
    %c3_31 = arith.constant 3 : index
    %c0_32 = arith.constant 0 : index
    %c0_33 = arith.constant 0 : index
    %180 = vector.load %arg5[%c0_30, %c3_31, %c0_32, %c0_33] : memref<3x14x28x10xf32, #tpu.memory_space<vmem>>, vector<1x1x28x10xf32>
    %181 = vector.shape_cast %180 : vector<1x1x28x10xf32> to vector<28x10xf32>
    %cst_34 = arith.constant dense<0.000000e+00> : vector<2x10xf32>
    %182 = tpu.matmul %179, %181, %cst_34 {dimension_numbers = #tpu.dot_dimension_numbers<[1], [0], [0], [1], [0, 0, 1, 1], [], []>} : vector<2x28xf32>, vector<28x10xf32>, vector<2x10xf32> -> vector<2x10xf32>
    %183 = arith.addf %177, %182 : vector<2x10xf32>
    %184 = vector.extract_strided_slice %159 {offsets = [0, 8, 0], sizes = [2, 1, 28], strides = [1, 1, 1]} : vector<2x28x28xf32> to vector<2x1x28xf32>
    %185 = vector.shape_cast %184 : vector<2x1x28xf32> to vector<2x28xf32>
    %c0_35 = arith.constant 0 : index
    %c4_36 = arith.constant 4 : index
    %c0_37 = arith.constant 0 : index
    %c0_38 = arith.constant 0 : index
    %186 = vector.load %arg5[%c0_35, %c4_36, %c0_37, %c0_38] : memref<3x14x28x10xf32, #tpu.memory_space<vmem>>, vector<1x1x28x10xf32>
    %187 = vector.shape_cast %186 : vector<1x1x28x10xf32> to vector<28x10xf32>
    %cst_39 = arith.constant dense<0.000000e+00> : vector<2x10xf32>
    %188 = tpu.matmul %185, %187, %cst_39 {dimension_numbers = #tpu.dot_dimension_numbers<[1], [0], [0], [1], [0, 0, 1, 1], [], []>} : vector<2x28xf32>, vector<28x10xf32>, vector<2x10xf32> -> vector<2x10xf32>
    %189 = arith.addf %183, %188 : vector<2x10xf32>
    %190 = vector.extract_strided_slice %159 {offsets = [0, 10, 0], sizes = [2, 1, 28], strides = [1, 1, 1]} : vector<2x28x28xf32> to vector<2x1x28xf32>
    %191 = vector.shape_cast %190 : vector<2x1x28xf32> to vector<2x28xf32>
    %c0_40 = arith.constant 0 : index
    %c5_41 = arith.constant 5 : index
    %c0_42 = arith.constant 0 : index
    %c0_43 = arith.constant 0 : index
    %192 = vector.load %arg5[%c0_40, %c5_41, %c0_42, %c0_43] : memref<3x14x28x10xf32, #tpu.memory_space<vmem>>, vector<1x1x28x10xf32>
    %193 = vector.shape_cast %192 : vector<1x1x28x10xf32> to vector<28x10xf32>
    %cst_44 = arith.constant dense<0.000000e+00> : vector<2x10xf32>
    %194 = tpu.matmul %191, %193, %cst_44 {dimension_numbers = #tpu.dot_dimension_numbers<[1], [0], [0], [1], [0, 0, 1, 1], [], []>} : vector<2x28xf32>, vector<28x10xf32>, vector<2x10xf32> -> vector<2x10xf32>
    %195 = arith.addf %189, %194 : vector<2x10xf32>
    %196 = vector.extract_strided_slice %159 {offsets = [0, 12, 0], sizes = [2, 1, 28], strides = [1, 1, 1]} : vector<2x28x28xf32> to vector<2x1x28xf32>
    %197 = vector.shape_cast %196 : vector<2x1x28xf32> to vector<2x28xf32>
    %c0_45 = arith.constant 0 : index
    %c6_46 = arith.constant 6 : index
    %c0_47 = arith.constant 0 : index
    %c0_48 = arith.constant 0 : index
    %198 = vector.load %arg5[%c0_45, %c6_46, %c0_47, %c0_48] : memref<3x14x28x10xf32, #tpu.memory_space<vmem>>, vector<1x1x28x10xf32>
    %199 = vector.shape_cast %198 : vector<1x1x28x10xf32> to vector<28x10xf32>
    %cst_49 = arith.constant dense<0.000000e+00> : vector<2x10xf32>
    %200 = tpu.matmul %197, %199, %cst_49 {dimension_numbers = #tpu.dot_dimension_numbers<[1], [0], [0], [1], [0, 0, 1, 1], [], []>} : vector<2x28xf32>, vector<28x10xf32>, vector<2x10xf32> -> vector<2x10xf32>
    %201 = arith.addf %195, %200 : vector<2x10xf32>
    %202 = vector.extract_strided_slice %159 {offsets = [0, 14, 0], sizes = [2, 1, 28], strides = [1, 1, 1]} : vector<2x28x28xf32> to vector<2x1x28xf32>
    %203 = vector.shape_cast %202 : vector<2x1x28xf32> to vector<2x28xf32>
    %c0_50 = arith.constant 0 : index
    %c7_51 = arith.constant 7 : index
    %c0_52 = arith.constant 0 : index
    %c0_53 = arith.constant 0 : index
    %204 = vector.load %arg5[%c0_50, %c7_51, %c0_52, %c0_53] : memref<3x14x28x10xf32, #tpu.memory_space<vmem>>, vector<1x1x28x10xf32>
    %205 = vector.shape_cast %204 : vector<1x1x28x10xf32> to vector<28x10xf32>
    %cst_54 = arith.constant dense<0.000000e+00> : vector<2x10xf32>
    %206 = tpu.matmul %203, %205, %cst_54 {dimension_numbers = #tpu.dot_dimension_numbers<[1], [0], [0], [1], [0, 0, 1, 1], [], []>} : vector<2x28xf32>, vector<28x10xf32>, vector<2x10xf32> -> vector<2x10xf32>
    %207 = arith.addf %201, %206 : vector<2x10xf32>
    %208 = vector.extract_strided_slice %159 {offsets = [0, 16, 0], sizes = [2, 1, 28], strides = [1, 1, 1]} : vector<2x28x28xf32> to vector<2x1x28xf32>
    %209 = vector.shape_cast %208 : vector<2x1x28xf32> to vector<2x28xf32>
    %c0_55 = arith.constant 0 : index
    %c8_56 = arith.constant 8 : index
    %c0_57 = arith.constant 0 : index
    %c0_58 = arith.constant 0 : index
    %210 = vector.load %arg5[%c0_55, %c8_56, %c0_57, %c0_58] : memref<3x14x28x10xf32, #tpu.memory_space<vmem>>, vector<1x1x28x10xf32>
    %211 = vector.shape_cast %210 : vector<1x1x28x10xf32> to vector<28x10xf32>
    %cst_59 = arith.constant dense<0.000000e+00> : vector<2x10xf32>
    %212 = tpu.matmul %209, %211, %cst_59 {dimension_numbers = #tpu.dot_dimension_numbers<[1], [0], [0], [1], [0, 0, 1, 1], [], []>} : vector<2x28xf32>, vector<28x10xf32>, vector<2x10xf32> -> vector<2x10xf32>
    %213 = arith.addf %207, %212 : vector<2x10xf32>
    %214 = vector.extract_strided_slice %159 {offsets = [0, 18, 0], sizes = [2, 1, 28], strides = [1, 1, 1]} : vector<2x28x28xf32> to vector<2x1x28xf32>
    %215 = vector.shape_cast %214 : vector<2x1x28xf32> to vector<2x28xf32>
    %c0_60 = arith.constant 0 : index
    %c9_61 = arith.constant 9 : index
    %c0_62 = arith.constant 0 : index
    %c0_63 = arith.constant 0 : index
    %216 = vector.load %arg5[%c0_60, %c9_61, %c0_62, %c0_63] : memref<3x14x28x10xf32, #tpu.memory_space<vmem>>, vector<1x1x28x10xf32>
    %217 = vector.shape_cast %216 : vector<1x1x28x10xf32> to vector<28x10xf32>
    %cst_64 = arith.constant dense<0.000000e+00> : vector<2x10xf32>
    %218 = tpu.matmul %215, %217, %cst_64 {dimension_numbers = #tpu.dot_dimension_numbers<[1], [0], [0], [1], [0, 0, 1, 1], [], []>} : vector<2x28xf32>, vector<28x10xf32>, vector<2x10xf32> -> vector<2x10xf32>
    %219 = arith.addf %213, %218 : vector<2x10xf32>
    %220 = vector.extract_strided_slice %159 {offsets = [0, 20, 0], sizes = [2, 1, 28], strides = [1, 1, 1]} : vector<2x28x28xf32> to vector<2x1x28xf32>
    %221 = vector.shape_cast %220 : vector<2x1x28xf32> to vector<2x28xf32>
    %c0_65 = arith.constant 0 : index
    %c10_66 = arith.constant 10 : index
    %c0_67 = arith.constant 0 : index
    %c0_68 = arith.constant 0 : index
    %222 = vector.load %arg5[%c0_65, %c10_66, %c0_67, %c0_68] : memref<3x14x28x10xf32, #tpu.memory_space<vmem>>, vector<1x1x28x10xf32>
    %223 = vector.shape_cast %222 : vector<1x1x28x10xf32> to vector<28x10xf32>
    %cst_69 = arith.constant dense<0.000000e+00> : vector<2x10xf32>
    %224 = tpu.matmul %221, %223, %cst_69 {dimension_numbers = #tpu.dot_dimension_numbers<[1], [0], [0], [1], [0, 0, 1, 1], [], []>} : vector<2x28xf32>, vector<28x10xf32>, vector<2x10xf32> -> vector<2x10xf32>
    %225 = arith.addf %219, %224 : vector<2x10xf32>
    %226 = vector.extract_strided_slice %159 {offsets = [0, 22, 0], sizes = [2, 1, 28], strides = [1, 1, 1]} : vector<2x28x28xf32> to vector<2x1x28xf32>
    %227 = vector.shape_cast %226 : vector<2x1x28xf32> to vector<2x28xf32>
    %c0_70 = arith.constant 0 : index
    %c11_71 = arith.constant 11 : index
    %c0_72 = arith.constant 0 : index
    %c0_73 = arith.constant 0 : index
    %228 = vector.load %arg5[%c0_70, %c11_71, %c0_72, %c0_73] : memref<3x14x28x10xf32, #tpu.memory_space<vmem>>, vector<1x1x28x10xf32>
    %229 = vector.shape_cast %228 : vector<1x1x28x10xf32> to vector<28x10xf32>
    %cst_74 = arith.constant dense<0.000000e+00> : vector<2x10xf32>
    %230 = tpu.matmul %227, %229, %cst_74 {dimension_numbers = #tpu.dot_dimension_numbers<[1], [0], [0], [1], [0, 0, 1, 1], [], []>} : vector<2x28xf32>, vector<28x10xf32>, vector<2x10xf32> -> vector<2x10xf32>
    %231 = arith.addf %225, %230 : vector<2x10xf32>
    %232 = vector.extract_strided_slice %159 {offsets = [0, 24, 0], sizes = [2, 1, 28], strides = [1, 1, 1]} : vector<2x28x28xf32> to vector<2x1x28xf32>
    %233 = vector.shape_cast %232 : vector<2x1x28xf32> to vector<2x28xf32>
    %c0_75 = arith.constant 0 : index
    %c12_76 = arith.constant 12 : index
    %c0_77 = arith.constant 0 : index
    %c0_78 = arith.constant 0 : index
    %234 = vector.load %arg5[%c0_75, %c12_76, %c0_77, %c0_78] : memref<3x14x28x10xf32, #tpu.memory_space<vmem>>, vector<1x1x28x10xf32>
    %235 = vector.shape_cast %234 : vector<1x1x28x10xf32> to vector<28x10xf32>
    %cst_79 = arith.constant dense<0.000000e+00> : vector<2x10xf32>
    %236 = tpu.matmul %233, %235, %cst_79 {dimension_numbers = #tpu.dot_dimension_numbers<[1], [0], [0], [1], [0, 0, 1, 1], [], []>} : vector<2x28xf32>, vector<28x10xf32>, vector<2x10xf32> -> vector<2x10xf32>
    %237 = arith.addf %231, %236 : vector<2x10xf32>
    %238 = vector.extract_strided_slice %159 {offsets = [0, 26, 0], sizes = [2, 1, 28], strides = [1, 1, 1]} : vector<2x28x28xf32> to vector<2x1x28xf32>
    %239 = vector.shape_cast %238 : vector<2x1x28xf32> to vector<2x28xf32>
    %c0_80 = arith.constant 0 : index
    %c13_81 = arith.constant 13 : index
    %c0_82 = arith.constant 0 : index
    %c0_83 = arith.constant 0 : index
    %240 = vector.load %arg5[%c0_80, %c13_81, %c0_82, %c0_83] : memref<3x14x28x10xf32, #tpu.memory_space<vmem>>, vector<1x1x28x10xf32>
    %241 = vector.shape_cast %240 : vector<1x1x28x10xf32> to vector<28x10xf32>
    %cst_84 = arith.constant dense<0.000000e+00> : vector<2x10xf32>
    %242 = tpu.matmul %239, %241, %cst_84 {dimension_numbers = #tpu.dot_dimension_numbers<[1], [0], [0], [1], [0, 0, 1, 1], [], []>} : vector<2x28xf32>, vector<28x10xf32>, vector<2x10xf32> -> vector<2x10xf32>
    %243 = arith.addf %237, %242 : vector<2x10xf32>
    %cst_85 = arith.constant 0.000000e+00 : f32
    %244 = vector.broadcast %cst_85 : f32 to vector<2x29x29xf32>
    %245 = arith.maximumf %119, %244 : vector<2x29x29xf32>
    %246 = vector.extract_strided_slice %245 {offsets = [0, 0, 0], sizes = [2, 28, 28], strides = [1, 1, 1]} : vector<2x29x29xf32> to vector<2x28x28xf32>
    %247 = vector.shape_cast %246 : vector<2x28x28xf32> to vector<1x2x28x28xf32>
    %cst_86 = arith.constant dense<0.000000e+00> : vector<1xf32>
    %248 = vector.multi_reduction <add>, %247, %cst_86 [1, 2, 3] : vector<1x2x28x28xf32> to vector<1xf32>
    %249 = vector.shape_cast %248 : vector<1xf32> to vector<1x1x1x1xf32>
    %250 = vector.extract %249[0, 0, 0, 0] : f32 from vector<1x1x1x1xf32>
    %cst_87 = arith.constant 1.568000e+03 : f32
    %251 = arith.divf %250, %cst_87 : f32
    %252 = arith.mulf %246, %246 : vector<2x28x28xf32>
    %253 = vector.shape_cast %252 : vector<2x28x28xf32> to vector<1x2x28x28xf32>
    %cst_88 = arith.constant dense<0.000000e+00> : vector<1xf32>
    %254 = vector.multi_reduction <add>, %253, %cst_88 [1, 2, 3] : vector<1x2x28x28xf32> to vector<1xf32>
    %255 = vector.shape_cast %254 : vector<1xf32> to vector<1x1x1x1xf32>
    %256 = vector.extract %255[0, 0, 0, 0] : f32 from vector<1x1x1x1xf32>
    %cst_89 = arith.constant 1.568000e+03 : f32
    %257 = arith.divf %256, %cst_89 : f32
    %258 = arith.mulf %251, %251 : f32
    %259 = arith.subf %257, %258 : f32
    %cst_90 = arith.constant 0.000000e+00 : f32
    %260 = arith.maximumf %259, %cst_90 : f32
    %cst_91 = arith.constant 9.99999974E-6 : f32
    %261 = arith.addf %260, %cst_91 : f32
    %262 = math.rsqrt %261 : f32
    %c1_92 = arith.constant 1 : index
    %263 = memref.load %arg3[%c1_92] : memref<3xf32, #tpu.memory_space<smem>>
    %264 = arith.mulf %262, %263 : f32
    %c1_93 = arith.constant 1 : index
    %265 = memref.load %arg4[%c1_93] : memref<3xf32, #tpu.memory_space<smem>>
    %266 = arith.mulf %251, %264 : f32
    %267 = arith.subf %265, %266 : f32
    %268 = vector.broadcast %264 : f32 to vector<2x29x29xf32>
    %269 = arith.mulf %245, %268 : vector<2x29x29xf32>
    %270 = vector.broadcast %267 : f32 to vector<2x29x29xf32>
    %271 = arith.addf %269, %270 : vector<2x29x29xf32>
    %272 = vector.extract_strided_slice %271 {offsets = [0, 0, 0], sizes = [2, 28, 28], strides = [1, 1, 1]} : vector<2x29x29xf32> to vector<2x28x28xf32>
    %273 = vector.extract_strided_slice %271 {offsets = [0, 0, 1], sizes = [2, 28, 28], strides = [1, 1, 1]} : vector<2x29x29xf32> to vector<2x28x28xf32>
    %274 = arith.maximumf %272, %273 : vector<2x28x28xf32>
    %275 = vector.extract_strided_slice %271 {offsets = [0, 1, 0], sizes = [2, 28, 28], strides = [1, 1, 1]} : vector<2x29x29xf32> to vector<2x28x28xf32>
    %276 = vector.extract_strided_slice %271 {offsets = [0, 1, 1], sizes = [2, 28, 28], strides = [1, 1, 1]} : vector<2x29x29xf32> to vector<2x28x28xf32>
    %277 = arith.maximumf %275, %276 : vector<2x28x28xf32>
    %278 = arith.maximumf %274, %277 : vector<2x28x28xf32>
    %279 = vector.extract_strided_slice %278 {offsets = [0, 0, 0], sizes = [2, 1, 28], strides = [1, 1, 1]} : vector<2x28x28xf32> to vector<2x1x28xf32>
    %280 = vector.shape_cast %279 : vector<2x1x28xf32> to vector<2x28xf32>
    %c1_94 = arith.constant 1 : index
    %c0_95 = arith.constant 0 : index
    %c0_96 = arith.constant 0 : index
    %c0_97 = arith.constant 0 : index
    %281 = vector.load %arg5[%c1_94, %c0_95, %c0_96, %c0_97] : memref<3x14x28x10xf32, #tpu.memory_space<vmem>>, vector<1x1x28x10xf32>
    %282 = vector.shape_cast %281 : vector<1x1x28x10xf32> to vector<28x10xf32>
    %cst_98 = arith.constant dense<0.000000e+00> : vector<2x10xf32>
    %283 = tpu.matmul %280, %282, %cst_98 {dimension_numbers = #tpu.dot_dimension_numbers<[1], [0], [0], [1], [0, 0, 1, 1], [], []>} : vector<2x28xf32>, vector<28x10xf32>, vector<2x10xf32> -> vector<2x10xf32>
    %284 = arith.addf %243, %283 : vector<2x10xf32>
    %285 = vector.extract_strided_slice %278 {offsets = [0, 2, 0], sizes = [2, 1, 28], strides = [1, 1, 1]} : vector<2x28x28xf32> to vector<2x1x28xf32>
    %286 = vector.shape_cast %285 : vector<2x1x28xf32> to vector<2x28xf32>
    %c1_99 = arith.constant 1 : index
    %c1_100 = arith.constant 1 : index
    %c0_101 = arith.constant 0 : index
    %c0_102 = arith.constant 0 : index
    %287 = vector.load %arg5[%c1_99, %c1_100, %c0_101, %c0_102] : memref<3x14x28x10xf32, #tpu.memory_space<vmem>>, vector<1x1x28x10xf32>
    %288 = vector.shape_cast %287 : vector<1x1x28x10xf32> to vector<28x10xf32>
    %cst_103 = arith.constant dense<0.000000e+00> : vector<2x10xf32>
    %289 = tpu.matmul %286, %288, %cst_103 {dimension_numbers = #tpu.dot_dimension_numbers<[1], [0], [0], [1], [0, 0, 1, 1], [], []>} : vector<2x28xf32>, vector<28x10xf32>, vector<2x10xf32> -> vector<2x10xf32>
    %290 = arith.addf %284, %289 : vector<2x10xf32>
    %291 = vector.extract_strided_slice %278 {offsets = [0, 4, 0], sizes = [2, 1, 28], strides = [1, 1, 1]} : vector<2x28x28xf32> to vector<2x1x28xf32>
    %292 = vector.shape_cast %291 : vector<2x1x28xf32> to vector<2x28xf32>
    %c1_104 = arith.constant 1 : index
    %c2_105 = arith.constant 2 : index
    %c0_106 = arith.constant 0 : index
    %c0_107 = arith.constant 0 : index
    %293 = vector.load %arg5[%c1_104, %c2_105, %c0_106, %c0_107] : memref<3x14x28x10xf32, #tpu.memory_space<vmem>>, vector<1x1x28x10xf32>
    %294 = vector.shape_cast %293 : vector<1x1x28x10xf32> to vector<28x10xf32>
    %cst_108 = arith.constant dense<0.000000e+00> : vector<2x10xf32>
    %295 = tpu.matmul %292, %294, %cst_108 {dimension_numbers = #tpu.dot_dimension_numbers<[1], [0], [0], [1], [0, 0, 1, 1], [], []>} : vector<2x28xf32>, vector<28x10xf32>, vector<2x10xf32> -> vector<2x10xf32>
    %296 = arith.addf %290, %295 : vector<2x10xf32>
    %297 = vector.extract_strided_slice %278 {offsets = [0, 6, 0], sizes = [2, 1, 28], strides = [1, 1, 1]} : vector<2x28x28xf32> to vector<2x1x28xf32>
    %298 = vector.shape_cast %297 : vector<2x1x28xf32> to vector<2x28xf32>
    %c1_109 = arith.constant 1 : index
    %c3_110 = arith.constant 3 : index
    %c0_111 = arith.constant 0 : index
    %c0_112 = arith.constant 0 : index
    %299 = vector.load %arg5[%c1_109, %c3_110, %c0_111, %c0_112] : memref<3x14x28x10xf32, #tpu.memory_space<vmem>>, vector<1x1x28x10xf32>
    %300 = vector.shape_cast %299 : vector<1x1x28x10xf32> to vector<28x10xf32>
    %cst_113 = arith.constant dense<0.000000e+00> : vector<2x10xf32>
    %301 = tpu.matmul %298, %300, %cst_113 {dimension_numbers = #tpu.dot_dimension_numbers<[1], [0], [0], [1], [0, 0, 1, 1], [], []>} : vector<2x28xf32>, vector<28x10xf32>, vector<2x10xf32> -> vector<2x10xf32>
    %302 = arith.addf %296, %301 : vector<2x10xf32>
    %303 = vector.extract_strided_slice %278 {offsets = [0, 8, 0], sizes = [2, 1, 28], strides = [1, 1, 1]} : vector<2x28x28xf32> to vector<2x1x28xf32>
    %304 = vector.shape_cast %303 : vector<2x1x28xf32> to vector<2x28xf32>
    %c1_114 = arith.constant 1 : index
    %c4_115 = arith.constant 4 : index
    %c0_116 = arith.constant 0 : index
    %c0_117 = arith.constant 0 : index
    %305 = vector.load %arg5[%c1_114, %c4_115, %c0_116, %c0_117] : memref<3x14x28x10xf32, #tpu.memory_space<vmem>>, vector<1x1x28x10xf32>
    %306 = vector.shape_cast %305 : vector<1x1x28x10xf32> to vector<28x10xf32>
    %cst_118 = arith.constant dense<0.000000e+00> : vector<2x10xf32>
    %307 = tpu.matmul %304, %306, %cst_118 {dimension_numbers = #tpu.dot_dimension_numbers<[1], [0], [0], [1], [0, 0, 1, 1], [], []>} : vector<2x28xf32>, vector<28x10xf32>, vector<2x10xf32> -> vector<2x10xf32>
    %308 = arith.addf %302, %307 : vector<2x10xf32>
    %309 = vector.extract_strided_slice %278 {offsets = [0, 10, 0], sizes = [2, 1, 28], strides = [1, 1, 1]} : vector<2x28x28xf32> to vector<2x1x28xf32>
    %310 = vector.shape_cast %309 : vector<2x1x28xf32> to vector<2x28xf32>
    %c1_119 = arith.constant 1 : index
    %c5_120 = arith.constant 5 : index
    %c0_121 = arith.constant 0 : index
    %c0_122 = arith.constant 0 : index
    %311 = vector.load %arg5[%c1_119, %c5_120, %c0_121, %c0_122] : memref<3x14x28x10xf32, #tpu.memory_space<vmem>>, vector<1x1x28x10xf32>
    %312 = vector.shape_cast %311 : vector<1x1x28x10xf32> to vector<28x10xf32>
    %cst_123 = arith.constant dense<0.000000e+00> : vector<2x10xf32>
    %313 = tpu.matmul %310, %312, %cst_123 {dimension_numbers = #tpu.dot_dimension_numbers<[1], [0], [0], [1], [0, 0, 1, 1], [], []>} : vector<2x28xf32>, vector<28x10xf32>, vector<2x10xf32> -> vector<2x10xf32>
    %314 = arith.addf %308, %313 : vector<2x10xf32>
    %315 = vector.extract_strided_slice %278 {offsets = [0, 12, 0], sizes = [2, 1, 28], strides = [1, 1, 1]} : vector<2x28x28xf32> to vector<2x1x28xf32>
    %316 = vector.shape_cast %315 : vector<2x1x28xf32> to vector<2x28xf32>
    %c1_124 = arith.constant 1 : index
    %c6_125 = arith.constant 6 : index
    %c0_126 = arith.constant 0 : index
    %c0_127 = arith.constant 0 : index
    %317 = vector.load %arg5[%c1_124, %c6_125, %c0_126, %c0_127] : memref<3x14x28x10xf32, #tpu.memory_space<vmem>>, vector<1x1x28x10xf32>
    %318 = vector.shape_cast %317 : vector<1x1x28x10xf32> to vector<28x10xf32>
    %cst_128 = arith.constant dense<0.000000e+00> : vector<2x10xf32>
    %319 = tpu.matmul %316, %318, %cst_128 {dimension_numbers = #tpu.dot_dimension_numbers<[1], [0], [0], [1], [0, 0, 1, 1], [], []>} : vector<2x28xf32>, vector<28x10xf32>, vector<2x10xf32> -> vector<2x10xf32>
    %320 = arith.addf %314, %319 : vector<2x10xf32>
    %321 = vector.extract_strided_slice %278 {offsets = [0, 14, 0], sizes = [2, 1, 28], strides = [1, 1, 1]} : vector<2x28x28xf32> to vector<2x1x28xf32>
    %322 = vector.shape_cast %321 : vector<2x1x28xf32> to vector<2x28xf32>
    %c1_129 = arith.constant 1 : index
    %c7_130 = arith.constant 7 : index
    %c0_131 = arith.constant 0 : index
    %c0_132 = arith.constant 0 : index
    %323 = vector.load %arg5[%c1_129, %c7_130, %c0_131, %c0_132] : memref<3x14x28x10xf32, #tpu.memory_space<vmem>>, vector<1x1x28x10xf32>
    %324 = vector.shape_cast %323 : vector<1x1x28x10xf32> to vector<28x10xf32>
    %cst_133 = arith.constant dense<0.000000e+00> : vector<2x10xf32>
    %325 = tpu.matmul %322, %324, %cst_133 {dimension_numbers = #tpu.dot_dimension_numbers<[1], [0], [0], [1], [0, 0, 1, 1], [], []>} : vector<2x28xf32>, vector<28x10xf32>, vector<2x10xf32> -> vector<2x10xf32>
    %326 = arith.addf %320, %325 : vector<2x10xf32>
    %327 = vector.extract_strided_slice %278 {offsets = [0, 16, 0], sizes = [2, 1, 28], strides = [1, 1, 1]} : vector<2x28x28xf32> to vector<2x1x28xf32>
    %328 = vector.shape_cast %327 : vector<2x1x28xf32> to vector<2x28xf32>
    %c1_134 = arith.constant 1 : index
    %c8_135 = arith.constant 8 : index
    %c0_136 = arith.constant 0 : index
    %c0_137 = arith.constant 0 : index
    %329 = vector.load %arg5[%c1_134, %c8_135, %c0_136, %c0_137] : memref<3x14x28x10xf32, #tpu.memory_space<vmem>>, vector<1x1x28x10xf32>
    %330 = vector.shape_cast %329 : vector<1x1x28x10xf32> to vector<28x10xf32>
    %cst_138 = arith.constant dense<0.000000e+00> : vector<2x10xf32>
    %331 = tpu.matmul %328, %330, %cst_138 {dimension_numbers = #tpu.dot_dimension_numbers<[1], [0], [0], [1], [0, 0, 1, 1], [], []>} : vector<2x28xf32>, vector<28x10xf32>, vector<2x10xf32> -> vector<2x10xf32>
    %332 = arith.addf %326, %331 : vector<2x10xf32>
    %333 = vector.extract_strided_slice %278 {offsets = [0, 18, 0], sizes = [2, 1, 28], strides = [1, 1, 1]} : vector<2x28x28xf32> to vector<2x1x28xf32>
    %334 = vector.shape_cast %333 : vector<2x1x28xf32> to vector<2x28xf32>
    %c1_139 = arith.constant 1 : index
    %c9_140 = arith.constant 9 : index
    %c0_141 = arith.constant 0 : index
    %c0_142 = arith.constant 0 : index
    %335 = vector.load %arg5[%c1_139, %c9_140, %c0_141, %c0_142] : memref<3x14x28x10xf32, #tpu.memory_space<vmem>>, vector<1x1x28x10xf32>
    %336 = vector.shape_cast %335 : vector<1x1x28x10xf32> to vector<28x10xf32>
    %cst_143 = arith.constant dense<0.000000e+00> : vector<2x10xf32>
    %337 = tpu.matmul %334, %336, %cst_143 {dimension_numbers = #tpu.dot_dimension_numbers<[1], [0], [0], [1], [0, 0, 1, 1], [], []>} : vector<2x28xf32>, vector<28x10xf32>, vector<2x10xf32> -> vector<2x10xf32>
    %338 = arith.addf %332, %337 : vector<2x10xf32>
    %339 = vector.extract_strided_slice %278 {offsets = [0, 20, 0], sizes = [2, 1, 28], strides = [1, 1, 1]} : vector<2x28x28xf32> to vector<2x1x28xf32>
    %340 = vector.shape_cast %339 : vector<2x1x28xf32> to vector<2x28xf32>
    %c1_144 = arith.constant 1 : index
    %c10_145 = arith.constant 10 : index
    %c0_146 = arith.constant 0 : index
    %c0_147 = arith.constant 0 : index
    %341 = vector.load %arg5[%c1_144, %c10_145, %c0_146, %c0_147] : memref<3x14x28x10xf32, #tpu.memory_space<vmem>>, vector<1x1x28x10xf32>
    %342 = vector.shape_cast %341 : vector<1x1x28x10xf32> to vector<28x10xf32>
    %cst_148 = arith.constant dense<0.000000e+00> : vector<2x10xf32>
    %343 = tpu.matmul %340, %342, %cst_148 {dimension_numbers = #tpu.dot_dimension_numbers<[1], [0], [0], [1], [0, 0, 1, 1], [], []>} : vector<2x28xf32>, vector<28x10xf32>, vector<2x10xf32> -> vector<2x10xf32>
    %344 = arith.addf %338, %343 : vector<2x10xf32>
    %345 = vector.extract_strided_slice %278 {offsets = [0, 22, 0], sizes = [2, 1, 28], strides = [1, 1, 1]} : vector<2x28x28xf32> to vector<2x1x28xf32>
    %346 = vector.shape_cast %345 : vector<2x1x28xf32> to vector<2x28xf32>
    %c1_149 = arith.constant 1 : index
    %c11_150 = arith.constant 11 : index
    %c0_151 = arith.constant 0 : index
    %c0_152 = arith.constant 0 : index
    %347 = vector.load %arg5[%c1_149, %c11_150, %c0_151, %c0_152] : memref<3x14x28x10xf32, #tpu.memory_space<vmem>>, vector<1x1x28x10xf32>
    %348 = vector.shape_cast %347 : vector<1x1x28x10xf32> to vector<28x10xf32>
    %cst_153 = arith.constant dense<0.000000e+00> : vector<2x10xf32>
    %349 = tpu.matmul %346, %348, %cst_153 {dimension_numbers = #tpu.dot_dimension_numbers<[1], [0], [0], [1], [0, 0, 1, 1], [], []>} : vector<2x28xf32>, vector<28x10xf32>, vector<2x10xf32> -> vector<2x10xf32>
    %350 = arith.addf %344, %349 : vector<2x10xf32>
    %351 = vector.extract_strided_slice %278 {offsets = [0, 24, 0], sizes = [2, 1, 28], strides = [1, 1, 1]} : vector<2x28x28xf32> to vector<2x1x28xf32>
    %352 = vector.shape_cast %351 : vector<2x1x28xf32> to vector<2x28xf32>
    %c1_154 = arith.constant 1 : index
    %c12_155 = arith.constant 12 : index
    %c0_156 = arith.constant 0 : index
    %c0_157 = arith.constant 0 : index
    %353 = vector.load %arg5[%c1_154, %c12_155, %c0_156, %c0_157] : memref<3x14x28x10xf32, #tpu.memory_space<vmem>>, vector<1x1x28x10xf32>
    %354 = vector.shape_cast %353 : vector<1x1x28x10xf32> to vector<28x10xf32>
    %cst_158 = arith.constant dense<0.000000e+00> : vector<2x10xf32>
    %355 = tpu.matmul %352, %354, %cst_158 {dimension_numbers = #tpu.dot_dimension_numbers<[1], [0], [0], [1], [0, 0, 1, 1], [], []>} : vector<2x28xf32>, vector<28x10xf32>, vector<2x10xf32> -> vector<2x10xf32>
    %356 = arith.addf %350, %355 : vector<2x10xf32>
    %357 = vector.extract_strided_slice %278 {offsets = [0, 26, 0], sizes = [2, 1, 28], strides = [1, 1, 1]} : vector<2x28x28xf32> to vector<2x1x28xf32>
    %358 = vector.shape_cast %357 : vector<2x1x28xf32> to vector<2x28xf32>
    %c1_159 = arith.constant 1 : index
    %c13_160 = arith.constant 13 : index
    %c0_161 = arith.constant 0 : index
    %c0_162 = arith.constant 0 : index
    %359 = vector.load %arg5[%c1_159, %c13_160, %c0_161, %c0_162] : memref<3x14x28x10xf32, #tpu.memory_space<vmem>>, vector<1x1x28x10xf32>
    %360 = vector.shape_cast %359 : vector<1x1x28x10xf32> to vector<28x10xf32>
    %cst_163 = arith.constant dense<0.000000e+00> : vector<2x10xf32>
    %361 = tpu.matmul %358, %360, %cst_163 {dimension_numbers = #tpu.dot_dimension_numbers<[1], [0], [0], [1], [0, 0, 1, 1], [], []>} : vector<2x28xf32>, vector<28x10xf32>, vector<2x10xf32> -> vector<2x10xf32>
    %362 = arith.addf %356, %361 : vector<2x10xf32>
    %cst_164 = arith.constant 0.000000e+00 : f32
    %363 = vector.broadcast %cst_164 : f32 to vector<2x29x29xf32>
    %364 = arith.maximumf %123, %363 : vector<2x29x29xf32>
    %365 = vector.extract_strided_slice %364 {offsets = [0, 0, 0], sizes = [2, 28, 28], strides = [1, 1, 1]} : vector<2x29x29xf32> to vector<2x28x28xf32>
    %366 = vector.shape_cast %365 : vector<2x28x28xf32> to vector<1x2x28x28xf32>
    %cst_165 = arith.constant dense<0.000000e+00> : vector<1xf32>
    %367 = vector.multi_reduction <add>, %366, %cst_165 [1, 2, 3] : vector<1x2x28x28xf32> to vector<1xf32>
    %368 = vector.shape_cast %367 : vector<1xf32> to vector<1x1x1x1xf32>
    %369 = vector.extract %368[0, 0, 0, 0] : f32 from vector<1x1x1x1xf32>
    %cst_166 = arith.constant 1.568000e+03 : f32
    %370 = arith.divf %369, %cst_166 : f32
    %371 = arith.mulf %365, %365 : vector<2x28x28xf32>
    %372 = vector.shape_cast %371 : vector<2x28x28xf32> to vector<1x2x28x28xf32>
    %cst_167 = arith.constant dense<0.000000e+00> : vector<1xf32>
    %373 = vector.multi_reduction <add>, %372, %cst_167 [1, 2, 3] : vector<1x2x28x28xf32> to vector<1xf32>
    %374 = vector.shape_cast %373 : vector<1xf32> to vector<1x1x1x1xf32>
    %375 = vector.extract %374[0, 0, 0, 0] : f32 from vector<1x1x1x1xf32>
    %cst_168 = arith.constant 1.568000e+03 : f32
    %376 = arith.divf %375, %cst_168 : f32
    %377 = arith.mulf %370, %370 : f32
    %378 = arith.subf %376, %377 : f32
    %cst_169 = arith.constant 0.000000e+00 : f32
    %379 = arith.maximumf %378, %cst_169 : f32
    %cst_170 = arith.constant 9.99999974E-6 : f32
    %380 = arith.addf %379, %cst_170 : f32
    %381 = math.rsqrt %380 : f32
    %c2_171 = arith.constant 2 : index
    %382 = memref.load %arg3[%c2_171] : memref<3xf32, #tpu.memory_space<smem>>
    %383 = arith.mulf %381, %382 : f32
    %c2_172 = arith.constant 2 : index
    %384 = memref.load %arg4[%c2_172] : memref<3xf32, #tpu.memory_space<smem>>
    %385 = arith.mulf %370, %383 : f32
    %386 = arith.subf %384, %385 : f32
    %387 = vector.broadcast %383 : f32 to vector<2x29x29xf32>
    %388 = arith.mulf %364, %387 : vector<2x29x29xf32>
    %389 = vector.broadcast %386 : f32 to vector<2x29x29xf32>
    %390 = arith.addf %388, %389 : vector<2x29x29xf32>
    %391 = vector.extract_strided_slice %390 {offsets = [0, 0, 0], sizes = [2, 28, 28], strides = [1, 1, 1]} : vector<2x29x29xf32> to vector<2x28x28xf32>
    %392 = vector.extract_strided_slice %390 {offsets = [0, 0, 1], sizes = [2, 28, 28], strides = [1, 1, 1]} : vector<2x29x29xf32> to vector<2x28x28xf32>
    %393 = arith.maximumf %391, %392 : vector<2x28x28xf32>
    %394 = vector.extract_strided_slice %390 {offsets = [0, 1, 0], sizes = [2, 28, 28], strides = [1, 1, 1]} : vector<2x29x29xf32> to vector<2x28x28xf32>
    %395 = vector.extract_strided_slice %390 {offsets = [0, 1, 1], sizes = [2, 28, 28], strides = [1, 1, 1]} : vector<2x29x29xf32> to vector<2x28x28xf32>
    %396 = arith.maximumf %394, %395 : vector<2x28x28xf32>
    %397 = arith.maximumf %393, %396 : vector<2x28x28xf32>
    %398 = vector.extract_strided_slice %397 {offsets = [0, 0, 0], sizes = [2, 1, 28], strides = [1, 1, 1]} : vector<2x28x28xf32> to vector<2x1x28xf32>
    %399 = vector.shape_cast %398 : vector<2x1x28xf32> to vector<2x28xf32>
    %c2_173 = arith.constant 2 : index
    %c0_174 = arith.constant 0 : index
    %c0_175 = arith.constant 0 : index
    %c0_176 = arith.constant 0 : index
    %400 = vector.load %arg5[%c2_173, %c0_174, %c0_175, %c0_176] : memref<3x14x28x10xf32, #tpu.memory_space<vmem>>, vector<1x1x28x10xf32>
    %401 = vector.shape_cast %400 : vector<1x1x28x10xf32> to vector<28x10xf32>
    %cst_177 = arith.constant dense<0.000000e+00> : vector<2x10xf32>
    %402 = tpu.matmul %399, %401, %cst_177 {dimension_numbers = #tpu.dot_dimension_numbers<[1], [0], [0], [1], [0, 0, 1, 1], [], []>} : vector<2x28xf32>, vector<28x10xf32>, vector<2x10xf32> -> vector<2x10xf32>
    %403 = arith.addf %362, %402 : vector<2x10xf32>
    %404 = vector.extract_strided_slice %397 {offsets = [0, 2, 0], sizes = [2, 1, 28], strides = [1, 1, 1]} : vector<2x28x28xf32> to vector<2x1x28xf32>
    %405 = vector.shape_cast %404 : vector<2x1x28xf32> to vector<2x28xf32>
    %c2_178 = arith.constant 2 : index
    %c1_179 = arith.constant 1 : index
    %c0_180 = arith.constant 0 : index
    %c0_181 = arith.constant 0 : index
    %406 = vector.load %arg5[%c2_178, %c1_179, %c0_180, %c0_181] : memref<3x14x28x10xf32, #tpu.memory_space<vmem>>, vector<1x1x28x10xf32>
    %407 = vector.shape_cast %406 : vector<1x1x28x10xf32> to vector<28x10xf32>
    %cst_182 = arith.constant dense<0.000000e+00> : vector<2x10xf32>
    %408 = tpu.matmul %405, %407, %cst_182 {dimension_numbers = #tpu.dot_dimension_numbers<[1], [0], [0], [1], [0, 0, 1, 1], [], []>} : vector<2x28xf32>, vector<28x10xf32>, vector<2x10xf32> -> vector<2x10xf32>
    %409 = arith.addf %403, %408 : vector<2x10xf32>
    %410 = vector.extract_strided_slice %397 {offsets = [0, 4, 0], sizes = [2, 1, 28], strides = [1, 1, 1]} : vector<2x28x28xf32> to vector<2x1x28xf32>
    %411 = vector.shape_cast %410 : vector<2x1x28xf32> to vector<2x28xf32>
    %c2_183 = arith.constant 2 : index
    %c2_184 = arith.constant 2 : index
    %c0_185 = arith.constant 0 : index
    %c0_186 = arith.constant 0 : index
    %412 = vector.load %arg5[%c2_183, %c2_184, %c0_185, %c0_186] : memref<3x14x28x10xf32, #tpu.memory_space<vmem>>, vector<1x1x28x10xf32>
    %413 = vector.shape_cast %412 : vector<1x1x28x10xf32> to vector<28x10xf32>
    %cst_187 = arith.constant dense<0.000000e+00> : vector<2x10xf32>
    %414 = tpu.matmul %411, %413, %cst_187 {dimension_numbers = #tpu.dot_dimension_numbers<[1], [0], [0], [1], [0, 0, 1, 1], [], []>} : vector<2x28xf32>, vector<28x10xf32>, vector<2x10xf32> -> vector<2x10xf32>
    %415 = arith.addf %409, %414 : vector<2x10xf32>
    %416 = vector.extract_strided_slice %397 {offsets = [0, 6, 0], sizes = [2, 1, 28], strides = [1, 1, 1]} : vector<2x28x28xf32> to vector<2x1x28xf32>
    %417 = vector.shape_cast %416 : vector<2x1x28xf32> to vector<2x28xf32>
    %c2_188 = arith.constant 2 : index
    %c3_189 = arith.constant 3 : index
    %c0_190 = arith.constant 0 : index
    %c0_191 = arith.constant 0 : index
    %418 = vector.load %arg5[%c2_188, %c3_189, %c0_190, %c0_191] : memref<3x14x28x10xf32, #tpu.memory_space<vmem>>, vector<1x1x28x10xf32>
    %419 = vector.shape_cast %418 : vector<1x1x28x10xf32> to vector<28x10xf32>
    %cst_192 = arith.constant dense<0.000000e+00> : vector<2x10xf32>
    %420 = tpu.matmul %417, %419, %cst_192 {dimension_numbers = #tpu.dot_dimension_numbers<[1], [0], [0], [1], [0, 0, 1, 1], [], []>} : vector<2x28xf32>, vector<28x10xf32>, vector<2x10xf32> -> vector<2x10xf32>
    %421 = arith.addf %415, %420 : vector<2x10xf32>
    %422 = vector.extract_strided_slice %397 {offsets = [0, 8, 0], sizes = [2, 1, 28], strides = [1, 1, 1]} : vector<2x28x28xf32> to vector<2x1x28xf32>
    %423 = vector.shape_cast %422 : vector<2x1x28xf32> to vector<2x28xf32>
    %c2_193 = arith.constant 2 : index
    %c4_194 = arith.constant 4 : index
    %c0_195 = arith.constant 0 : index
    %c0_196 = arith.constant 0 : index
    %424 = vector.load %arg5[%c2_193, %c4_194, %c0_195, %c0_196] : memref<3x14x28x10xf32, #tpu.memory_space<vmem>>, vector<1x1x28x10xf32>
    %425 = vector.shape_cast %424 : vector<1x1x28x10xf32> to vector<28x10xf32>
    %cst_197 = arith.constant dense<0.000000e+00> : vector<2x10xf32>
    %426 = tpu.matmul %423, %425, %cst_197 {dimension_numbers = #tpu.dot_dimension_numbers<[1], [0], [0], [1], [0, 0, 1, 1], [], []>} : vector<2x28xf32>, vector<28x10xf32>, vector<2x10xf32> -> vector<2x10xf32>
    %427 = arith.addf %421, %426 : vector<2x10xf32>
    %428 = vector.extract_strided_slice %397 {offsets = [0, 10, 0], sizes = [2, 1, 28], strides = [1, 1, 1]} : vector<2x28x28xf32> to vector<2x1x28xf32>
    %429 = vector.shape_cast %428 : vector<2x1x28xf32> to vector<2x28xf32>
    %c2_198 = arith.constant 2 : index
    %c5_199 = arith.constant 5 : index
    %c0_200 = arith.constant 0 : index
    %c0_201 = arith.constant 0 : index
    %430 = vector.load %arg5[%c2_198, %c5_199, %c0_200, %c0_201] : memref<3x14x28x10xf32, #tpu.memory_space<vmem>>, vector<1x1x28x10xf32>
    %431 = vector.shape_cast %430 : vector<1x1x28x10xf32> to vector<28x10xf32>
    %cst_202 = arith.constant dense<0.000000e+00> : vector<2x10xf32>
    %432 = tpu.matmul %429, %431, %cst_202 {dimension_numbers = #tpu.dot_dimension_numbers<[1], [0], [0], [1], [0, 0, 1, 1], [], []>} : vector<2x28xf32>, vector<28x10xf32>, vector<2x10xf32> -> vector<2x10xf32>
    %433 = arith.addf %427, %432 : vector<2x10xf32>
    %434 = vector.extract_strided_slice %397 {offsets = [0, 12, 0], sizes = [2, 1, 28], strides = [1, 1, 1]} : vector<2x28x28xf32> to vector<2x1x28xf32>
    %435 = vector.shape_cast %434 : vector<2x1x28xf32> to vector<2x28xf32>
    %c2_203 = arith.constant 2 : index
    %c6_204 = arith.constant 6 : index
    %c0_205 = arith.constant 0 : index
    %c0_206 = arith.constant 0 : index
    %436 = vector.load %arg5[%c2_203, %c6_204, %c0_205, %c0_206] : memref<3x14x28x10xf32, #tpu.memory_space<vmem>>, vector<1x1x28x10xf32>
    %437 = vector.shape_cast %436 : vector<1x1x28x10xf32> to vector<28x10xf32>
    %cst_207 = arith.constant dense<0.000000e+00> : vector<2x10xf32>
    %438 = tpu.matmul %435, %437, %cst_207 {dimension_numbers = #tpu.dot_dimension_numbers<[1], [0], [0], [1], [0, 0, 1, 1], [], []>} : vector<2x28xf32>, vector<28x10xf32>, vector<2x10xf32> -> vector<2x10xf32>
    %439 = arith.addf %433, %438 : vector<2x10xf32>
    %440 = vector.extract_strided_slice %397 {offsets = [0, 14, 0], sizes = [2, 1, 28], strides = [1, 1, 1]} : vector<2x28x28xf32> to vector<2x1x28xf32>
    %441 = vector.shape_cast %440 : vector<2x1x28xf32> to vector<2x28xf32>
    %c2_208 = arith.constant 2 : index
    %c7_209 = arith.constant 7 : index
    %c0_210 = arith.constant 0 : index
    %c0_211 = arith.constant 0 : index
    %442 = vector.load %arg5[%c2_208, %c7_209, %c0_210, %c0_211] : memref<3x14x28x10xf32, #tpu.memory_space<vmem>>, vector<1x1x28x10xf32>
    %443 = vector.shape_cast %442 : vector<1x1x28x10xf32> to vector<28x10xf32>
    %cst_212 = arith.constant dense<0.000000e+00> : vector<2x10xf32>
    %444 = tpu.matmul %441, %443, %cst_212 {dimension_numbers = #tpu.dot_dimension_numbers<[1], [0], [0], [1], [0, 0, 1, 1], [], []>} : vector<2x28xf32>, vector<28x10xf32>, vector<2x10xf32> -> vector<2x10xf32>
    %445 = arith.addf %439, %444 : vector<2x10xf32>
    %446 = vector.extract_strided_slice %397 {offsets = [0, 16, 0], sizes = [2, 1, 28], strides = [1, 1, 1]} : vector<2x28x28xf32> to vector<2x1x28xf32>
    %447 = vector.shape_cast %446 : vector<2x1x28xf32> to vector<2x28xf32>
    %c2_213 = arith.constant 2 : index
    %c8_214 = arith.constant 8 : index
    %c0_215 = arith.constant 0 : index
    %c0_216 = arith.constant 0 : index
    %448 = vector.load %arg5[%c2_213, %c8_214, %c0_215, %c0_216] : memref<3x14x28x10xf32, #tpu.memory_space<vmem>>, vector<1x1x28x10xf32>
    %449 = vector.shape_cast %448 : vector<1x1x28x10xf32> to vector<28x10xf32>
    %cst_217 = arith.constant dense<0.000000e+00> : vector<2x10xf32>
    %450 = tpu.matmul %447, %449, %cst_217 {dimension_numbers = #tpu.dot_dimension_numbers<[1], [0], [0], [1], [0, 0, 1, 1], [], []>} : vector<2x28xf32>, vector<28x10xf32>, vector<2x10xf32> -> vector<2x10xf32>
    %451 = arith.addf %445, %450 : vector<2x10xf32>
    %452 = vector.extract_strided_slice %397 {offsets = [0, 18, 0], sizes = [2, 1, 28], strides = [1, 1, 1]} : vector<2x28x28xf32> to vector<2x1x28xf32>
    %453 = vector.shape_cast %452 : vector<2x1x28xf32> to vector<2x28xf32>
    %c2_218 = arith.constant 2 : index
    %c9_219 = arith.constant 9 : index
    %c0_220 = arith.constant 0 : index
    %c0_221 = arith.constant 0 : index
    %454 = vector.load %arg5[%c2_218, %c9_219, %c0_220, %c0_221] : memref<3x14x28x10xf32, #tpu.memory_space<vmem>>, vector<1x1x28x10xf32>
    %455 = vector.shape_cast %454 : vector<1x1x28x10xf32> to vector<28x10xf32>
    %cst_222 = arith.constant dense<0.000000e+00> : vector<2x10xf32>
    %456 = tpu.matmul %453, %455, %cst_222 {dimension_numbers = #tpu.dot_dimension_numbers<[1], [0], [0], [1], [0, 0, 1, 1], [], []>} : vector<2x28xf32>, vector<28x10xf32>, vector<2x10xf32> -> vector<2x10xf32>
    %457 = arith.addf %451, %456 : vector<2x10xf32>
    %458 = vector.extract_strided_slice %397 {offsets = [0, 20, 0], sizes = [2, 1, 28], strides = [1, 1, 1]} : vector<2x28x28xf32> to vector<2x1x28xf32>
    %459 = vector.shape_cast %458 : vector<2x1x28xf32> to vector<2x28xf32>
    %c2_223 = arith.constant 2 : index
    %c10_224 = arith.constant 10 : index
    %c0_225 = arith.constant 0 : index
    %c0_226 = arith.constant 0 : index
    %460 = vector.load %arg5[%c2_223, %c10_224, %c0_225, %c0_226] : memref<3x14x28x10xf32, #tpu.memory_space<vmem>>, vector<1x1x28x10xf32>
    %461 = vector.shape_cast %460 : vector<1x1x28x10xf32> to vector<28x10xf32>
    %cst_227 = arith.constant dense<0.000000e+00> : vector<2x10xf32>
    %462 = tpu.matmul %459, %461, %cst_227 {dimension_numbers = #tpu.dot_dimension_numbers<[1], [0], [0], [1], [0, 0, 1, 1], [], []>} : vector<2x28xf32>, vector<28x10xf32>, vector<2x10xf32> -> vector<2x10xf32>
    %463 = arith.addf %457, %462 : vector<2x10xf32>
    %464 = vector.extract_strided_slice %397 {offsets = [0, 22, 0], sizes = [2, 1, 28], strides = [1, 1, 1]} : vector<2x28x28xf32> to vector<2x1x28xf32>
    %465 = vector.shape_cast %464 : vector<2x1x28xf32> to vector<2x28xf32>
    %c2_228 = arith.constant 2 : index
    %c11_229 = arith.constant 11 : index
    %c0_230 = arith.constant 0 : index
    %c0_231 = arith.constant 0 : index
    %466 = vector.load %arg5[%c2_228, %c11_229, %c0_230, %c0_231] : memref<3x14x28x10xf32, #tpu.memory_space<vmem>>, vector<1x1x28x10xf32>
    %467 = vector.shape_cast %466 : vector<1x1x28x10xf32> to vector<28x10xf32>
    %cst_232 = arith.constant dense<0.000000e+00> : vector<2x10xf32>
    %468 = tpu.matmul %465, %467, %cst_232 {dimension_numbers = #tpu.dot_dimension_numbers<[1], [0], [0], [1], [0, 0, 1, 1], [], []>} : vector<2x28xf32>, vector<28x10xf32>, vector<2x10xf32> -> vector<2x10xf32>
    %469 = arith.addf %463, %468 : vector<2x10xf32>
    %470 = vector.extract_strided_slice %397 {offsets = [0, 24, 0], sizes = [2, 1, 28], strides = [1, 1, 1]} : vector<2x28x28xf32> to vector<2x1x28xf32>
    %471 = vector.shape_cast %470 : vector<2x1x28xf32> to vector<2x28xf32>
    %c2_233 = arith.constant 2 : index
    %c12_234 = arith.constant 12 : index
    %c0_235 = arith.constant 0 : index
    %c0_236 = arith.constant 0 : index
    %472 = vector.load %arg5[%c2_233, %c12_234, %c0_235, %c0_236] : memref<3x14x28x10xf32, #tpu.memory_space<vmem>>, vector<1x1x28x10xf32>
    %473 = vector.shape_cast %472 : vector<1x1x28x10xf32> to vector<28x10xf32>
    %cst_237 = arith.constant dense<0.000000e+00> : vector<2x10xf32>
    %474 = tpu.matmul %471, %473, %cst_237 {dimension_numbers = #tpu.dot_dimension_numbers<[1], [0], [0], [1], [0, 0, 1, 1], [], []>} : vector<2x28xf32>, vector<28x10xf32>, vector<2x10xf32> -> vector<2x10xf32>
    %475 = arith.addf %469, %474 : vector<2x10xf32>
    %476 = vector.extract_strided_slice %397 {offsets = [0, 26, 0], sizes = [2, 1, 28], strides = [1, 1, 1]} : vector<2x28x28xf32> to vector<2x1x28xf32>
    %477 = vector.shape_cast %476 : vector<2x1x28xf32> to vector<2x28xf32>
    %c2_238 = arith.constant 2 : index
    %c13_239 = arith.constant 13 : index
    %c0_240 = arith.constant 0 : index
    %c0_241 = arith.constant 0 : index
    %478 = vector.load %arg5[%c2_238, %c13_239, %c0_240, %c0_241] : memref<3x14x28x10xf32, #tpu.memory_space<vmem>>, vector<1x1x28x10xf32>
    %479 = vector.shape_cast %478 : vector<1x1x28x10xf32> to vector<28x10xf32>
    %cst_242 = arith.constant dense<0.000000e+00> : vector<2x10xf32>
    %480 = tpu.matmul %477, %479, %cst_242 {dimension_numbers = #tpu.dot_dimension_numbers<[1], [0], [0], [1], [0, 0, 1, 1], [], []>} : vector<2x28xf32>, vector<28x10xf32>, vector<2x10xf32> -> vector<2x10xf32>
    %481 = arith.addf %475, %480 : vector<2x10xf32>
    %c0_243 = arith.constant 0 : index
    %c0_244 = arith.constant 0 : index
    %482 = vector.load %arg6[%c0_243, %c0_244] : memref<1x10xf32, #tpu.memory_space<vmem>>, vector<1x10xf32>
    %483 = vector.broadcast %482 : vector<1x10xf32> to vector<2x10xf32>
    %484 = arith.addf %481, %483 : vector<2x10xf32>
    %c0_245 = arith.constant 0 : index
    %c0_246 = arith.constant 0 : index
    %485 = vector.load %arg7[%c0_245, %c0_246] : memref<2x10xf32, #tpu.memory_space<vmem>>, vector<2x10xf32>
    tpu.vector_store %arg7[%c0_245, %c0_246], %484 {strides = array<i32>} : memref<2x10xf32, #tpu.memory_space<vmem>>, vector<2x10xf32>,
    return
  }
}

</mosaic_0001>

<llo_original>
// kernel: net_forward.1
$region0: #{net_forward.1}
  #allocation0 [shape = 'u32[]', space=smem, size = 0x4, offset = 0x4, fixed_abs, tag = 'smem constant byte address 0x4 - core index']
  #allocation1 [shape = 'u32[144,128]{1,0:T(1,128)}', space=vmem, size = 0x12000, scoped, tag = 'internal scratch']
  %s0 = inlined_call_operand.vmem [shape: f32[2,31,31], index: 0, kind: input, shape index: {}]
  %s1 = inlined_call_operand.vmem [shape: f32[27], index: 1, kind: input, shape index: {}]
  %s2 = inlined_call_operand.vmem [shape: f32[3], index: 2, kind: input, shape index: {}]
  %s3 = inlined_call_operand.vmem [shape: f32[3], index: 3, kind: input, shape index: {}]
  %s4 = inlined_call_operand.vmem [shape: f32[3], index: 4, kind: input, shape index: {}]
  %s5 = inlined_call_operand.vmem [shape: f32[3,14,28,10], index: 5, kind: input, shape index: {}]
  %s6 = inlined_call_operand.vmem [shape: f32[1,10], index: 6, kind: input, shape index: {}]
  %s7 = inlined_call_operand.hbm [shape: f32[2,10], index: 7, kind: output, shape index: {}]
  %s8 = sld [smem:[#allocation0]]
  $region54: #{net_forward.1} parent=0
    _
  %s10 = ssub.s32 1, %s8
  %s11 = scalar_select 0, %s10, %s8
  $region1: #{net_forward.1} parent=0
    #allocation2 [shape = 'u8[512]{0}', space=smem, size = 0x200, scoped, tag = 'input window, operand 1, single buffered']
    #allocation3 [shape = 's32[1]{0}', space=sflag, size = 0x4, scoped, tag = 'scoped memory for net_forward.1']
    #allocation4 [shape = 's32[1]{0}', space=sflag, size = 0x4, scoped, tag = 'scoped memory for net_forward.1']
    #allocation5 [shape = 'u8[512]{0}', space=smem, size = 0x200, scoped, tag = 'input window, operand 2, single buffered']
    #allocation6 [shape = 's32[1]{0}', space=sflag, size = 0x4, scoped, tag = 'scoped memory for net_forward.1']
    #allocation7 [shape = 'u8[512]{0}', space=smem, size = 0x200, scoped, tag = 'input window, operand 3, single buffered']
    #allocation8 [shape = 'u8[512]{0}', space=smem, size = 0x200, scoped, tag = 'input window, operand 4, single buffered']
    #allocation9 [shape = 's32[1]{0}', space=sflag, size = 0x4, scoped, tag = 'scoped memory for net_forward.1']
    #allocation10 [shape = 'u8[1024]{0}', space=vmem, size = 0x400, scoped, tag = 'output window, operand 0, single buffered']
    %12 = vsyncpa [#allocation4], 0
    %13 = vsyncpa [#allocation6], 0
    %14 = vsyncpa [#allocation9], 0
    %15 = vsyncpa [#allocation3], 0
    // Predicated region
    $region2: #{net_forward.1} parent=1 // pred_check
      _
    $region3: #{net_forward.1} parent=1 // pred_check_branch
      %17 = sbr.rel (0) target = $region5
    $region4: #{net_forward.1} parent=1 // pred_region
      _
    $region5: #{net_forward.1} parent=1 // pred_fallthru
      _
    // Predicated region
    $region6: #{net_forward.1} parent=1 // pred_check
      _
    $region7: #{net_forward.1} parent=1 // pred_check_branch
      %19 = sbr.rel (0) target = $region9
    $region8: #{net_forward.1} parent=1 // pred_region
      %s21 = ssub.s32 16, 16
      %22 = vsyncadd [#allocation4], %s21
      %s24 = sshll.u32 %s1, 4
      %s25 = int_to_ptr.vmem [resolvable:$true] %s24
      %27 = dma.vmem_to_smem %s25, 16, [#allocation2], [#allocation4]
    $region9: #{net_forward.1} parent=1 // pred_fallthru
      _
    // Predicated region
    $region10: #{net_forward.1} parent=1 // pred_check
      _
    $region11: #{net_forward.1} parent=1 // pred_check_branch
      %29 = sbr.rel (0) target = $region13
    $region12: #{net_forward.1} parent=1 // pred_region
      %s31 = ssub.s32 16, 16
      %32 = vsyncadd [#allocation6], %s31
      %s34 = sshll.u32 %s2, 4
      %s35 = int_to_ptr.vmem [resolvable:$true] %s34
      %37 = dma.vmem_to_smem %s35, 16, [#allocation5], [#allocation6]
    $region13: #{net_forward.1} parent=1 // pred_fallthru
      _
    // Predicated region
    $region14: #{net_forward.1} parent=1 // pred_check
      _
    $region15: #{net_forward.1} parent=1 // pred_check_branch
      %39 = sbr.rel (0) target = $region17
    $region16: #{net_forward.1} parent=1 // pred_region
      %s41 = ssub.s32 16, 16
      %42 = vsyncadd [#allocation6], %s41
      %s44 = sshll.u32 %s3, 4
      %s45 = int_to_ptr.vmem [resolvable:$true] %s44
      %47 = dma.vmem_to_smem %s45, 16, [#allocation7], [#allocation6]
    $region17: #{net_forward.1} parent=1 // pred_fallthru
      _
    // Predicated region
    $region18: #{net_forward.1} parent=1 // pred_check
      _
    $region19: #{net_forward.1} parent=1 // pred_check_branch
      %49 = sbr.rel (0) target = $region21
    $region20: #{net_forward.1} parent=1 // pred_region
      %s51 = ssub.s32 16, 16
      %52 = vsyncadd [#allocation9], %s51
      %s54 = sshll.u32 %s4, 4
      %s55 = int_to_ptr.vmem [resolvable:$true] %s54
      %57 = dma.vmem_to_smem %s55, 16, [#allocation8], [#allocation9]
    $region21: #{net_forward.1} parent=1 // pred_fallthru
      _
    // Predicated region
    $region22: #{net_forward.1} parent=1 // pred_check
      _
    $region23: #{net_forward.1} parent=1 // pred_check_branch
      %59 = sbr.rel (0) target = $region25
    $region24: #{net_forward.1} parent=1 // pred_region
      _
    $region25: #{net_forward.1} parent=1 // pred_fallthru
      _
    // Predicated region
    $region26: #{net_forward.1} parent=1 // pred_check
      _
    $region27: #{net_forward.1} parent=1 // pred_check_branch
      %61 = sbr.rel (0) target = $region29
    $region28: #{net_forward.1} parent=1 // pred_region
      _
    $region29: #{net_forward.1} parent=1 // pred_fallthru
      _
    // Predicated region
    $region30: #{net_forward.1} parent=1 // pred_check
      _
    $region31: #{net_forward.1} parent=1 // pred_check_branch
      %63 = sbr.rel (0) target = $region33
    $region32: #{net_forward.1} parent=1 // pred_region
      %64 = dma.done [#allocation4], 16
    $region33: #{net_forward.1} parent=1 // pred_fallthru
      _
    // Predicated region
    $region34: #{net_forward.1} parent=1 // pred_check
      _
    $region35: #{net_forward.1} parent=1 // pred_check_branch
      %66 = sbr.rel (0) target = $region37
    $region36: #{net_forward.1} parent=1 // pred_region
      %67 = dma.done [#allocation6], 16
    $region37: #{net_forward.1} parent=1 // pred_fallthru
      _
    // Predicated region
    $region38: #{net_forward.1} parent=1 // pred_check
      _
    $region39: #{net_forward.1} parent=1 // pred_check_branch
      %69 = sbr.rel (0) target = $region41
    $region40: #{net_forward.1} parent=1 // pred_region
      %70 = dma.done [#allocation6], 16
    $region41: #{net_forward.1} parent=1 // pred_fallthru
      _
    // Predicated region
    $region42: #{net_forward.1} parent=1 // pred_check
      _
    $region43: #{net_forward.1} parent=1 // pred_check_branch
      %72 = sbr.rel (0) target = $region45
    $region44: #{net_forward.1} parent=1 // pred_region
      %73 = dma.done [#allocation9], 16
    $region45: #{net_forward.1} parent=1 // pred_fallthru
      _
    %74 = sfence
    %v75 = vld [vmem:[%s0] sm:$0xff]
    %v76 = vld [vmem:[%s0 + $0x8] sm:$0xff]
    %v77 = vld [vmem:[%s0 + $0x10] sm:$0xff]
    %v78 = vld [vmem:[%s0 + $0x18] sm:$0x7f]
    %v79 = vld [vmem:[%s0 + $0x20] sm:$0xff]
    %v80 = vld [vmem:[%s0 + $0x28] sm:$0xff]
    %v81 = vld [vmem:[%s0 + $0x30] sm:$0xff]
    %v82 = vld [vmem:[%s0 + $0x38] sm:$0x7f]
    %s83 = sld [smem:[#allocation2]]
    %v84 = vstv %s83
    %v85 = vmul.f32 %v75, %v84
    %v86 = vmul.f32 %v76, %v84
    %v87 = vmul.f32 %v77, %v84
    %v88 = vmul.f32 %v78, %v84
    %v89 = vmul.f32 %v79, %v84
    %v90 = vmul.f32 %v80, %v84
    %v91 = vmul.f32 %v81, %v84
    %v92 = vmul.f32 %v82, %v84
    %s93 = sld [smem:[#allocation5]]
    %v94 = vstv %s93
    %v95 = vadd.f32 %v85, %v94
    %v96 = vadd.f32 %v86, %v94
    %v97 = vadd.f32 %v87, %v94
    %v98 = vadd.f32 %v88, %v94
    %v99 = vadd.f32 %v89, %v94
    %v100 = vadd.f32 %v90, %v94
    %v101 = vadd.f32 %v91, %v94
    %v102 = vadd.f32 %v92, %v94
    %s103 = sld [smem:[#allocation2 + $0x9]]
    %v104 = vstv %s103
    %v105 = vmul.f32 %v75, %v104
    %v106 = vmul.f32 %v76, %v104
    %v107 = vmul.f32 %v77, %v104
    %v108 = vmul.f32 %v78, %v104
    %v109 = vmul.f32 %v79, %v104
    %v110 = vmul.f32 %v80, %v104
    %v111 = vmul.f32 %v81, %v104
    %v112 = vmul.f32 %v82, %v104
    %s113 = sld [smem:[#allocation5 + $0x1]]
    %v114 = vstv %s113
    %v115 = vadd.f32 %v105, %v114
    %v116 = vadd.f32 %v106, %v114
    %v117 = vadd.f32 %v107, %v114
    %v118 = vadd.f32 %v108, %v114
    %v119 = vadd.f32 %v109, %v114
    %v120 = vadd.f32 %v110, %v114
    %v121 = vadd.f32 %v111, %v114
    %v122 = vadd.f32 %v112, %v114
    %s123 = sld [smem:[#allocation2 + $0x12]]
    %v124 = vstv %s123
    %v125 = vmul.f32 %v75, %v124
    %v126 = vmul.f32 %v76, %v124
    %v127 = vmul.f32 %v77, %v124
    %v128 = vmul.f32 %v78, %v124
    %v129 = vmul.f32 %v79, %v124
    %v130 = vmul.f32 %v80, %v124
    %v131 = vmul.f32 %v81, %v124
    %v132 = vmul.f32 %v82, %v124
    %s133 = sld [smem:[#allocation5 + $0x2]]
    %v134 = vstv %s133
    %v135 = vadd.f32 %v125, %v134
    %v136 = vadd.f32 %v126, %v134
    %v137 = vadd.f32 %v127, %v134
    %v138 = vadd.f32 %v128, %v134
    %v139 = vadd.f32 %v129, %v134
    %v140 = vadd.f32 %v130, %v134
    %v141 = vadd.f32 %v131, %v134
    %v142 = vadd.f32 %v132, %v134
    %s143 = sld [smem:[#allocation2 + $0x1]]
    %v144 = vstv %s143
    %v145 = vmul.f32 %v75, %v144
    %v146 = vmul.f32 %v76, %v144
    %v147 = vmul.f32 %v77, %v144
    %v148 = vmul.f32 %v78, %v144
    %v149 = vmul.f32 %v79, %v144
    %v150 = vmul.f32 %v80, %v144
    %v151 = vmul.f32 %v81, %v144
    %v152 = vmul.f32 %v82, %v144
    %161 = vrot.lane.b32.xlu0 %v145, 127
    %v162 = vpop.permute.xlu0 %161
    %163 = vrot.lane.b32.xlu0 %v146, 127
    %v164 = vpop.permute.xlu0 %163
    %165 = vrot.lane.b32.xlu0 %v147, 127
    %v166 = vpop.permute.xlu0 %165
    %167 = vrot.lane.b32.xlu0 %v148, 127
    %v168 = vpop.permute.xlu0 %167
    %169 = vrot.lane.b32.xlu0 %v149, 127
    %v170 = vpop.permute.xlu0 %169
    %171 = vrot.lane.b32.xlu0 %v150, 127
    %v172 = vpop.permute.xlu0 %171
    %173 = vrot.lane.b32.xlu0 %v151, 127
    %v174 = vpop.permute.xlu0 %173
    %175 = vrot.lane.b32.xlu0 %v152, 127
    %v176 = vpop.permute.xlu0 %175
    %v185 = vadd.f32 %v95, %v162
    %v186 = vadd.f32 %v96, %v164
    %v187 = vadd.f32 %v97, %v166
    %v188 = vadd.f32 %v98, %v168
    %v189 = vadd.f32 %v99, %v170
    %v190 = vadd.f32 %v100, %v172
    %v191 = vadd.f32 %v101, %v174
    %v192 = vadd.f32 %v102, %v176
    %s193 = sld [smem:[#allocation2 + $0xa]]
    %v194 = vstv %s193
    %v195 = vmul.f32 %v75, %v194
    %v196 = vmul.f32 %v76, %v194
    %v197 = vmul.f32 %v77, %v194
    %v198 = vmul.f32 %v78, %v194
    %v199 = vmul.f32 %v79, %v194
    %v200 = vmul.f32 %v80, %v194
    %v201 = vmul.f32 %v81, %v194
    %v202 = vmul.f32 %v82, %v194
    %211 = vrot.lane.b32.xlu0 %v195, 127
    %v212 = vpop.permute.xlu0 %211
    %213 = vrot.lane.b32.xlu0 %v196, 127
    %v214 = vpop.permute.xlu0 %213
    %215 = vrot.lane.b32.xlu0 %v197, 127
    %v216 = vpop.permute.xlu0 %215
    %217 = vrot.lane.b32.xlu0 %v198, 127
    %v218 = vpop.permute.xlu0 %217
    %219 = vrot.lane.b32.xlu0 %v199, 127
    %v220 = vpop.permute.xlu0 %219
    %221 = vrot.lane.b32.xlu0 %v200, 127
    %v222 = vpop.permute.xlu0 %221
    %223 = vrot.lane.b32.xlu0 %v201, 127
    %v224 = vpop.permute.xlu0 %223
    %225 = vrot.lane.b32.xlu0 %v202, 127
    %v226 = vpop.permute.xlu0 %225
    %v235 = vadd.f32 %v115, %v212
    %v236 = vadd.f32 %v116, %v214
    %v237 = vadd.f32 %v117, %v216
    %v238 = vadd.f32 %v118, %v218
    %v239 = vadd.f32 %v119, %v220
    %v240 = vadd.f32 %v120, %v222
    %v241 = vadd.f32 %v121, %v224
    %v242 = vadd.f32 %v122, %v226
    %s243 = sld [smem:[#allocation2 + $0x13]]
    %v244 = vstv %s243
    %v245 = vmul.f32 %v75, %v244
    %v246 = vmul.f32 %v76, %v244
    %v247 = vmul.f32 %v77, %v244
    %v248 = vmul.f32 %v78, %v244
    %v249 = vmul.f32 %v79, %v244
    %v250 = vmul.f32 %v80, %v244
    %v251 = vmul.f32 %v81, %v244
    %v252 = vmul.f32 %v82, %v244
    %261 = vrot.lane.b32.xlu0 %v245, 127
    %v262 = vpop.permute.xlu0 %261
    %263 = vrot.lane.b32.xlu0 %v246, 127
    %v264 = vpop.permute.xlu0 %263
    %265 = vrot.lane.b32.xlu0 %v247, 127
    %v266 = vpop.permute.xlu0 %265
    %267 = vrot.lane.b32.xlu0 %v248, 127
    %v268 = vpop.permute.xlu0 %267
    %269 = vrot.lane.b32.xlu0 %v249, 127
    %v270 = vpop.permute.xlu0 %269
    %271 = vrot.lane.b32.xlu0 %v250, 127
    %v272 = vpop.permute.xlu0 %271
    %273 = vrot.lane.b32.xlu0 %v251, 127
    %v274 = vpop.permute.xlu0 %273
    %275 = vrot.lane.b32.xlu0 %v252, 127
    %v276 = vpop.permute.xlu0 %275
    %v285 = vadd.f32 %v135, %v262
    %v286 = vadd.f32 %v136, %v264
    %v287 = vadd.f32 %v137, %v266
    %v288 = vadd.f32 %v138, %v268
    %v289 = vadd.f32 %v139, %v270
    %v290 = vadd.f32 %v140, %v272
    %v291 = vadd.f32 %v141, %v274
    %v292 = vadd.f32 %v142, %v276
    %s293 = sld [smem:[#allocation2 + $0x2]]
    %v294 = vstv %s293
    %v295 = vmul.f32 %v75, %v294
    %v296 = vmul.f32 %v76, %v294
    %v297 = vmul.f32 %v77, %v294
    %v298 = vmul.f32 %v78, %v294
    %v299 = vmul.f32 %v79, %v294
    %v300 = vmul.f32 %v80, %v294
    %v301 = vmul.f32 %v81, %v294
    %v302 = vmul.f32 %v82, %v294
    %311 = vrot.lane.b32.xlu0 %v295, 126
    %v312 = vpop.permute.xlu0 %311
    %313 = vrot.lane.b32.xlu0 %v296, 126
    %v314 = vpop.permute.xlu0 %313
    %315 = vrot.lane.b32.xlu0 %v297, 126
    %v316 = vpop.permute.xlu0 %315
    %317 = vrot.lane.b32.xlu0 %v298, 126
    %v318 = vpop.permute.xlu0 %317
    %319 = vrot.lane.b32.xlu0 %v299, 126
    %v320 = vpop.permute.xlu0 %319
    %321 = vrot.lane.b32.xlu0 %v300, 126
    %v322 = vpop.permute.xlu0 %321
    %323 = vrot.lane.b32.xlu0 %v301, 126
    %v324 = vpop.permute.xlu0 %323
    %325 = vrot.lane.b32.xlu0 %v302, 126
    %v326 = vpop.permute.xlu0 %325
    %v335 = vadd.f32 %v185, %v312
    %v336 = vadd.f32 %v186, %v314
    %v337 = vadd.f32 %v187, %v316
    %v338 = vadd.f32 %v188, %v318
    %v339 = vadd.f32 %v189, %v320
    %v340 = vadd.f32 %v190, %v322
    %v341 = vadd.f32 %v191, %v324
    %v342 = vadd.f32 %v192, %v326
    %s343 = sld [smem:[#allocation2 + $0xb]]
    %v344 = vstv %s343
    %v345 = vmul.f32 %v75, %v344
    %v346 = vmul.f32 %v76, %v344
    %v347 = vmul.f32 %v77, %v344
    %v348 = vmul.f32 %v78, %v344
    %v349 = vmul.f32 %v79, %v344
    %v350 = vmul.f32 %v80, %v344
    %v351 = vmul.f32 %v81, %v344
    %v352 = vmul.f32 %v82, %v344
    %361 = vrot.lane.b32.xlu0 %v345, 126
    %v362 = vpop.permute.xlu0 %361
    %363 = vrot.lane.b32.xlu0 %v346, 126
    %v364 = vpop.permute.xlu0 %363
    %365 = vrot.lane.b32.xlu0 %v347, 126
    %v366 = vpop.permute.xlu0 %365
    %367 = vrot.lane.b32.xlu0 %v348, 126
    %v368 = vpop.permute.xlu0 %367
    %369 = vrot.lane.b32.xlu0 %v349, 126
    %v370 = vpop.permute.xlu0 %369
    %371 = vrot.lane.b32.xlu0 %v350, 126
    %v372 = vpop.permute.xlu0 %371
    %373 = vrot.lane.b32.xlu0 %v351, 126
    %v374 = vpop.permute.xlu0 %373
    %375 = vrot.lane.b32.xlu0 %v352, 126
    %v376 = vpop.permute.xlu0 %375
    %v385 = vadd.f32 %v235, %v362
    %v386 = vadd.f32 %v236, %v364
    %v387 = vadd.f32 %v237, %v366
    %v388 = vadd.f32 %v238, %v368
    %v389 = vadd.f32 %v239, %v370
    %v390 = vadd.f32 %v240, %v372
    %v391 = vadd.f32 %v241, %v374
    %v392 = vadd.f32 %v242, %v376
    %s393 = sld [smem:[#allocation2 + $0x14]]
    %v394 = vstv %s393
    %v395 = vmul.f32 %v75, %v394
    %v396 = vmul.f32 %v76, %v394
    %v397 = vmul.f32 %v77, %v394
    %v398 = vmul.f32 %v78, %v394
    %v399 = vmul.f32 %v79, %v394
    %v400 = vmul.f32 %v80, %v394
    %v401 = vmul.f32 %v81, %v394
    %v402 = vmul.f32 %v82, %v394
    %411 = vrot.lane.b32.xlu0 %v395, 126
    %v412 = vpop.permute.xlu0 %411
    %413 = vrot.lane.b32.xlu0 %v396, 126
    %v414 = vpop.permute.xlu0 %413
    %415 = vrot.lane.b32.xlu0 %v397, 126
    %v416 = vpop.permute.xlu0 %415
    %417 = vrot.lane.b32.xlu0 %v398, 126
    %v418 = vpop.permute.xlu0 %417
    %419 = vrot.lane.b32.xlu0 %v399, 126
    %v420 = vpop.permute.xlu0 %419
    %421 = vrot.lane.b32.xlu0 %v400, 126
    %v422 = vpop.permute.xlu0 %421
    %423 = vrot.lane.b32.xlu0 %v401, 126
    %v424 = vpop.permute.xlu0 %423
    %425 = vrot.lane.b32.xlu0 %v402, 126
    %v426 = vpop.permute.xlu0 %425
    %v435 = vadd.f32 %v285, %v412
    %v436 = vadd.f32 %v286, %v414
    %v437 = vadd.f32 %v287, %v416
    %v438 = vadd.f32 %v288, %v418
    %v439 = vadd.f32 %v289, %v420
    %v440 = vadd.f32 %v290, %v422
    %v441 = vadd.f32 %v291, %v424
    %v442 = vadd.f32 %v292, %v426
    %s443 = sld [smem:[#allocation2 + $0x3]]
    %v444 = vstv %s443
    %v445 = vmul.f32 %v75, %v444
    %v446 = vmul.f32 %v76, %v444
    %v447 = vmul.f32 %v77, %v444
    %v448 = vmul.f32 %v78, %v444
    %v449 = vmul.f32 %v79, %v444
    %v450 = vmul.f32 %v80, %v444
    %v451 = vmul.f32 %v81, %v444
    %v452 = vmul.f32 %v82, %v444
    %vm461 = vcmask 1046528
    %v462 = vrot.slane %v445, 1
    %v463 = vrot.slane %v446, 1
    %v464 = vsel %vm461, %v462, %v463
    %v465 = vrot.slane %v447, 1
    %v466 = vsel %vm461, %v463, %v465
    %v467 = vrot.slane %v448, 1
    %v468 = vsel %vm461, %v465, %v467
    %v469 = vrot.slane %v449, 1
    %v470 = vrot.slane %v450, 1
    %v471 = vsel %vm461, %v469, %v470
    %v472 = vrot.slane %v451, 1
    %v473 = vsel %vm461, %v470, %v472
    %v474 = vrot.slane %v452, 1
    %v475 = vsel %vm461, %v472, %v474
    %v484 = vadd.f32 %v335, %v464
    %v485 = vadd.f32 %v336, %v466
    %v486 = vadd.f32 %v337, %v468
    %v487 = vadd.f32 %v338, %v467
    %v488 = vadd.f32 %v339, %v471
    %v489 = vadd.f32 %v340, %v473
    %v490 = vadd.f32 %v341, %v475
    %v491 = vadd.f32 %v342, %v474
    %s492 = sld [smem:[#allocation2 + $0xc]]
    %v493 = vstv %s492
    %v494 = vmul.f32 %v75, %v493
    %v495 = vmul.f32 %v76, %v493
    %v496 = vmul.f32 %v77, %v493
    %v497 = vmul.f32 %v78, %v493
    %v498 = vmul.f32 %v79, %v493
    %v499 = vmul.f32 %v80, %v493
    %v500 = vmul.f32 %v81, %v493
    %v501 = vmul.f32 %v82, %v493
    %v510 = vrot.slane %v494, 1
    %v511 = vrot.slane %v495, 1
    %v512 = vsel %vm461, %v510, %v511
    %v513 = vrot.slane %v496, 1
    %v514 = vsel %vm461, %v511, %v513
    %v515 = vrot.slane %v497, 1
    %v516 = vsel %vm461, %v513, %v515
    %v517 = vrot.slane %v498, 1
    %v518 = vrot.slane %v499, 1
    %v519 = vsel %vm461, %v517, %v518
    %v520 = vrot.slane %v500, 1
    %v521 = vsel %vm461, %v518, %v520
    %v522 = vrot.slane %v501, 1
    %v523 = vsel %vm461, %v520, %v522
    %v532 = vadd.f32 %v385, %v512
    %v533 = vadd.f32 %v386, %v514
    %v534 = vadd.f32 %v387, %v516
    %v535 = vadd.f32 %v388, %v515
    %v536 = vadd.f32 %v389, %v519
    %v537 = vadd.f32 %v390, %v521
    %v538 = vadd.f32 %v391, %v523
    %v539 = vadd.f32 %v392, %v522
    %s540 = sld [smem:[#allocation2 + $0x15]]
    %v541 = vstv %s540
    %v542 = vmul.f32 %v75, %v541
    %v543 = vmul.f32 %v76, %v541
    %v544 = vmul.f32 %v77, %v541
    %v545 = vmul.f32 %v78, %v541
    %v546 = vmul.f32 %v79, %v541
    %v547 = vmul.f32 %v80, %v541
    %v548 = vmul.f32 %v81, %v541
    %v549 = vmul.f32 %v82, %v541
    %v558 = vrot.slane %v542, 1
    %v559 = vrot.slane %v543, 1
    %v560 = vsel %vm461, %v558, %v559
    %v561 = vrot.slane %v544, 1
    %v562 = vsel %vm461, %v559, %v561
    %v563 = vrot.slane %v545, 1
    %v564 = vsel %vm461, %v561, %v563
    %v565 = vrot.slane %v546, 1
    %v566 = vrot.slane %v547, 1
    %v567 = vsel %vm461, %v565, %v566
    %v568 = vrot.slane %v548, 1
    %v569 = vsel %vm461, %v566, %v568
    %v570 = vrot.slane %v549, 1
    %v571 = vsel %vm461, %v568, %v570
    %v580 = vadd.f32 %v435, %v560
    %v581 = vadd.f32 %v436, %v562
    %v582 = vadd.f32 %v437, %v564
    %v583 = vadd.f32 %v438, %v563
    %v584 = vadd.f32 %v439, %v567
    %v585 = vadd.f32 %v440, %v569
    %v586 = vadd.f32 %v441, %v571
    %v587 = vadd.f32 %v442, %v570
    %s588 = sld [smem:[#allocation2 + $0x4]]
    %v589 = vstv %s588
    %v590 = vmul.f32 %v75, %v589
    %v591 = vmul.f32 %v76, %v589
    %v592 = vmul.f32 %v77, %v589
    %v593 = vmul.f32 %v78, %v589
    %v594 = vmul.f32 %v79, %v589
    %v595 = vmul.f32 %v80, %v589
    %v596 = vmul.f32 %v81, %v589
    %v597 = vmul.f32 %v82, %v589
    %v606 = vrot.slane %v590, 1
    %v607 = vrot.slane %v591, 1
    %v608 = vsel %vm461, %v606, %v607
    %v609 = vrot.slane %v592, 1
    %v610 = vsel %vm461, %v607, %v609
    %v611 = vrot.slane %v593, 1
    %v612 = vsel %vm461, %v609, %v611
    %v613 = vrot.slane %v594, 1
    %v614 = vrot.slane %v595, 1
    %v615 = vsel %vm461, %v613, %v614
    %v616 = vrot.slane %v596, 1
    %v617 = vsel %vm461, %v614, %v616
    %v618 = vrot.slane %v597, 1
    %v619 = vsel %vm461, %v616, %v618
    %620 = vrot.lane.b32.xlu0 %v608, 127
    %v621 = vpop.permute.xlu0 %620
    %622 = vrot.lane.b32.xlu0 %v610, 127
    %v623 = vpop.permute.xlu0 %622
    %624 = vrot.lane.b32.xlu0 %v612, 127
    %v625 = vpop.permute.xlu0 %624
    %626 = vrot.lane.b32.xlu0 %v611, 127
    %v627 = vpop.permute.xlu0 %626
    %628 = vrot.lane.b32.xlu0 %v615, 127
    %v629 = vpop.permute.xlu0 %628
    %630 = vrot.lane.b32.xlu0 %v617, 127
    %v631 = vpop.permute.xlu0 %630
    %632 = vrot.lane.b32.xlu0 %v619, 127
    %v633 = vpop.permute.xlu0 %632
    %634 = vrot.lane.b32.xlu0 %v618, 127
    %v635 = vpop.permute.xlu0 %634
    %v644 = vadd.f32 %v484, %v621
    %v645 = vadd.f32 %v485, %v623
    %v646 = vadd.f32 %v486, %v625
    %v647 = vadd.f32 %v487, %v627
    %v648 = vadd.f32 %v488, %v629
    %v649 = vadd.f32 %v489, %v631
    %v650 = vadd.f32 %v490, %v633
    %v651 = vadd.f32 %v491, %v635
    %s652 = sld [smem:[#allocation2 + $0xd]]
    %v653 = vstv %s652
    %v654 = vmul.f32 %v75, %v653
    %v655 = vmul.f32 %v76, %v653
    %v656 = vmul.f32 %v77, %v653
    %v657 = vmul.f32 %v78, %v653
    %v658 = vmul.f32 %v79, %v653
    %v659 = vmul.f32 %v80, %v653
    %v660 = vmul.f32 %v81, %v653
    %v661 = vmul.f32 %v82, %v653
    %v670 = vrot.slane %v654, 1
    %v671 = vrot.slane %v655, 1
    %v672 = vsel %vm461, %v670, %v671
    %v673 = vrot.slane %v656, 1
    %v674 = vsel %vm461, %v671, %v673
    %v675 = vrot.slane %v657, 1
    %v676 = vsel %vm461, %v673, %v675
    %v677 = vrot.slane %v658, 1
    %v678 = vrot.slane %v659, 1
    %v679 = vsel %vm461, %v677, %v678
    %v680 = vrot.slane %v660, 1
    %v681 = vsel %vm461, %v678, %v680
    %v682 = vrot.slane %v661, 1
    %v683 = vsel %vm461, %v680, %v682
    %684 = vrot.lane.b32.xlu0 %v672, 127
    %v685 = vpop.permute.xlu0 %684
    %686 = vrot.lane.b32.xlu0 %v674, 127
    %v687 = vpop.permute.xlu0 %686
    %688 = vrot.lane.b32.xlu0 %v676, 127
    %v689 = vpop.permute.xlu0 %688
    %690 = vrot.lane.b32.xlu0 %v675, 127
    %v691 = vpop.permute.xlu0 %690
    %692 = vrot.lane.b32.xlu0 %v679, 127
    %v693 = vpop.permute.xlu0 %692
    %694 = vrot.lane.b32.xlu0 %v681, 127
    %v695 = vpop.permute.xlu0 %694
    %696 = vrot.lane.b32.xlu0 %v683, 127
    %v697 = vpop.permute.xlu0 %696
    %698 = vrot.lane.b32.xlu0 %v682, 127
    %v699 = vpop.permute.xlu0 %698
    %v708 = vadd.f32 %v532, %v685
    %v709 = vadd.f32 %v533, %v687
    %v710 = vadd.f32 %v534, %v689
    %v711 = vadd.f32 %v535, %v691
    %v712 = vadd.f32 %v536, %v693
    %v713 = vadd.f32 %v537, %v695
    %v714 = vadd.f32 %v538, %v697
    %v715 = vadd.f32 %v539, %v699
    %s716 = sld [smem:[#allocation2 + $0x16]]
    %v717 = vstv %s716
    %v718 = vmul.f32 %v75, %v717
    %v719 = vmul.f32 %v76, %v717
    %v720 = vmul.f32 %v77, %v717
    %v721 = vmul.f32 %v78, %v717
    %v722 = vmul.f32 %v79, %v717
    %v723 = vmul.f32 %v80, %v717
    %v724 = vmul.f32 %v81, %v717
    %v725 = vmul.f32 %v82, %v717
    %v734 = vrot.slane %v718, 1
    %v735 = vrot.slane %v719, 1
    %v736 = vsel %vm461, %v734, %v735
    %v737 = vrot.slane %v720, 1
    %v738 = vsel %vm461, %v735, %v737
    %v739 = vrot.slane %v721, 1
    %v740 = vsel %vm461, %v737, %v739
    %v741 = vrot.slane %v722, 1
    %v742 = vrot.slane %v723, 1
    %v743 = vsel %vm461, %v741, %v742
    %v744 = vrot.slane %v724, 1
    %v745 = vsel %vm461, %v742, %v744
    %v746 = vrot.slane %v725, 1
    %v747 = vsel %vm461, %v744, %v746
    %748 = vrot.lane.b32.xlu0 %v736, 127
    %v749 = vpop.permute.xlu0 %748
    %750 = vrot.lane.b32.xlu0 %v738, 127
    %v751 = vpop.permute.xlu0 %750
    %752 = vrot.lane.b32.xlu0 %v740, 127
    %v753 = vpop.permute.xlu0 %752
    %754 = vrot.lane.b32.xlu0 %v739, 127
    %v755 = vpop.permute.xlu0 %754
    %756 = vrot.lane.b32.xlu0 %v743, 127
    %v757 = vpop.permute.xlu0 %756
    %758 = vrot.lane.b32.xlu0 %v745, 127
    %v759 = vpop.permute.xlu0 %758
    %760 = vrot.lane.b32.xlu0 %v747, 127
    %v761 = vpop.permute.xlu0 %760
    %762 = vrot.lane.b32.xlu0 %v746, 127
    %v763 = vpop.permute.xlu0 %762
    %v772 = vadd.f32 %v580, %v749
    %v773 = vadd.f32 %v581, %v751
    %v774 = vadd.f32 %v582, %v753
    %v775 = vadd.f32 %v583, %v755
    %v776 = vadd.f32 %v584, %v757
    %v777 = vadd.f32 %v585, %v759
    %v778 = vadd.f32 %v586, %v761
    %v779 = vadd.f32 %v587, %v763
    %s780 = sld [smem:[#allocation2 + $0x5]]
    %v781 = vstv %s780
    %v782 = vmul.f32 %v75, %v781
    %v783 = vmul.f32 %v76, %v781
    %v784 = vmul.f32 %v77, %v781
    %v785 = vmul.f32 %v78, %v781
    %v786 = vmul.f32 %v79, %v781
    %v787 = vmul.f32 %v80, %v781
    %v788 = vmul.f32 %v81, %v781
    %v789 = vmul.f32 %v82, %v781
    %v798 = vrot.slane %v782, 1
    %v799 = vrot.slane %v783, 1
    %v800 = vsel %vm461, %v798, %v799
    %v801 = vrot.slane %v784, 1
    %v802 = vsel %vm461, %v799, %v801
    %v803 = vrot.slane %v785, 1
    %v804 = vsel %vm461, %v801, %v803
    %v805 = vrot.slane %v786, 1
    %v806 = vrot.slane %v787, 1
    %v807 = vsel %vm461, %v805, %v806
    %v808 = vrot.slane %v788, 1
    %v809 = vsel %vm461, %v806, %v808
    %v810 = vrot.slane %v789, 1
    %v811 = vsel %vm461, %v808, %v810
    %812 = vrot.lane.b32.xlu0 %v800, 126
    %v813 = vpop.permute.xlu0 %812
    %814 = vrot.lane.b32.xlu0 %v802, 126
    %v815 = vpop.permute.xlu0 %814
    %816 = vrot.lane.b32.xlu0 %v804, 126
    %v817 = vpop.permute.xlu0 %816
    %818 = vrot.lane.b32.xlu0 %v803, 126
    %v819 = vpop.permute.xlu0 %818
    %820 = vrot.lane.b32.xlu0 %v807, 126
    %v821 = vpop.permute.xlu0 %820
    %822 = vrot.lane.b32.xlu0 %v809, 126
    %v823 = vpop.permute.xlu0 %822
    %824 = vrot.lane.b32.xlu0 %v811, 126
    %v825 = vpop.permute.xlu0 %824
    %826 = vrot.lane.b32.xlu0 %v810, 126
    %v827 = vpop.permute.xlu0 %826
    %v836 = vadd.f32 %v644, %v813
    %v837 = vadd.f32 %v645, %v815
    %v838 = vadd.f32 %v646, %v817
    %v839 = vadd.f32 %v647, %v819
    %v840 = vadd.f32 %v648, %v821
    %v841 = vadd.f32 %v649, %v823
    %v842 = vadd.f32 %v650, %v825
    %v843 = vadd.f32 %v651, %v827
    %s844 = sld [smem:[#allocation2 + $0xe]]
    %v845 = vstv %s844
    %v846 = vmul.f32 %v75, %v845
    %v847 = vmul.f32 %v76, %v845
    %v848 = vmul.f32 %v77, %v845
    %v849 = vmul.f32 %v78, %v845
    %v850 = vmul.f32 %v79, %v845
    %v851 = vmul.f32 %v80, %v845
    %v852 = vmul.f32 %v81, %v845
    %v853 = vmul.f32 %v82, %v845
    %v862 = vrot.slane %v846, 1
    %v863 = vrot.slane %v847, 1
    %v864 = vsel %vm461, %v862, %v863
    %v865 = vrot.slane %v848, 1
    %v866 = vsel %vm461, %v863, %v865
    %v867 = vrot.slane %v849, 1
    %v868 = vsel %vm461, %v865, %v867
    %v869 = vrot.slane %v850, 1
    %v870 = vrot.slane %v851, 1
    %v871 = vsel %vm461, %v869, %v870
    %v872 = vrot.slane %v852, 1
    %v873 = vsel %vm461, %v870, %v872
    %v874 = vrot.slane %v853, 1
    %v875 = vsel %vm461, %v872, %v874
    %876 = vrot.lane.b32.xlu0 %v864, 126
    %v877 = vpop.permute.xlu0 %876
    %878 = vrot.lane.b32.xlu0 %v866, 126
    %v879 = vpop.permute.xlu0 %878
    %880 = vrot.lane.b32.xlu0 %v868, 126
    %v881 = vpop.permute.xlu0 %880
    %882 = vrot.lane.b32.xlu0 %v867, 126
    %v883 = vpop.permute.xlu0 %882
    %884 = vrot.lane.b32.xlu0 %v871, 126
    %v885 = vpop.permute.xlu0 %884
    %886 = vrot.lane.b32.xlu0 %v873, 126
    %v887 = vpop.permute.xlu0 %886
    %888 = vrot.lane.b32.xlu0 %v875, 126
    %v889 = vpop.permute.xlu0 %888
    %890 = vrot.lane.b32.xlu0 %v874, 126
    %v891 = vpop.permute.xlu0 %890
    %v900 = vadd.f32 %v708, %v877
    %v901 = vadd.f32 %v709, %v879
    %v902 = vadd.f32 %v710, %v881
    %v903 = vadd.f32 %v711, %v883
    %v904 = vadd.f32 %v712, %v885
    %v905 = vadd.f32 %v713, %v887
    %v906 = vadd.f32 %v714, %v889
    %v907 = vadd.f32 %v715, %v891
    %s908 = sld [smem:[#allocation2 + $0x17]]
    %v909 = vstv %s908
    %v910 = vmul.f32 %v75, %v909
    %v911 = vmul.f32 %v76, %v909
    %v912 = vmul.f32 %v77, %v909
    %v913 = vmul.f32 %v78, %v909
    %v914 = vmul.f32 %v79, %v909
    %v915 = vmul.f32 %v80, %v909
    %v916 = vmul.f32 %v81, %v909
    %v917 = vmul.f32 %v82, %v909
    %v926 = vrot.slane %v910, 1
    %v927 = vrot.slane %v911, 1
    %v928 = vsel %vm461, %v926, %v927
    %v929 = vrot.slane %v912, 1
    %v930 = vsel %vm461, %v927, %v929
    %v931 = vrot.slane %v913, 1
    %v932 = vsel %vm461, %v929, %v931
    %v933 = vrot.slane %v914, 1
    %v934 = vrot.slane %v915, 1
    %v935 = vsel %vm461, %v933, %v934
    %v936 = vrot.slane %v916, 1
    %v937 = vsel %vm461, %v934, %v936
    %v938 = vrot.slane %v917, 1
    %v939 = vsel %vm461, %v936, %v938
    %940 = vrot.lane.b32.xlu0 %v928, 126
    %v941 = vpop.permute.xlu0 %940
    %942 = vrot.lane.b32.xlu0 %v930, 126
    %v943 = vpop.permute.xlu0 %942
    %944 = vrot.lane.b32.xlu0 %v932, 126
    %v945 = vpop.permute.xlu0 %944
    %946 = vrot.lane.b32.xlu0 %v931, 126
    %v947 = vpop.permute.xlu0 %946
    %948 = vrot.lane.b32.xlu0 %v935, 126
    %v949 = vpop.permute.xlu0 %948
    %950 = vrot.lane.b32.xlu0 %v937, 126
    %v951 = vpop.permute.xlu0 %950
    %952 = vrot.lane.b32.xlu0 %v939, 126
    %v953 = vpop.permute.xlu0 %952
    %954 = vrot.lane.b32.xlu0 %v938, 126
    %v955 = vpop.permute.xlu0 %954
    %v964 = vadd.f32 %v772, %v941
    %v965 = vadd.f32 %v773, %v943
    %v966 = vadd.f32 %v774, %v945
    %v967 = vadd.f32 %v775, %v947
    %v968 = vadd.f32 %v776, %v949
    %v969 = vadd.f32 %v777, %v951
    %v970 = vadd.f32 %v778, %v953
    %v971 = vadd.f32 %v779, %v955
    %s972 = sld [smem:[#allocation2 + $0x6]]
    %v973 = vstv %s972
    %v974 = vmul.f32 %v75, %v973
    %v975 = vmul.f32 %v76, %v973
    %v976 = vmul.f32 %v77, %v973
    %v977 = vmul.f32 %v78, %v973
    %v978 = vmul.f32 %v79, %v973
    %v979 = vmul.f32 %v80, %v973
    %v980 = vmul.f32 %v81, %v973
    %v981 = vmul.f32 %v82, %v973
    %vm990 = vcmask 1045504
    %v991 = vrot.slane %v974, 2
    %v992 = vrot.slane %v975, 2
    %v993 = vsel %vm990, %v991, %v992
    %v994 = vrot.slane %v976, 2
    %v995 = vsel %vm990, %v992, %v994
    %v996 = vrot.slane %v977, 2
    %v997 = vsel %vm990, %v994, %v996
    %v998 = vrot.slane %v978, 2
    %v999 = vrot.slane %v979, 2
    %v1000 = vsel %vm990, %v998, %v999
    %v1001 = vrot.slane %v980, 2
    %v1002 = vsel %vm990, %v999, %v1001
    %v1003 = vrot.slane %v981, 2
    %v1004 = vsel %vm990, %v1001, %v1003
    %v1013 = vadd.f32 %v836, %v993
    %v1014 = vadd.f32 %v837, %v995
    %v1015 = vadd.f32 %v838, %v997
    %v1016 = vadd.f32 %v839, %v996
    %v1017 = vadd.f32 %v840, %v1000
    %v1018 = vadd.f32 %v841, %v1002
    %v1019 = vadd.f32 %v842, %v1004
    %v1020 = vadd.f32 %v843, %v1003
    %s1021 = sld [smem:[#allocation2 + $0xf]]
    %v1022 = vstv %s1021
    %v1023 = vmul.f32 %v75, %v1022
    %v1024 = vmul.f32 %v76, %v1022
    %v1025 = vmul.f32 %v77, %v1022
    %v1026 = vmul.f32 %v78, %v1022
    %v1027 = vmul.f32 %v79, %v1022
    %v1028 = vmul.f32 %v80, %v1022
    %v1029 = vmul.f32 %v81, %v1022
    %v1030 = vmul.f32 %v82, %v1022
    %v1039 = vrot.slane %v1023, 2
    %v1040 = vrot.slane %v1024, 2
    %v1041 = vsel %vm990, %v1039, %v1040
    %v1042 = vrot.slane %v1025, 2
    %v1043 = vsel %vm990, %v1040, %v1042
    %v1044 = vrot.slane %v1026, 2
    %v1045 = vsel %vm990, %v1042, %v1044
    %v1046 = vrot.slane %v1027, 2
    %v1047 = vrot.slane %v1028, 2
    %v1048 = vsel %vm990, %v1046, %v1047
    %v1049 = vrot.slane %v1029, 2
    %v1050 = vsel %vm990, %v1047, %v1049
    %v1051 = vrot.slane %v1030, 2
    %v1052 = vsel %vm990, %v1049, %v1051
    %v1061 = vadd.f32 %v900, %v1041
    %v1062 = vadd.f32 %v901, %v1043
    %v1063 = vadd.f32 %v902, %v1045
    %v1064 = vadd.f32 %v903, %v1044
    %v1065 = vadd.f32 %v904, %v1048
    %v1066 = vadd.f32 %v905, %v1050
    %v1067 = vadd.f32 %v906, %v1052
    %v1068 = vadd.f32 %v907, %v1051
    %s1069 = sld [smem:[#allocation2 + $0x18]]
    %v1070 = vstv %s1069
    %v1071 = vmul.f32 %v75, %v1070
    %v1072 = vmul.f32 %v76, %v1070
    %v1073 = vmul.f32 %v77, %v1070
    %v1074 = vmul.f32 %v78, %v1070
    %v1075 = vmul.f32 %v79, %v1070
    %v1076 = vmul.f32 %v80, %v1070
    %v1077 = vmul.f32 %v81, %v1070
    %v1078 = vmul.f32 %v82, %v1070
    %v1087 = vrot.slane %v1071, 2
    %v1088 = vrot.slane %v1072, 2
    %v1089 = vsel %vm990, %v1087, %v1088
    %v1090 = vrot.slane %v1073, 2
    %v1091 = vsel %vm990, %v1088, %v1090
    %v1092 = vrot.slane %v1074, 2
    %v1093 = vsel %vm990, %v1090, %v1092
    %v1094 = vrot.slane %v1075, 2
    %v1095 = vrot.slane %v1076, 2
    %v1096 = vsel %vm990, %v1094, %v1095
    %v1097 = vrot.slane %v1077, 2
    %v1098 = vsel %vm990, %v1095, %v1097
    %v1099 = vrot.slane %v1078, 2
    %v1100 = vsel %vm990, %v1097, %v1099
    %v1109 = vadd.f32 %v964, %v1089
    %v1110 = vadd.f32 %v965, %v1091
    %v1111 = vadd.f32 %v966, %v1093
    %v1112 = vadd.f32 %v967, %v1092
    %v1113 = vadd.f32 %v968, %v1096
    %v1114 = vadd.f32 %v969, %v1098
    %v1115 = vadd.f32 %v970, %v1100
    %v1116 = vadd.f32 %v971, %v1099
    %s1117 = sld [smem:[#allocation2 + $0x7]]
    %v1118 = vstv %s1117
    %v1119 = vmul.f32 %v75, %v1118
    %v1120 = vmul.f32 %v76, %v1118
    %v1121 = vmul.f32 %v77, %v1118
    %v1122 = vmul.f32 %v78, %v1118
    %v1123 = vmul.f32 %v79, %v1118
    %v1124 = vmul.f32 %v80, %v1118
    %v1125 = vmul.f32 %v81, %v1118
    %v1126 = vmul.f32 %v82, %v1118
    %v1135 = vrot.slane %v1119, 2
    %v1136 = vrot.slane %v1120, 2
    %v1137 = vsel %vm990, %v1135, %v1136
    %v1138 = vrot.slane %v1121, 2
    %v1139 = vsel %vm990, %v1136, %v1138
    %v1140 = vrot.slane %v1122, 2
    %v1141 = vsel %vm990, %v1138, %v1140
    %v1142 = vrot.slane %v1123, 2
    %v1143 = vrot.slane %v1124, 2
    %v1144 = vsel %vm990, %v1142, %v1143
    %v1145 = vrot.slane %v1125, 2
    %v1146 = vsel %vm990, %v1143, %v1145
    %v1147 = vrot.slane %v1126, 2
    %v1148 = vsel %vm990, %v1145, %v1147
    %1149 = vrot.lane.b32.xlu0 %v1137, 127
    %v1150 = vpop.permute.xlu0 %1149
    %1151 = vrot.lane.b32.xlu0 %v1139, 127
    %v1152 = vpop.permute.xlu0 %1151
    %1153 = vrot.lane.b32.xlu0 %v1141, 127
    %v1154 = vpop.permute.xlu0 %1153
    %1155 = vrot.lane.b32.xlu0 %v1140, 127
    %v1156 = vpop.permute.xlu0 %1155
    %1157 = vrot.lane.b32.xlu0 %v1144, 127
    %v1158 = vpop.permute.xlu0 %1157
    %1159 = vrot.lane.b32.xlu0 %v1146, 127
    %v1160 = vpop.permute.xlu0 %1159
    %1161 = vrot.lane.b32.xlu0 %v1148, 127
    %v1162 = vpop.permute.xlu0 %1161
    %1163 = vrot.lane.b32.xlu0 %v1147, 127
    %v1164 = vpop.permute.xlu0 %1163
    %v1173 = vadd.f32 %v1013, %v1150
    %v1174 = vadd.f32 %v1014, %v1152
    %v1175 = vadd.f32 %v1015, %v1154
    %v1176 = vadd.f32 %v1016, %v1156
    %v1177 = vadd.f32 %v1017, %v1158
    %v1178 = vadd.f32 %v1018, %v1160
    %v1179 = vadd.f32 %v1019, %v1162
    %v1180 = vadd.f32 %v1020, %v1164
    %s1181 = sld [smem:[#allocation2 + $0x10]]
    %v1182 = vstv %s1181
    %v1183 = vmul.f32 %v75, %v1182
    %v1184 = vmul.f32 %v76, %v1182
    %v1185 = vmul.f32 %v77, %v1182
    %v1186 = vmul.f32 %v78, %v1182
    %v1187 = vmul.f32 %v79, %v1182
    %v1188 = vmul.f32 %v80, %v1182
    %v1189 = vmul.f32 %v81, %v1182
    %v1190 = vmul.f32 %v82, %v1182
    %v1199 = vrot.slane %v1183, 2
    %v1200 = vrot.slane %v1184, 2
    %v1201 = vsel %vm990, %v1199, %v1200
    %v1202 = vrot.slane %v1185, 2
    %v1203 = vsel %vm990, %v1200, %v1202
    %v1204 = vrot.slane %v1186, 2
    %v1205 = vsel %vm990, %v1202, %v1204
    %v1206 = vrot.slane %v1187, 2
    %v1207 = vrot.slane %v1188, 2
    %v1208 = vsel %vm990, %v1206, %v1207
    %v1209 = vrot.slane %v1189, 2
    %v1210 = vsel %vm990, %v1207, %v1209
    %v1211 = vrot.slane %v1190, 2
    %v1212 = vsel %vm990, %v1209, %v1211
    %1213 = vrot.lane.b32.xlu0 %v1201, 127
    %v1214 = vpop.permute.xlu0 %1213
    %1215 = vrot.lane.b32.xlu0 %v1203, 127
    %v1216 = vpop.permute.xlu0 %1215
    %1217 = vrot.lane.b32.xlu0 %v1205, 127
    %v1218 = vpop.permute.xlu0 %1217
    %1219 = vrot.lane.b32.xlu0 %v1204, 127
    %v1220 = vpop.permute.xlu0 %1219
    %1221 = vrot.lane.b32.xlu0 %v1208, 127
    %v1222 = vpop.permute.xlu0 %1221
    %1223 = vrot.lane.b32.xlu0 %v1210, 127
    %v1224 = vpop.permute.xlu0 %1223
    %1225 = vrot.lane.b32.xlu0 %v1212, 127
    %v1226 = vpop.permute.xlu0 %1225
    %1227 = vrot.lane.b32.xlu0 %v1211, 127
    %v1228 = vpop.permute.xlu0 %1227
    %v1237 = vadd.f32 %v1061, %v1214
    %v1238 = vadd.f32 %v1062, %v1216
    %v1239 = vadd.f32 %v1063, %v1218
    %v1240 = vadd.f32 %v1064, %v1220
    %v1241 = vadd.f32 %v1065, %v1222
    %v1242 = vadd.f32 %v1066, %v1224
    %v1243 = vadd.f32 %v1067, %v1226
    %v1244 = vadd.f32 %v1068, %v1228
    %s1245 = sld [smem:[#allocation2 + $0x19]]
    %v1246 = vstv %s1245
    %v1247 = vmul.f32 %v75, %v1246
    %v1248 = vmul.f32 %v76, %v1246
    %v1249 = vmul.f32 %v77, %v1246
    %v1250 = vmul.f32 %v78, %v1246
    %v1251 = vmul.f32 %v79, %v1246
    %v1252 = vmul.f32 %v80, %v1246
    %v1253 = vmul.f32 %v81, %v1246
    %v1254 = vmul.f32 %v82, %v1246
    %v1263 = vrot.slane %v1247, 2
    %v1264 = vrot.slane %v1248, 2
    %v1265 = vsel %vm990, %v1263, %v1264
    %v1266 = vrot.slane %v1249, 2
    %v1267 = vsel %vm990, %v1264, %v1266
    %v1268 = vrot.slane %v1250, 2
    %v1269 = vsel %vm990, %v1266, %v1268
    %v1270 = vrot.slane %v1251, 2
    %v1271 = vrot.slane %v1252, 2
    %v1272 = vsel %vm990, %v1270, %v1271
    %v1273 = vrot.slane %v1253, 2
    %v1274 = vsel %vm990, %v1271, %v1273
    %v1275 = vrot.slane %v1254, 2
    %v1276 = vsel %vm990, %v1273, %v1275
    %1277 = vrot.lane.b32.xlu0 %v1265, 127
    %v1278 = vpop.permute.xlu0 %1277
    %1279 = vrot.lane.b32.xlu0 %v1267, 127
    %v1280 = vpop.permute.xlu0 %1279
    %1281 = vrot.lane.b32.xlu0 %v1269, 127
    %v1282 = vpop.permute.xlu0 %1281
    %1283 = vrot.lane.b32.xlu0 %v1268, 127
    %v1284 = vpop.permute.xlu0 %1283
    %1285 = vrot.lane.b32.xlu0 %v1272, 127
    %v1286 = vpop.permute.xlu0 %1285
    %1287 = vrot.lane.b32.xlu0 %v1274, 127
    %v1288 = vpop.permute.xlu0 %1287
    %1289 = vrot.lane.b32.xlu0 %v1276, 127
    %v1290 = vpop.permute.xlu0 %1289
    %1291 = vrot.lane.b32.xlu0 %v1275, 127
    %v1292 = vpop.permute.xlu0 %1291
    %v1301 = vadd.f32 %v1109, %v1278
    %v1302 = vadd.f32 %v1110, %v1280
    %v1303 = vadd.f32 %v1111, %v1282
    %v1304 = vadd.f32 %v1112, %v1284
    %v1305 = vadd.f32 %v1113, %v1286
    %v1306 = vadd.f32 %v1114, %v1288
    %v1307 = vadd.f32 %v1115, %v1290
    %v1308 = vadd.f32 %v1116, %v1292
    %s1309 = sld [smem:[#allocation2 + $0x8]]
    %v1310 = vstv %s1309
    %v1311 = vmul.f32 %v75, %v1310
    %v1312 = vmul.f32 %v76, %v1310
    %v1313 = vmul.f32 %v77, %v1310
    %v1314 = vmul.f32 %v78, %v1310
    %v1315 = vmul.f32 %v79, %v1310
    %v1316 = vmul.f32 %v80, %v1310
    %v1317 = vmul.f32 %v81, %v1310
    %v1318 = vmul.f32 %v82, %v1310
    %v1327 = vrot.slane %v1311, 2
    %v1328 = vrot.slane %v1312, 2
    %v1329 = vsel %vm990, %v1327, %v1328
    %v1330 = vrot.slane %v1313, 2
    %v1331 = vsel %vm990, %v1328, %v1330
    %v1332 = vrot.slane %v1314, 2
    %v1333 = vsel %vm990, %v1330, %v1332
    %v1334 = vrot.slane %v1315, 2
    %v1335 = vrot.slane %v1316, 2
    %v1336 = vsel %vm990, %v1334, %v1335
    %v1337 = vrot.slane %v1317, 2
    %v1338 = vsel %vm990, %v1335, %v1337
    %v1339 = vrot.slane %v1318, 2
    %v1340 = vsel %vm990, %v1337, %v1339
    %1341 = vrot.lane.b32.xlu0 %v1329, 126
    %v1342 = vpop.permute.xlu0 %1341
    %1343 = vrot.lane.b32.xlu0 %v1331, 126
    %v1344 = vpop.permute.xlu0 %1343
    %1345 = vrot.lane.b32.xlu0 %v1333, 126
    %v1346 = vpop.permute.xlu0 %1345
    %1347 = vrot.lane.b32.xlu0 %v1332, 126
    %v1348 = vpop.permute.xlu0 %1347
    %1349 = vrot.lane.b32.xlu0 %v1336, 126
    %v1350 = vpop.permute.xlu0 %1349
    %1351 = vrot.lane.b32.xlu0 %v1338, 126
    %v1352 = vpop.permute.xlu0 %1351
    %1353 = vrot.lane.b32.xlu0 %v1340, 126
    %v1354 = vpop.permute.xlu0 %1353
    %1355 = vrot.lane.b32.xlu0 %v1339, 126
    %v1356 = vpop.permute.xlu0 %1355
    %v1365 = vadd.f32 %v1173, %v1342
    %v1366 = vadd.f32 %v1174, %v1344
    %v1367 = vadd.f32 %v1175, %v1346
    %v1368 = vadd.f32 %v1176, %v1348
    %v1369 = vadd.f32 %v1177, %v1350
    %v1370 = vadd.f32 %v1178, %v1352
    %v1371 = vadd.f32 %v1179, %v1354
    %v1372 = vadd.f32 %v1180, %v1356
    %s1373 = sld [smem:[#allocation2 + $0x11]]
    %v1374 = vstv %s1373
    %v1375 = vmul.f32 %v75, %v1374
    %v1376 = vmul.f32 %v76, %v1374
    %v1377 = vmul.f32 %v77, %v1374
    %v1378 = vmul.f32 %v78, %v1374
    %v1379 = vmul.f32 %v79, %v1374
    %v1380 = vmul.f32 %v80, %v1374
    %v1381 = vmul.f32 %v81, %v1374
    %v1382 = vmul.f32 %v82, %v1374
    %v1391 = vrot.slane %v1375, 2
    %v1392 = vrot.slane %v1376, 2
    %v1393 = vsel %vm990, %v1391, %v1392
    %v1394 = vrot.slane %v1377, 2
    %v1395 = vsel %vm990, %v1392, %v1394
    %v1396 = vrot.slane %v1378, 2
    %v1397 = vsel %vm990, %v1394, %v1396
    %v1398 = vrot.slane %v1379, 2
    %v1399 = vrot.slane %v1380, 2
    %v1400 = vsel %vm990, %v1398, %v1399
    %v1401 = vrot.slane %v1381, 2
    %v1402 = vsel %vm990, %v1399, %v1401
    %v1403 = vrot.slane %v1382, 2
    %v1404 = vsel %vm990, %v1401, %v1403
    %1405 = vrot.lane.b32.xlu0 %v1393, 126
    %v1406 = vpop.permute.xlu0 %1405
    %1407 = vrot.lane.b32.xlu0 %v1395, 126
    %v1408 = vpop.permute.xlu0 %1407
    %1409 = vrot.lane.b32.xlu0 %v1397, 126
    %v1410 = vpop.permute.xlu0 %1409
    %1411 = vrot.lane.b32.xlu0 %v1396, 126
    %v1412 = vpop.permute.xlu0 %1411
    %1413 = vrot.lane.b32.xlu0 %v1400, 126
    %v1414 = vpop.permute.xlu0 %1413
    %1415 = vrot.lane.b32.xlu0 %v1402, 126
    %v1416 = vpop.permute.xlu0 %1415
    %1417 = vrot.lane.b32.xlu0 %v1404, 126
    %v1418 = vpop.permute.xlu0 %1417
    %1419 = vrot.lane.b32.xlu0 %v1403, 126
    %v1420 = vpop.permute.xlu0 %1419
    %v1429 = vadd.f32 %v1237, %v1406
    %v1430 = vadd.f32 %v1238, %v1408
    %v1431 = vadd.f32 %v1239, %v1410
    %v1432 = vadd.f32 %v1240, %v1412
    %v1433 = vadd.f32 %v1241, %v1414
    %v1434 = vadd.f32 %v1242, %v1416
    %v1435 = vadd.f32 %v1243, %v1418
    %v1436 = vadd.f32 %v1244, %v1420
    %s1437 = sld [smem:[#allocation2 + $0x1a]]
    %v1438 = vstv %s1437
    %v1439 = vmul.f32 %v75, %v1438
    %v1440 = vmul.f32 %v76, %v1438
    %v1441 = vmul.f32 %v77, %v1438
    %v1442 = vmul.f32 %v78, %v1438
    %v1443 = vmul.f32 %v79, %v1438
    %v1444 = vmul.f32 %v80, %v1438
    %v1445 = vmul.f32 %v81, %v1438
    %v1446 = vmul.f32 %v82, %v1438
    %v1455 = vrot.slane %v1439, 2
    %v1456 = vrot.slane %v1440, 2
    %v1457 = vsel %vm990, %v1455, %v1456
    %v1458 = vrot.slane %v1441, 2
    %v1459 = vsel %vm990, %v1456, %v1458
    %v1460 = vrot.slane %v1442, 2
    %v1461 = vsel %vm990, %v1458, %v1460
    %v1462 = vrot.slane %v1443, 2
    %v1463 = vrot.slane %v1444, 2
    %v1464 = vsel %vm990, %v1462, %v1463
    %v1465 = vrot.slane %v1445, 2
    %v1466 = vsel %vm990, %v1463, %v1465
    %v1467 = vrot.slane %v1446, 2
    %v1468 = vsel %vm990, %v1465, %v1467
    %1469 = vrot.lane.b32.xlu0 %v1457, 126
    %v1470 = vpop.permute.xlu0 %1469
    %1471 = vrot.lane.b32.xlu0 %v1459, 126
    %v1472 = vpop.permute.xlu0 %1471
    %1473 = vrot.lane.b32.xlu0 %v1461, 126
    %v1474 = vpop.permute.xlu0 %1473
    %1475 = vrot.lane.b32.xlu0 %v1460, 126
    %v1476 = vpop.permute.xlu0 %1475
    %1477 = vrot.lane.b32.xlu0 %v1464, 126
    %v1478 = vpop.permute.xlu0 %1477
    %1479 = vrot.lane.b32.xlu0 %v1466, 126
    %v1480 = vpop.permute.xlu0 %1479
    %1481 = vrot.lane.b32.xlu0 %v1468, 126
    %v1482 = vpop.permute.xlu0 %1481
    %1483 = vrot.lane.b32.xlu0 %v1467, 126
    %v1484 = vpop.permute.xlu0 %1483
    %v1493 = vadd.f32 %v1301, %v1470
    %v1494 = vadd.f32 %v1302, %v1472
    %v1495 = vadd.f32 %v1303, %v1474
    %v1496 = vadd.f32 %v1304, %v1476
    %v1497 = vadd.f32 %v1305, %v1478
    %v1498 = vadd.f32 %v1306, %v1480
    %v1499 = vadd.f32 %v1307, %v1482
    %v1500 = vadd.f32 %v1308, %v1484
    %v1501 = vmax.f32 %v1365, 0.0
    %v1502 = vmax.f32 %v1366, 0.0
    %v1503 = vmax.f32 %v1367, 0.0
    %v1504 = vmax.f32 %v1368, 0.0
    %v1505 = vmax.f32 %v1369, 0.0
    %v1506 = vmax.f32 %v1370, 0.0
    %v1507 = vmax.f32 %v1371, 0.0
    %v1508 = vmax.f32 %v1372, 0.0
    %vm1509 = vcmask 228352
    %v1510 = vsel %vm1509, %v1501, 0.0
    %v1511 = vsel %vm1509, %v1502, 0.0
    %v1512 = vadd.f32 %v1510, %v1511
    %v1513 = vsel %vm1509, %v1503, 0.0
    %v1514 = vadd.f32 %v1512, %v1513
    %vm1515 = vcmask 224256
    %v1516 = vsel %vm1515, %v1504, 0.0
    %v1517 = vadd.f32 %v1514, %v1516
    %v1518 = vsel %vm1509, %v1505, 0.0
    %v1519 = vadd.f32 %v1517, %v1518
    %v1520 = vsel %vm1509, %v1506, 0.0
    %v1521 = vadd.f32 %v1519, %v1520
    %v1522 = vsel %vm1509, %v1507, 0.0
    %v1523 = vadd.f32 %v1521, %v1522
    %v1524 = vsel %vm1515, %v1508, 0.0
    %v1525 = vadd.f32 %v1523, %v1524
    %1526 = vadd.xlane.f32.xlu0 %v1525
    %v1527 = vpop.xlane.xlu0 %1526
    %v1528 = vrot.slane %v1527, 4
    %v1529 = vadd.f32 %v1527, %v1528
    %v1530 = vrot.slane %v1529, 2
    %v1531 = vadd.f32 %v1529, %v1530
    %v1532 = vrot.slane %v1531, 1
    %v1533 = vadd.f32 %v1531, %v1532
    %s1534 = vtos %v1533
    %v1535 = vrcp.pop 1568.0
    %s1536 = vtos %v1535
    %s1537 = smul.f32 %s1534, %s1536
    %v1538 = vmul.f32 %v1501, %v1501
    %v1539 = vmul.f32 %v1502, %v1502
    %v1540 = vmul.f32 %v1503, %v1503
    %v1541 = vmul.f32 %v1504, %v1504
    %v1542 = vmul.f32 %v1505, %v1505
    %v1543 = vmul.f32 %v1506, %v1506
    %v1544 = vmul.f32 %v1507, %v1507
    %v1545 = vmul.f32 %v1508, %v1508
    %v1546 = vsel %vm1509, %v1538, 0.0
    %v1547 = vsel %vm1509, %v1539, 0.0
    %v1548 = vadd.f32 %v1546, %v1547
    %v1549 = vsel %vm1509, %v1540, 0.0
    %v1550 = vadd.f32 %v1548, %v1549
    %v1551 = vsel %vm1515, %v1541, 0.0
    %v1552 = vadd.f32 %v1550, %v1551
    %v1553 = vsel %vm1509, %v1542, 0.0
    %v1554 = vadd.f32 %v1552, %v1553
    %v1555 = vsel %vm1509, %v1543, 0.0
    %v1556 = vadd.f32 %v1554, %v1555
    %v1557 = vsel %vm1509, %v1544, 0.0
    %v1558 = vadd.f32 %v1556, %v1557
    %v1559 = vsel %vm1515, %v1545, 0.0
    %v1560 = vadd.f32 %v1558, %v1559
    %1561 = vadd.xlane.f32.xlu0 %v1560
    %v1562 = vpop.xlane.xlu0 %1561
    %v1563 = vrot.slane %v1562, 4
    %v1564 = vadd.f32 %v1562, %v1563
    %v1565 = vrot.slane %v1564, 2
    %v1566 = vadd.f32 %v1564, %v1565
    %v1567 = vrot.slane %v1566, 1
    %v1568 = vadd.f32 %v1566, %v1567
    %s1569 = vtos %v1568
    %v1570 = vrcp.pop 1568.0
    %s1571 = vtos %v1570
    %s1572 = smul.f32 %s1569, %s1571
    %s1573 = smul.f32 %s1537, %s1537
    %s1574 = ssub.f32 %s1572, %s1573
    %s1575 = smax.f32 %s1574, 0.0
    %s1576 = sadd.f32 %s1575, 1e-05
    %v1577 = vstv %s1576
    %v1578 = vrsqrt.pop %v1577
    %s1579 = vtos %v1578
    %s1580 = sld [smem:[#allocation7]]
    %s1581 = smul.f32 %s1579, %s1580
    %s1582 = sld [smem:[#allocation8]]
    %s1583 = smul.f32 %s1537, %s1581
    %s1584 = ssub.f32 %s1582, %s1583
    %v1585 = vstv %s1581
    %v1586 = vmul.f32 %v1501, %v1585
    %v1587 = vmul.f32 %v1502, %v1585
    %v1588 = vmul.f32 %v1503, %v1585
    %v1589 = vmul.f32 %v1504, %v1585
    %v1590 = vmul.f32 %v1505, %v1585
    %v1591 = vmul.f32 %v1506, %v1585
    %v1592 = vmul.f32 %v1507, %v1585
    %v1593 = vmul.f32 %v1508, %v1585
    %v1594 = vstv %s1584
    %v1595 = vadd.f32 %v1586, %v1594
    %v1596 = vadd.f32 %v1587, %v1594
    %v1597 = vadd.f32 %v1588, %v1594
    %v1598 = vadd.f32 %v1589, %v1594
    %v1599 = vadd.f32 %v1590, %v1594
    %v1600 = vadd.f32 %v1591, %v1594
    %v1601 = vadd.f32 %v1592, %v1594
    %v1602 = vadd.f32 %v1593, %v1594
    %1611 = vrot.lane.b32.xlu0 %v1595, 127
    %v1612 = vpop.permute.xlu0 %1611
    %1613 = vrot.lane.b32.xlu0 %v1596, 127
    %v1614 = vpop.permute.xlu0 %1613
    %1615 = vrot.lane.b32.xlu0 %v1597, 127
    %v1616 = vpop.permute.xlu0 %1615
    %1617 = vrot.lane.b32.xlu0 %v1598, 127
    %v1618 = vpop.permute.xlu0 %1617
    %1619 = vrot.lane.b32.xlu0 %v1599, 127
    %v1620 = vpop.permute.xlu0 %1619
    %1621 = vrot.lane.b32.xlu0 %v1600, 127
    %v1622 = vpop.permute.xlu0 %1621
    %1623 = vrot.lane.b32.xlu0 %v1601, 127
    %v1624 = vpop.permute.xlu0 %1623
    %1625 = vrot.lane.b32.xlu0 %v1602, 127
    %v1626 = vpop.permute.xlu0 %1625
    %v1635 = vmax.f32 %v1595, %v1612
    %v1636 = vmax.f32 %v1596, %v1614
    %v1637 = vmax.f32 %v1597, %v1616
    %v1638 = vmax.f32 %v1598, %v1618
    %v1639 = vmax.f32 %v1599, %v1620
    %v1640 = vmax.f32 %v1600, %v1622
    %v1641 = vmax.f32 %v1601, %v1624
    %v1642 = vmax.f32 %v1602, %v1626
    %v1651 = vrot.slane %v1635, 1
    %v1652 = vrot.slane %v1636, 1
    %v1653 = vsel %vm461, %v1651, %v1652
    %v1654 = vrot.slane %v1637, 1
    %v1655 = vsel %vm461, %v1652, %v1654
    %v1656 = vrot.slane %v1638, 1
    %v1657 = vsel %vm461, %v1654, %v1656
    %v1658 = vrot.slane %v1639, 1
    %v1659 = vrot.slane %v1640, 1
    %v1660 = vsel %vm461, %v1658, %v1659
    %v1661 = vrot.slane %v1641, 1
    %v1662 = vsel %vm461, %v1659, %v1661
    %v1663 = vrot.slane %v1642, 1
    %v1664 = vsel %vm461, %v1661, %v1663
    %v1673 = vmax.f32 %v1635, %v1653
    %v1674 = vmax.f32 %v1636, %v1655
    %v1675 = vmax.f32 %v1637, %v1657
    %v1676 = vmax.f32 %v1638, %v1656
    %v1677 = vmax.f32 %v1639, %v1660
    %v1678 = vmax.f32 %v1640, %v1662
    %v1679 = vmax.f32 %v1641, %v1664
    %v1680 = vmax.f32 %v1642, %v1663
    %v1681 = vld [vmem:[%s5] sm:$0xff]
    %v1682 = vld [vmem:[%s5 + $0x8] sm:$0xff]
    %v1683 = vld [vmem:[%s5 + $0x10] sm:$0xff]
    %v1684 = vld [vmem:[%s5 + $0x18] sm:$0xf]
    %s1685 = scalar_lea.vmem %s5, 32
    %v1686 = vld [vmem:[%s1685] sm:$0xff]
    %v1687 = vld [vmem:[%s1685 + $0x8] sm:$0xff]
    %v1688 = vld [vmem:[%s1685 + $0x10] sm:$0xff]
    %v1689 = vld [vmem:[%s1685 + $0x18] sm:$0xf]
    %v1692 = vrot.slane %v1673, 2
    %v1693 = vrot.slane %v1677, 1
    %vm1694 = vcmask 1041409
    %v1695 = vsel %vm1694, %v1693, %v1692
    %v1696 = vsel %vm1509, %v1695, 0
    %vm1698 = vcmask 1043456
    %v1700 = vsel %vm1698, %v1689, 0
    %1702 = vmatprep.subr.mxu0 0.0
    %1703 = vmatpush1.msra.mxu0 %v1686
    %1704 = vmatprep.subr.mxu0 0.0
    %1705 = vmatpush1.msra.mxu0 %v1687
    %1706 = vmatprep.subr.mxu0 0.0
    %1707 = vmatpush1.msra.mxu0 %v1688
    %1708 = vmatprep.subr.mxu0 0.0
    %1709 = vmatpush1.msra.mxu0 %v1700
    %1710 = vmatprep.subr.mxu0 0.0
    %1711 = vmatpush1.msra.mxu0 0.0
    %1712 = vmatprep.subr.mxu0 0.0
    %1713 = vmatpush1.msra.mxu0 0.0
    %1714 = vmatprep.subr.mxu0 0.0
    %1715 = vmatpush1.msra.mxu0 0.0
    %1716 = vmatprep.subr.mxu0 0.0
    %1717 = vmatpush1.msra.mxu0 0.0
    %1718 = vmatprep.subr.mxu0 0.0
    %1719 = vmatpush1.msra.mxu0 0.0
    %1720 = vmatprep.subr.mxu0 0.0
    %1721 = vmatpush1.msra.mxu0 0.0
    %1722 = vmatprep.subr.mxu0 0.0
    %1723 = vmatpush1.msra.mxu0 0.0
    %1724 = vmatprep.subr.mxu0 0.0
    %1725 = vmatpush1.msra.mxu0 0.0
    %1726 = vmatprep.subr.mxu0 0.0
    %1727 = vmatpush1.msra.mxu0 0.0
    %1728 = vmatprep.subr.mxu0 0.0
    %1729 = vmatpush1.msra.mxu0 0.0
    %1730 = vmatprep.subr.mxu0 0.0
    %1731 = vmatpush1.msra.mxu0 0.0
    %1732 = vmatprep.subr.mxu0 0.0
    %1733 = vmatpush1.msra.mxu0 0.0
    %1734 = vmatprep.subr.mxu0 0.0
    %1735 = vmatpush1.msra.mxu0 0.0
    %1736 = vmatprep.subr.mxu0 0.0
    %1737 = vmatpush1.msra.mxu0 0.0
    %1738 = vmatprep.subr.mxu0 0.0
    %1739 = vmatpush1.msra.mxu0 0.0
    %1740 = vmatprep.subr.mxu0 0.0
    %1741 = vmatpush1.msra.mxu0 0.0
    %1742 = vmatprep.subr.mxu0 0.0
    %1743 = vmatpush1.msra.mxu0 0.0
    %1744 = vmatprep.subr.mxu0 0.0
    %1745 = vmatpush1.msra.mxu0 0.0
    %1746 = vmatprep.subr.mxu0 0.0
    %1747 = vmatpush1.msra.mxu0 0.0
    %1748 = vmatprep.subr.mxu0 0.0
    %1749 = vmatpush1.msra.mxu0 0.0
    %1750 = vmatprep.subr.mxu0 0.0
    %1751 = vmatpush1.msra.mxu0 0.0
    %1752 = vmatprep.subr.mxu0 0.0
    %1753 = vmatpush1.msra.mxu0 0.0
    %1754 = vmatprep.subr.mxu0 0.0
    %1755 = vmatpush1.msra.mxu0 0.0
    %1756 = vmatprep.subr.mxu0 0.0
    %1757 = vmatpush1.msra.mxu0 0.0
    %1758 = vmatprep.subr.mxu0 0.0
    %1759 = vmatpush1.msra.mxu0 0.0
    %1760 = vmatprep.subr.mxu0 0.0
    %1761 = vmatpush1.msra.mxu0 0.0
    %1762 = vmatprep.subr.mxu0 0.0
    %1763 = vmatpush1.msra.mxu0 0.0
    %1764 = vmatprep.subr.mxu0 0.0
    %1765 = vmatpush1.msra.mxu0 0.0
    %1766 = vmatprep.mubr.f32.mxu0 0.0
    %1767 = vmatmul.mubr.f32.gmra.mrb[0].mxu0 %v1696
    %v1768 = vpop.f32.mrb[0].mxu0
    %v1769 = vadd.f32 0.0, %v1768
    %v1770 = vpop.f32.mrb[0].mxu0
    %1771 = vdwg.mxu0
    %v1772 = vrot.slane %v1677, 7
    %v1773 = vsel %vm1694, %v1772, %v1673
    %v1774 = vsel %vm1509, %v1773, 0
    %v1777 = vsel %vm1698, %v1684, 0
    %1779 = vmatprep.subr.mxu0 0.0
    %1780 = vmatpush1.msra.mxu0 %v1681
    %1781 = vmatprep.subr.mxu0 0.0
    %1782 = vmatpush1.msra.mxu0 %v1682
    %1783 = vmatprep.subr.mxu0 0.0
    %1784 = vmatpush1.msra.mxu0 %v1683
    %1785 = vmatprep.subr.mxu0 0.0
    %1786 = vmatpush1.msra.mxu0 %v1777
    %1787 = vmatprep.subr.mxu0 0.0
    %1788 = vmatpush1.msra.mxu0 0.0
    %1789 = vmatprep.subr.mxu0 0.0
    %1790 = vmatpush1.msra.mxu0 0.0
    %1791 = vmatprep.subr.mxu0 0.0
    %1792 = vmatpush1.msra.mxu0 0.0
    %1793 = vmatprep.subr.mxu0 0.0
    %1794 = vmatpush1.msra.mxu0 0.0
    %1795 = vmatprep.subr.mxu0 0.0
    %1796 = vmatpush1.msra.mxu0 0.0
    %1797 = vmatprep.subr.mxu0 0.0
    %1798 = vmatpush1.msra.mxu0 0.0
    %1799 = vmatprep.subr.mxu0 0.0
    %1800 = vmatpush1.msra.mxu0 0.0
    %1801 = vmatprep.subr.mxu0 0.0
    %1802 = vmatpush1.msra.mxu0 0.0
    %1803 = vmatprep.subr.mxu0 0.0
    %1804 = vmatpush1.msra.mxu0 0.0
    %1805 = vmatprep.subr.mxu0 0.0
    %1806 = vmatpush1.msra.mxu0 0.0
    %1807 = vmatprep.subr.mxu0 0.0
    %1808 = vmatpush1.msra.mxu0 0.0
    %1809 = vmatprep.subr.mxu0 0.0
    %1810 = vmatpush1.msra.mxu0 0.0
    %1811 = vmatprep.subr.mxu0 0.0
    %1812 = vmatpush1.msra.mxu0 0.0
    %1813 = vmatprep.subr.mxu0 0.0
    %1814 = vmatpush1.msra.mxu0 0.0
    %1815 = vmatprep.subr.mxu0 0.0
    %1816 = vmatpush1.msra.mxu0 0.0
    %1817 = vmatprep.subr.mxu0 0.0
    %1818 = vmatpush1.msra.mxu0 0.0
    %1819 = vmatprep.subr.mxu0 0.0
    %1820 = vmatpush1.msra.mxu0 0.0
    %1821 = vmatprep.subr.mxu0 0.0
    %1822 = vmatpush1.msra.mxu0 0.0
    %1823 = vmatprep.subr.mxu0 0.0
    %1824 = vmatpush1.msra.mxu0 0.0
    %1825 = vmatprep.subr.mxu0 0.0
    %1826 = vmatpush1.msra.mxu0 0.0
    %1827 = vmatprep.subr.mxu0 0.0
    %1828 = vmatpush1.msra.mxu0 0.0
    %1829 = vmatprep.subr.mxu0 0.0
    %1830 = vmatpush1.msra.mxu0 0.0
    %1831 = vmatprep.subr.mxu0 0.0
    %1832 = vmatpush1.msra.mxu0 0.0
    %1833 = vmatprep.subr.mxu0 0.0
    %1834 = vmatpush1.msra.mxu0 0.0
    %1835 = vmatprep.subr.mxu0 0.0
    %1836 = vmatpush1.msra.mxu0 0.0
    %1837 = vmatprep.subr.mxu0 0.0
    %1838 = vmatpush1.msra.mxu0 0.0
    %1839 = vmatprep.subr.mxu0 0.0
    %1840 = vmatpush1.msra.mxu0 0.0
    %1841 = vmatprep.subr.mxu0 0.0
    %1842 = vmatpush1.msra.mxu0 0.0
    %1843 = vmatprep.mubr.f32.mxu0 0.0
    %1844 = vmatmul.mubr.f32.gmra.mrb[0].mxu0 %v1774
    %v1845 = vpop.f32.mrb[0].mxu0
    %v1846 = vadd.f32 %v1769, %v1845
    %v1847 = vpop.f32.mrb[0].mxu0
    %1848 = vdwg.mxu0
    %s1849 = scalar_lea.vmem %s5, 64
    %v1850 = vld [vmem:[%s1849] sm:$0xff]
    %v1851 = vld [vmem:[%s1849 + $0x8] sm:$0xff]
    %v1852 = vld [vmem:[%s1849 + $0x10] sm:$0xff]
    %v1853 = vld [vmem:[%s1849 + $0x18] sm:$0xf]
    %v1854 = vrot.slane %v1673, 4
    %v1855 = vrot.slane %v1677, 3
    %v1856 = vsel %vm1694, %v1855, %v1854
    %v1857 = vsel %vm1509, %v1856, 0
    %v1860 = vsel %vm1698, %v1853, 0
    %1862 = vmatprep.subr.mxu0 0.0
    %1863 = vmatpush1.msra.mxu0 %v1850
    %1864 = vmatprep.subr.mxu0 0.0
    %1865 = vmatpush1.msra.mxu0 %v1851
    %1866 = vmatprep.subr.mxu0 0.0
    %1867 = vmatpush1.msra.mxu0 %v1852
    %1868 = vmatprep.subr.mxu0 0.0
    %1869 = vmatpush1.msra.mxu0 %v1860
    %1870 = vmatprep.subr.mxu0 0.0
    %1871 = vmatpush1.msra.mxu0 0.0
    %1872 = vmatprep.subr.mxu0 0.0
    %1873 = vmatpush1.msra.mxu0 0.0
    %1874 = vmatprep.subr.mxu0 0.0
    %1875 = vmatpush1.msra.mxu0 0.0
    %1876 = vmatprep.subr.mxu0 0.0
    %1877 = vmatpush1.msra.mxu0 0.0
    %1878 = vmatprep.subr.mxu0 0.0
    %1879 = vmatpush1.msra.mxu0 0.0
    %1880 = vmatprep.subr.mxu0 0.0
    %1881 = vmatpush1.msra.mxu0 0.0
    %1882 = vmatprep.subr.mxu0 0.0
    %1883 = vmatpush1.msra.mxu0 0.0
    %1884 = vmatprep.subr.mxu0 0.0
    %1885 = vmatpush1.msra.mxu0 0.0
    %1886 = vmatprep.subr.mxu0 0.0
    %1887 = vmatpush1.msra.mxu0 0.0
    %1888 = vmatprep.subr.mxu0 0.0
    %1889 = vmatpush1.msra.mxu0 0.0
    %1890 = vmatprep.subr.mxu0 0.0
    %1891 = vmatpush1.msra.mxu0 0.0
    %1892 = vmatprep.subr.mxu0 0.0
    %1893 = vmatpush1.msra.mxu0 0.0
    %1894 = vmatprep.subr.mxu0 0.0
    %1895 = vmatpush1.msra.mxu0 0.0
    %1896 = vmatprep.subr.mxu0 0.0
    %1897 = vmatpush1.msra.mxu0 0.0
    %1898 = vmatprep.subr.mxu0 0.0
    %1899 = vmatpush1.msra.mxu0 0.0
    %1900 = vmatprep.subr.mxu0 0.0
    %1901 = vmatpush1.msra.mxu0 0.0
    %1902 = vmatprep.subr.mxu0 0.0
    %1903 = vmatpush1.msra.mxu0 0.0
    %1904 = vmatprep.subr.mxu0 0.0
    %1905 = vmatpush1.msra.mxu0 0.0
    %1906 = vmatprep.subr.mxu0 0.0
    %1907 = vmatpush1.msra.mxu0 0.0
    %1908 = vmatprep.subr.mxu0 0.0
    %1909 = vmatpush1.msra.mxu0 0.0
    %1910 = vmatprep.subr.mxu0 0.0
    %1911 = vmatpush1.msra.mxu0 0.0
    %1912 = vmatprep.subr.mxu0 0.0
    %1913 = vmatpush1.msra.mxu0 0.0
    %1914 = vmatprep.subr.mxu0 0.0
    %1915 = vmatpush1.msra.mxu0 0.0
    %1916 = vmatprep.subr.mxu0 0.0
    %1917 = vmatpush1.msra.mxu0 0.0
    %1918 = vmatprep.subr.mxu0 0.0
    %1919 = vmatpush1.msra.mxu0 0.0
    %1920 = vmatprep.subr.mxu0 0.0
    %1921 = vmatpush1.msra.mxu0 0.0
    %1922 = vmatprep.subr.mxu0 0.0
    %1923 = vmatpush1.msra.mxu0 0.0
    %1924 = vmatprep.subr.mxu0 0.0
    %1925 = vmatpush1.msra.mxu0 0.0
    %1926 = vmatprep.mubr.f32.mxu0 0.0
    %1927 = vmatmul.mubr.f32.gmra.mrb[0].mxu0 %v1857
    %v1928 = vpop.f32.mrb[0].mxu0
    %v1929 = vadd.f32 0.0, %v1928
    %v1930 = vpop.f32.mrb[0].mxu0
    %1931 = vdwg.mxu0
    %v1932 = vadd.f32 %v1846, %v1929
    %s1933 = scalar_lea.vmem %s5, 96
    %v1934 = vld [vmem:[%s1933] sm:$0xff]
    %v1935 = vld [vmem:[%s1933 + $0x8] sm:$0xff]
    %v1936 = vld [vmem:[%s1933 + $0x10] sm:$0xff]
    %v1937 = vld [vmem:[%s1933 + $0x18] sm:$0xf]
    %v1938 = vrot.slane %v1673, 6
    %v1939 = vrot.slane %v1677, 5
    %v1940 = vsel %vm1694, %v1939, %v1938
    %v1941 = vsel %vm1509, %v1940, 0
    %v1944 = vsel %vm1698, %v1937, 0
    %1946 = vmatprep.subr.mxu0 0.0
    %1947 = vmatpush1.msra.mxu0 %v1934
    %1948 = vmatprep.subr.mxu0 0.0
    %1949 = vmatpush1.msra.mxu0 %v1935
    %1950 = vmatprep.subr.mxu0 0.0
    %1951 = vmatpush1.msra.mxu0 %v1936
    %1952 = vmatprep.subr.mxu0 0.0
    %1953 = vmatpush1.msra.mxu0 %v1944
    %1954 = vmatprep.subr.mxu0 0.0
    %1955 = vmatpush1.msra.mxu0 0.0
    %1956 = vmatprep.subr.mxu0 0.0
    %1957 = vmatpush1.msra.mxu0 0.0
    %1958 = vmatprep.subr.mxu0 0.0
    %1959 = vmatpush1.msra.mxu0 0.0
    %1960 = vmatprep.subr.mxu0 0.0
    %1961 = vmatpush1.msra.mxu0 0.0
    %1962 = vmatprep.subr.mxu0 0.0
    %1963 = vmatpush1.msra.mxu0 0.0
    %1964 = vmatprep.subr.mxu0 0.0
    %1965 = vmatpush1.msra.mxu0 0.0
    %1966 = vmatprep.subr.mxu0 0.0
    %1967 = vmatpush1.msra.mxu0 0.0
    %1968 = vmatprep.subr.mxu0 0.0
    %1969 = vmatpush1.msra.mxu0 0.0
    %1970 = vmatprep.subr.mxu0 0.0
    %1971 = vmatpush1.msra.mxu0 0.0
    %1972 = vmatprep.subr.mxu0 0.0
    %1973 = vmatpush1.msra.mxu0 0.0
    %1974 = vmatprep.subr.mxu0 0.0
    %1975 = vmatpush1.msra.mxu0 0.0
    %1976 = vmatprep.subr.mxu0 0.0
    %1977 = vmatpush1.msra.mxu0 0.0
    %1978 = vmatprep.subr.mxu0 0.0
    %1979 = vmatpush1.msra.mxu0 0.0
    %1980 = vmatprep.subr.mxu0 0.0
    %1981 = vmatpush1.msra.mxu0 0.0
    %1982 = vmatprep.subr.mxu0 0.0
    %1983 = vmatpush1.msra.mxu0 0.0
    %1984 = vmatprep.subr.mxu0 0.0
    %1985 = vmatpush1.msra.mxu0 0.0
    %1986 = vmatprep.subr.mxu0 0.0
    %1987 = vmatpush1.msra.mxu0 0.0
    %1988 = vmatprep.subr.mxu0 0.0
    %1989 = vmatpush1.msra.mxu0 0.0
    %1990 = vmatprep.subr.mxu0 0.0
    %1991 = vmatpush1.msra.mxu0 0.0
    %1992 = vmatprep.subr.mxu0 0.0
    %1993 = vmatpush1.msra.mxu0 0.0
    %1994 = vmatprep.subr.mxu0 0.0
    %1995 = vmatpush1.msra.mxu0 0.0
    %1996 = vmatprep.subr.mxu0 0.0
    %1997 = vmatpush1.msra.mxu0 0.0
    %1998 = vmatprep.subr.mxu0 0.0
    %1999 = vmatpush1.msra.mxu0 0.0
    %2000 = vmatprep.subr.mxu0 0.0
    %2001 = vmatpush1.msra.mxu0 0.0
    %2002 = vmatprep.subr.mxu0 0.0
    %2003 = vmatpush1.msra.mxu0 0.0
    %2004 = vmatprep.subr.mxu0 0.0
    %2005 = vmatpush1.msra.mxu0 0.0
    %2006 = vmatprep.subr.mxu0 0.0
    %2007 = vmatpush1.msra.mxu0 0.0
    %2008 = vmatprep.subr.mxu0 0.0
    %2009 = vmatpush1.msra.mxu0 0.0
    %2010 = vmatprep.mubr.f32.mxu0 0.0
    %2011 = vmatmul.mubr.f32.gmra.mrb[0].mxu0 %v1941
    %v2012 = vpop.f32.mrb[0].mxu0
    %v2013 = vadd.f32 0.0, %v2012
    %v2014 = vpop.f32.mrb[0].mxu0
    %2015 = vdwg.mxu0
    %v2016 = vadd.f32 %v1932, %v2013
    %s2017 = scalar_lea.vmem %s5, 128
    %v2018 = vld [vmem:[%s2017] sm:$0xff]
    %v2019 = vld [vmem:[%s2017 + $0x8] sm:$0xff]
    %v2020 = vld [vmem:[%s2017 + $0x10] sm:$0xff]
    %v2021 = vld [vmem:[%s2017 + $0x18] sm:$0xf]
    %v2024 = vrot.slane %v1678, 7
    %v2025 = vsel %vm1694, %v2024, %v1674
    %v2026 = vsel %vm1509, %v2025, 0
    %v2029 = vsel %vm1698, %v2021, 0
    %2031 = vmatprep.subr.mxu0 0.0
    %2032 = vmatpush1.msra.mxu0 %v2018
    %2033 = vmatprep.subr.mxu0 0.0
    %2034 = vmatpush1.msra.mxu0 %v2019
    %2035 = vmatprep.subr.mxu0 0.0
    %2036 = vmatpush1.msra.mxu0 %v2020
    %2037 = vmatprep.subr.mxu0 0.0
    %2038 = vmatpush1.msra.mxu0 %v2029
    %2039 = vmatprep.subr.mxu0 0.0
    %2040 = vmatpush1.msra.mxu0 0.0
    %2041 = vmatprep.subr.mxu0 0.0
    %2042 = vmatpush1.msra.mxu0 0.0
    %2043 = vmatprep.subr.mxu0 0.0
    %2044 = vmatpush1.msra.mxu0 0.0
    %2045 = vmatprep.subr.mxu0 0.0
    %2046 = vmatpush1.msra.mxu0 0.0
    %2047 = vmatprep.subr.mxu0 0.0
    %2048 = vmatpush1.msra.mxu0 0.0
    %2049 = vmatprep.subr.mxu0 0.0
    %2050 = vmatpush1.msra.mxu0 0.0
    %2051 = vmatprep.subr.mxu0 0.0
    %2052 = vmatpush1.msra.mxu0 0.0
    %2053 = vmatprep.subr.mxu0 0.0
    %2054 = vmatpush1.msra.mxu0 0.0
    %2055 = vmatprep.subr.mxu0 0.0
    %2056 = vmatpush1.msra.mxu0 0.0
    %2057 = vmatprep.subr.mxu0 0.0
    %2058 = vmatpush1.msra.mxu0 0.0
    %2059 = vmatprep.subr.mxu0 0.0
    %2060 = vmatpush1.msra.mxu0 0.0
    %2061 = vmatprep.subr.mxu0 0.0
    %2062 = vmatpush1.msra.mxu0 0.0
    %2063 = vmatprep.subr.mxu0 0.0
    %2064 = vmatpush1.msra.mxu0 0.0
    %2065 = vmatprep.subr.mxu0 0.0
    %2066 = vmatpush1.msra.mxu0 0.0
    %2067 = vmatprep.subr.mxu0 0.0
    %2068 = vmatpush1.msra.mxu0 0.0
    %2069 = vmatprep.subr.mxu0 0.0
    %2070 = vmatpush1.msra.mxu0 0.0
    %2071 = vmatprep.subr.mxu0 0.0
    %2072 = vmatpush1.msra.mxu0 0.0
    %2073 = vmatprep.subr.mxu0 0.0
    %2074 = vmatpush1.msra.mxu0 0.0
    %2075 = vmatprep.subr.mxu0 0.0
    %2076 = vmatpush1.msra.mxu0 0.0
    %2077 = vmatprep.subr.mxu0 0.0
    %2078 = vmatpush1.msra.mxu0 0.0
    %2079 = vmatprep.subr.mxu0 0.0
    %2080 = vmatpush1.msra.mxu0 0.0
    %2081 = vmatprep.subr.mxu0 0.0
    %2082 = vmatpush1.msra.mxu0 0.0
    %2083 = vmatprep.subr.mxu0 0.0
    %2084 = vmatpush1.msra.mxu0 0.0
    %2085 = vmatprep.subr.mxu0 0.0
    %2086 = vmatpush1.msra.mxu0 0.0
    %2087 = vmatprep.subr.mxu0 0.0
    %2088 = vmatpush1.msra.mxu0 0.0
    %2089 = vmatprep.subr.mxu0 0.0
    %2090 = vmatpush1.msra.mxu0 0.0
    %2091 = vmatprep.subr.mxu0 0.0
    %2092 = vmatpush1.msra.mxu0 0.0
    %2093 = vmatprep.subr.mxu0 0.0
    %2094 = vmatpush1.msra.mxu0 0.0
    %2095 = vmatprep.mubr.f32.mxu0 0.0
    %2096 = vmatmul.mubr.f32.gmra.mrb[0].mxu0 %v2026
    %v2097 = vpop.f32.mrb[0].mxu0
    %v2098 = vadd.f32 0.0, %v2097
    %v2099 = vpop.f32.mrb[0].mxu0
    %2100 = vdwg.mxu0
    %v2101 = vadd.f32 %v2016, %v2098
    %s2102 = scalar_lea.vmem %s5, 160
    %v2103 = vld [vmem:[%s2102] sm:$0xff]
    %v2104 = vld [vmem:[%s2102 + $0x8] sm:$0xff]
    %v2105 = vld [vmem:[%s2102 + $0x10] sm:$0xff]
    %v2106 = vld [vmem:[%s2102 + $0x18] sm:$0xf]
    %v2107 = vrot.slane %v1674, 2
    %v2108 = vrot.slane %v1678, 1
    %v2109 = vsel %vm1694, %v2108, %v2107
    %v2110 = vsel %vm1509, %v2109, 0
    %v2113 = vsel %vm1698, %v2106, 0
    %2115 = vmatprep.subr.mxu0 0.0
    %2116 = vmatpush1.msra.mxu0 %v2103
    %2117 = vmatprep.subr.mxu0 0.0
    %2118 = vmatpush1.msra.mxu0 %v2104
    %2119 = vmatprep.subr.mxu0 0.0
    %2120 = vmatpush1.msra.mxu0 %v2105
    %2121 = vmatprep.subr.mxu0 0.0
    %2122 = vmatpush1.msra.mxu0 %v2113
    %2123 = vmatprep.subr.mxu0 0.0
    %2124 = vmatpush1.msra.mxu0 0.0
    %2125 = vmatprep.subr.mxu0 0.0
    %2126 = vmatpush1.msra.mxu0 0.0
    %2127 = vmatprep.subr.mxu0 0.0
    %2128 = vmatpush1.msra.mxu0 0.0
    %2129 = vmatprep.subr.mxu0 0.0
    %2130 = vmatpush1.msra.mxu0 0.0
    %2131 = vmatprep.subr.mxu0 0.0
    %2132 = vmatpush1.msra.mxu0 0.0
    %2133 = vmatprep.subr.mxu0 0.0
    %2134 = vmatpush1.msra.mxu0 0.0
    %2135 = vmatprep.subr.mxu0 0.0
    %2136 = vmatpush1.msra.mxu0 0.0
    %2137 = vmatprep.subr.mxu0 0.0
    %2138 = vmatpush1.msra.mxu0 0.0
    %2139 = vmatprep.subr.mxu0 0.0
    %2140 = vmatpush1.msra.mxu0 0.0
    %2141 = vmatprep.subr.mxu0 0.0
    %2142 = vmatpush1.msra.mxu0 0.0
    %2143 = vmatprep.subr.mxu0 0.0
    %2144 = vmatpush1.msra.mxu0 0.0
    %2145 = vmatprep.subr.mxu0 0.0
    %2146 = vmatpush1.msra.mxu0 0.0
    %2147 = vmatprep.subr.mxu0 0.0
    %2148 = vmatpush1.msra.mxu0 0.0
    %2149 = vmatprep.subr.mxu0 0.0
    %2150 = vmatpush1.msra.mxu0 0.0
    %2151 = vmatprep.subr.mxu0 0.0
    %2152 = vmatpush1.msra.mxu0 0.0
    %2153 = vmatprep.subr.mxu0 0.0
    %2154 = vmatpush1.msra.mxu0 0.0
    %2155 = vmatprep.subr.mxu0 0.0
    %2156 = vmatpush1.msra.mxu0 0.0
    %2157 = vmatprep.subr.mxu0 0.0
    %2158 = vmatpush1.msra.mxu0 0.0
    %2159 = vmatprep.subr.mxu0 0.0
    %2160 = vmatpush1.msra.mxu0 0.0
    %2161 = vmatprep.subr.mxu0 0.0
    %2162 = vmatpush1.msra.mxu0 0.0
    %2163 = vmatprep.subr.mxu0 0.0
    %2164 = vmatpush1.msra.mxu0 0.0
    %2165 = vmatprep.subr.mxu0 0.0
    %2166 = vmatpush1.msra.mxu0 0.0
    %2167 = vmatprep.subr.mxu0 0.0
    %2168 = vmatpush1.msra.mxu0 0.0
    %2169 = vmatprep.subr.mxu0 0.0
    %2170 = vmatpush1.msra.mxu0 0.0
    %2171 = vmatprep.subr.mxu0 0.0
    %2172 = vmatpush1.msra.mxu0 0.0
    %2173 = vmatprep.subr.mxu0 0.0
    %2174 = vmatpush1.msra.mxu0 0.0
    %2175 = vmatprep.subr.mxu0 0.0
    %2176 = vmatpush1.msra.mxu0 0.0
    %2177 = vmatprep.subr.mxu0 0.0
    %2178 = vmatpush1.msra.mxu0 0.0
    %2179 = vmatprep.mubr.f32.mxu0 0.0
    %2180 = vmatmul.mubr.f32.gmra.mrb[0].mxu0 %v2110
    %v2181 = vpop.f32.mrb[0].mxu0
    %v2182 = vadd.f32 0.0, %v2181
    %v2183 = vpop.f32.mrb[0].mxu0
    %2184 = vdwg.mxu0
    %v2185 = vadd.f32 %v2101, %v2182
    %s2186 = scalar_lea.vmem %s5, 192
    %v2187 = vld [vmem:[%s2186] sm:$0xff]
    %v2188 = vld [vmem:[%s2186 + $0x8] sm:$0xff]
    %v2189 = vld [vmem:[%s2186 + $0x10] sm:$0xff]
    %v2190 = vld [vmem:[%s2186 + $0x18] sm:$0xf]
    %v2191 = vrot.slane %v1674, 4
    %v2192 = vrot.slane %v1678, 3
    %v2193 = vsel %vm1694, %v2192, %v2191
    %v2194 = vsel %vm1509, %v2193, 0
    %v2197 = vsel %vm1698, %v2190, 0
    %2199 = vmatprep.subr.mxu0 0.0
    %2200 = vmatpush1.msra.mxu0 %v2187
    %2201 = vmatprep.subr.mxu0 0.0
    %2202 = vmatpush1.msra.mxu0 %v2188
    %2203 = vmatprep.subr.mxu0 0.0
    %2204 = vmatpush1.msra.mxu0 %v2189
    %2205 = vmatprep.subr.mxu0 0.0
    %2206 = vmatpush1.msra.mxu0 %v2197
    %2207 = vmatprep.subr.mxu0 0.0
    %2208 = vmatpush1.msra.mxu0 0.0
    %2209 = vmatprep.subr.mxu0 0.0
    %2210 = vmatpush1.msra.mxu0 0.0
    %2211 = vmatprep.subr.mxu0 0.0
    %2212 = vmatpush1.msra.mxu0 0.0
    %2213 = vmatprep.subr.mxu0 0.0
    %2214 = vmatpush1.msra.mxu0 0.0
    %2215 = vmatprep.subr.mxu0 0.0
    %2216 = vmatpush1.msra.mxu0 0.0
    %2217 = vmatprep.subr.mxu0 0.0
    %2218 = vmatpush1.msra.mxu0 0.0
    %2219 = vmatprep.subr.mxu0 0.0
    %2220 = vmatpush1.msra.mxu0 0.0
    %2221 = vmatprep.subr.mxu0 0.0
    %2222 = vmatpush1.msra.mxu0 0.0
    %2223 = vmatprep.subr.mxu0 0.0
    %2224 = vmatpush1.msra.mxu0 0.0
    %2225 = vmatprep.subr.mxu0 0.0
    %2226 = vmatpush1.msra.mxu0 0.0
    %2227 = vmatprep.subr.mxu0 0.0
    %2228 = vmatpush1.msra.mxu0 0.0
    %2229 = vmatprep.subr.mxu0 0.0
    %2230 = vmatpush1.msra.mxu0 0.0
    %2231 = vmatprep.subr.mxu0 0.0
    %2232 = vmatpush1.msra.mxu0 0.0
    %2233 = vmatprep.subr.mxu0 0.0
    %2234 = vmatpush1.msra.mxu0 0.0
    %2235 = vmatprep.subr.mxu0 0.0
    %2236 = vmatpush1.msra.mxu0 0.0
    %2237 = vmatprep.subr.mxu0 0.0
    %2238 = vmatpush1.msra.mxu0 0.0
    %2239 = vmatprep.subr.mxu0 0.0
    %2240 = vmatpush1.msra.mxu0 0.0
    %2241 = vmatprep.subr.mxu0 0.0
    %2242 = vmatpush1.msra.mxu0 0.0
    %2243 = vmatprep.subr.mxu0 0.0
    %2244 = vmatpush1.msra.mxu0 0.0
    %2245 = vmatprep.subr.mxu0 0.0
    %2246 = vmatpush1.msra.mxu0 0.0
    %2247 = vmatprep.subr.mxu0 0.0
    %2248 = vmatpush1.msra.mxu0 0.0
    %2249 = vmatprep.subr.mxu0 0.0
    %2250 = vmatpush1.msra.mxu0 0.0
    %2251 = vmatprep.subr.mxu0 0.0
    %2252 = vmatpush1.msra.mxu0 0.0
    %2253 = vmatprep.subr.mxu0 0.0
    %2254 = vmatpush1.msra.mxu0 0.0
    %2255 = vmatprep.subr.mxu0 0.0
    %2256 = vmatpush1.msra.mxu0 0.0
    %2257 = vmatprep.subr.mxu0 0.0
    %2258 = vmatpush1.msra.mxu0 0.0
    %2259 = vmatprep.subr.mxu0 0.0
    %2260 = vmatpush1.msra.mxu0 0.0
    %2261 = vmatprep.subr.mxu0 0.0
    %2262 = vmatpush1.msra.mxu0 0.0
    %2263 = vmatprep.mubr.f32.mxu0 0.0
    %2264 = vmatmul.mubr.f32.gmra.mrb[0].mxu0 %v2194
    %v2265 = vpop.f32.mrb[0].mxu0
    %v2266 = vadd.f32 0.0, %v2265
    %v2267 = vpop.f32.mrb[0].mxu0
    %2268 = vdwg.mxu0
    %v2269 = vadd.f32 %v2185, %v2266
    %s2270 = scalar_lea.vmem %s5, 224
    %v2271 = vld [vmem:[%s2270] sm:$0xff]
    %v2272 = vld [vmem:[%s2270 + $0x8] sm:$0xff]
    %v2273 = vld [vmem:[%s2270 + $0x10] sm:$0xff]
    %v2274 = vld [vmem:[%s2270 + $0x18] sm:$0xf]
    %v2275 = vrot.slane %v1674, 6
    %v2276 = vrot.slane %v1678, 5
    %v2277 = vsel %vm1694, %v2276, %v2275
    %v2278 = vsel %vm1509, %v2277, 0
    %v2281 = vsel %vm1698, %v2274, 0
    %2283 = vmatprep.subr.mxu0 0.0
    %2284 = vmatpush1.msra.mxu0 %v2271
    %2285 = vmatprep.subr.mxu0 0.0
    %2286 = vmatpush1.msra.mxu0 %v2272
    %2287 = vmatprep.subr.mxu0 0.0
    %2288 = vmatpush1.msra.mxu0 %v2273
    %2289 = vmatprep.subr.mxu0 0.0
    %2290 = vmatpush1.msra.mxu0 %v2281
    %2291 = vmatprep.subr.mxu0 0.0
    %2292 = vmatpush1.msra.mxu0 0.0
    %2293 = vmatprep.subr.mxu0 0.0
    %2294 = vmatpush1.msra.mxu0 0.0
    %2295 = vmatprep.subr.mxu0 0.0
    %2296 = vmatpush1.msra.mxu0 0.0
    %2297 = vmatprep.subr.mxu0 0.0
    %2298 = vmatpush1.msra.mxu0 0.0
    %2299 = vmatprep.subr.mxu0 0.0
    %2300 = vmatpush1.msra.mxu0 0.0
    %2301 = vmatprep.subr.mxu0 0.0
    %2302 = vmatpush1.msra.mxu0 0.0
    %2303 = vmatprep.subr.mxu0 0.0
    %2304 = vmatpush1.msra.mxu0 0.0
    %2305 = vmatprep.subr.mxu0 0.0
    %2306 = vmatpush1.msra.mxu0 0.0
    %2307 = vmatprep.subr.mxu0 0.0
    %2308 = vmatpush1.msra.mxu0 0.0
    %2309 = vmatprep.subr.mxu0 0.0
    %2310 = vmatpush1.msra.mxu0 0.0
    %2311 = vmatprep.subr.mxu0 0.0
    %2312 = vmatpush1.msra.mxu0 0.0
    %2313 = vmatprep.subr.mxu0 0.0
    %2314 = vmatpush1.msra.mxu0 0.0
    %2315 = vmatprep.subr.mxu0 0.0
    %2316 = vmatpush1.msra.mxu0 0.0
    %2317 = vmatprep.subr.mxu0 0.0
    %2318 = vmatpush1.msra.mxu0 0.0
    %2319 = vmatprep.subr.mxu0 0.0
    %2320 = vmatpush1.msra.mxu0 0.0
    %2321 = vmatprep.subr.mxu0 0.0
    %2322 = vmatpush1.msra.mxu0 0.0
    %2323 = vmatprep.subr.mxu0 0.0
    %2324 = vmatpush1.msra.mxu0 0.0
    %2325 = vmatprep.subr.mxu0 0.0
    %2326 = vmatpush1.msra.mxu0 0.0
    %2327 = vmatprep.subr.mxu0 0.0
    %2328 = vmatpush1.msra.mxu0 0.0
    %2329 = vmatprep.subr.mxu0 0.0
    %2330 = vmatpush1.msra.mxu0 0.0
    %2331 = vmatprep.subr.mxu0 0.0
    %2332 = vmatpush1.msra.mxu0 0.0
    %2333 = vmatprep.subr.mxu0 0.0
    %2334 = vmatpush1.msra.mxu0 0.0
    %2335 = vmatprep.subr.mxu0 0.0
    %2336 = vmatpush1.msra.mxu0 0.0
    %2337 = vmatprep.subr.mxu0 0.0
    %2338 = vmatpush1.msra.mxu0 0.0
    %2339 = vmatprep.subr.mxu0 0.0
    %2340 = vmatpush1.msra.mxu0 0.0
    %2341 = vmatprep.subr.mxu0 0.0
    %2342 = vmatpush1.msra.mxu0 0.0
    %2343 = vmatprep.subr.mxu0 0.0
    %2344 = vmatpush1.msra.mxu0 0.0
    %2345 = vmatprep.subr.mxu0 0.0
    %2346 = vmatpush1.msra.mxu0 0.0
    %2347 = vmatprep.mubr.f32.mxu0 0.0
    %2348 = vmatmul.mubr.f32.gmra.mrb[0].mxu0 %v2278
    %v2349 = vpop.f32.mrb[0].mxu0
    %v2350 = vadd.f32 0.0, %v2349
    %v2351 = vpop.f32.mrb[0].mxu0
    %2352 = vdwg.mxu0
    %v2353 = vadd.f32 %v2269, %v2350
    %s2354 = scalar_lea.vmem %s5, 256
    %v2355 = vld [vmem:[%s2354] sm:$0xff]
    %v2356 = vld [vmem:[%s2354 + $0x8] sm:$0xff]
    %v2357 = vld [vmem:[%s2354 + $0x10] sm:$0xff]
    %v2358 = vld [vmem:[%s2354 + $0x18] sm:$0xf]
    %v2361 = vrot.slane %v1679, 7
    %v2362 = vsel %vm1694, %v2361, %v1675
    %v2363 = vsel %vm1509, %v2362, 0
    %v2366 = vsel %vm1698, %v2358, 0
    %2368 = vmatprep.subr.mxu0 0.0
    %2369 = vmatpush1.msra.mxu0 %v2355
    %2370 = vmatprep.subr.mxu0 0.0
    %2371 = vmatpush1.msra.mxu0 %v2356
    %2372 = vmatprep.subr.mxu0 0.0
    %2373 = vmatpush1.msra.mxu0 %v2357
    %2374 = vmatprep.subr.mxu0 0.0
    %2375 = vmatpush1.msra.mxu0 %v2366
    %2376 = vmatprep.subr.mxu0 0.0
    %2377 = vmatpush1.msra.mxu0 0.0
    %2378 = vmatprep.subr.mxu0 0.0
    %2379 = vmatpush1.msra.mxu0 0.0
    %2380 = vmatprep.subr.mxu0 0.0
    %2381 = vmatpush1.msra.mxu0 0.0
    %2382 = vmatprep.subr.mxu0 0.0
    %2383 = vmatpush1.msra.mxu0 0.0
    %2384 = vmatprep.subr.mxu0 0.0
    %2385 = vmatpush1.msra.mxu0 0.0
    %2386 = vmatprep.subr.mxu0 0.0
    %2387 = vmatpush1.msra.mxu0 0.0
    %2388 = vmatprep.subr.mxu0 0.0
    %2389 = vmatpush1.msra.mxu0 0.0
    %2390 = vmatprep.subr.mxu0 0.0
    %2391 = vmatpush1.msra.mxu0 0.0
    %2392 = vmatprep.subr.mxu0 0.0
    %2393 = vmatpush1.msra.mxu0 0.0
    %2394 = vmatprep.subr.mxu0 0.0
    %2395 = vmatpush1.msra.mxu0 0.0
    %2396 = vmatprep.subr.mxu0 0.0
    %2397 = vmatpush1.msra.mxu0 0.0
    %2398 = vmatprep.subr.mxu0 0.0
    %2399 = vmatpush1.msra.mxu0 0.0
    %2400 = vmatprep.subr.mxu0 0.0
    %2401 = vmatpush1.msra.mxu0 0.0
    %2402 = vmatprep.subr.mxu0 0.0
    %2403 = vmatpush1.msra.mxu0 0.0
    %2404 = vmatprep.subr.mxu0 0.0
    %2405 = vmatpush1.msra.mxu0 0.0
    %2406 = vmatprep.subr.mxu0 0.0
    %2407 = vmatpush1.msra.mxu0 0.0
    %2408 = vmatprep.subr.mxu0 0.0
    %2409 = vmatpush1.msra.mxu0 0.0
    %2410 = vmatprep.subr.mxu0 0.0
    %2411 = vmatpush1.msra.mxu0 0.0
    %2412 = vmatprep.subr.mxu0 0.0
    %2413 = vmatpush1.msra.mxu0 0.0
    %2414 = vmatprep.subr.mxu0 0.0
    %2415 = vmatpush1.msra.mxu0 0.0
    %2416 = vmatprep.subr.mxu0 0.0
    %2417 = vmatpush1.msra.mxu0 0.0
    %2418 = vmatprep.subr.mxu0 0.0
    %2419 = vmatpush1.msra.mxu0 0.0
    %2420 = vmatprep.subr.mxu0 0.0
    %2421 = vmatpush1.msra.mxu0 0.0
    %2422 = vmatprep.subr.mxu0 0.0
    %2423 = vmatpush1.msra.mxu0 0.0
    %2424 = vmatprep.subr.mxu0 0.0
    %2425 = vmatpush1.msra.mxu0 0.0
    %2426 = vmatprep.subr.mxu0 0.0
    %2427 = vmatpush1.msra.mxu0 0.0
    %2428 = vmatprep.subr.mxu0 0.0
    %2429 = vmatpush1.msra.mxu0 0.0
    %2430 = vmatprep.subr.mxu0 0.0
    %2431 = vmatpush1.msra.mxu0 0.0
    %2432 = vmatprep.mubr.f32.mxu0 0.0
    %2433 = vmatmul.mubr.f32.gmra.mrb[0].mxu0 %v2363
    %v2434 = vpop.f32.mrb[0].mxu0
    %v2435 = vadd.f32 0.0, %v2434
    %v2436 = vpop.f32.mrb[0].mxu0
    %2437 = vdwg.mxu0
    %v2438 = vadd.f32 %v2353, %v2435
    %s2439 = scalar_lea.vmem %s5, 288
    %v2440 = vld [vmem:[%s2439] sm:$0xff]
    %v2441 = vld [vmem:[%s2439 + $0x8] sm:$0xff]
    %v2442 = vld [vmem:[%s2439 + $0x10] sm:$0xff]
    %v2443 = vld [vmem:[%s2439 + $0x18] sm:$0xf]
    %v2444 = vrot.slane %v1675, 2
    %v2445 = vrot.slane %v1679, 1
    %v2446 = vsel %vm1694, %v2445, %v2444
    %v2447 = vsel %vm1509, %v2446, 0
    %v2450 = vsel %vm1698, %v2443, 0
    %2452 = vmatprep.subr.mxu0 0.0
    %2453 = vmatpush1.msra.mxu0 %v2440
    %2454 = vmatprep.subr.mxu0 0.0
    %2455 = vmatpush1.msra.mxu0 %v2441
    %2456 = vmatprep.subr.mxu0 0.0
    %2457 = vmatpush1.msra.mxu0 %v2442
    %2458 = vmatprep.subr.mxu0 0.0
    %2459 = vmatpush1.msra.mxu0 %v2450
    %2460 = vmatprep.subr.mxu0 0.0
    %2461 = vmatpush1.msra.mxu0 0.0
    %2462 = vmatprep.subr.mxu0 0.0
    %2463 = vmatpush1.msra.mxu0 0.0
    %2464 = vmatprep.subr.mxu0 0.0
    %2465 = vmatpush1.msra.mxu0 0.0
    %2466 = vmatprep.subr.mxu0 0.0
    %2467 = vmatpush1.msra.mxu0 0.0
    %2468 = vmatprep.subr.mxu0 0.0
    %2469 = vmatpush1.msra.mxu0 0.0
    %2470 = vmatprep.subr.mxu0 0.0
    %2471 = vmatpush1.msra.mxu0 0.0
    %2472 = vmatprep.subr.mxu0 0.0
    %2473 = vmatpush1.msra.mxu0 0.0
    %2474 = vmatprep.subr.mxu0 0.0
    %2475 = vmatpush1.msra.mxu0 0.0
    %2476 = vmatprep.subr.mxu0 0.0
    %2477 = vmatpush1.msra.mxu0 0.0
    %2478 = vmatprep.subr.mxu0 0.0
    %2479 = vmatpush1.msra.mxu0 0.0
    %2480 = vmatprep.subr.mxu0 0.0
    %2481 = vmatpush1.msra.mxu0 0.0
    %2482 = vmatprep.subr.mxu0 0.0
    %2483 = vmatpush1.msra.mxu0 0.0
    %2484 = vmatprep.subr.mxu0 0.0
    %2485 = vmatpush1.msra.mxu0 0.0
    %2486 = vmatprep.subr.mxu0 0.0
    %2487 = vmatpush1.msra.mxu0 0.0
    %2488 = vmatprep.subr.mxu0 0.0
    %2489 = vmatpush1.msra.mxu0 0.0
    %2490 = vmatprep.subr.mxu0 0.0
    %2491 = vmatpush1.msra.mxu0 0.0
    %2492 = vmatprep.subr.mxu0 0.0
    %2493 = vmatpush1.msra.mxu0 0.0
    %2494 = vmatprep.subr.mxu0 0.0
    %2495 = vmatpush1.msra.mxu0 0.0
    %2496 = vmatprep.subr.mxu0 0.0
    %2497 = vmatpush1.msra.mxu0 0.0
    %2498 = vmatprep.subr.mxu0 0.0
    %2499 = vmatpush1.msra.mxu0 0.0
    %2500 = vmatprep.subr.mxu0 0.0
    %2501 = vmatpush1.msra.mxu0 0.0
    %2502 = vmatprep.subr.mxu0 0.0
    %2503 = vmatpush1.msra.mxu0 0.0
    %2504 = vmatprep.subr.mxu0 0.0
    %2505 = vmatpush1.msra.mxu0 0.0
    %2506 = vmatprep.subr.mxu0 0.0
    %2507 = vmatpush1.msra.mxu0 0.0
    %2508 = vmatprep.subr.mxu0 0.0
    %2509 = vmatpush1.msra.mxu0 0.0
    %2510 = vmatprep.subr.mxu0 0.0
    %2511 = vmatpush1.msra.mxu0 0.0
    %2512 = vmatprep.subr.mxu0 0.0
    %2513 = vmatpush1.msra.mxu0 0.0
    %2514 = vmatprep.subr.mxu0 0.0
    %2515 = vmatpush1.msra.mxu0 0.0
    %2516 = vmatprep.mubr.f32.mxu0 0.0
    %2517 = vmatmul.mubr.f32.gmra.mrb[0].mxu0 %v2447
    %v2518 = vpop.f32.mrb[0].mxu0
    %v2519 = vadd.f32 0.0, %v2518
    %v2520 = vpop.f32.mrb[0].mxu0
    %2521 = vdwg.mxu0
    %v2522 = vadd.f32 %v2438, %v2519
    %s2523 = scalar_lea.vmem %s5, 320
    %v2524 = vld [vmem:[%s2523] sm:$0xff]
    %v2525 = vld [vmem:[%s2523 + $0x8] sm:$0xff]
    %v2526 = vld [vmem:[%s2523 + $0x10] sm:$0xff]
    %v2527 = vld [vmem:[%s2523 + $0x18] sm:$0xf]
    %v2528 = vrot.slane %v1675, 4
    %v2529 = vrot.slane %v1679, 3
    %v2530 = vsel %vm1694, %v2529, %v2528
    %v2531 = vsel %vm1509, %v2530, 0
    %v2534 = vsel %vm1698, %v2527, 0
    %2536 = vmatprep.subr.mxu0 0.0
    %2537 = vmatpush1.msra.mxu0 %v2524
    %2538 = vmatprep.subr.mxu0 0.0
    %2539 = vmatpush1.msra.mxu0 %v2525
    %2540 = vmatprep.subr.mxu0 0.0
    %2541 = vmatpush1.msra.mxu0 %v2526
    %2542 = vmatprep.subr.mxu0 0.0
    %2543 = vmatpush1.msra.mxu0 %v2534
    %2544 = vmatprep.subr.mxu0 0.0
    %2545 = vmatpush1.msra.mxu0 0.0
    %2546 = vmatprep.subr.mxu0 0.0
    %2547 = vmatpush1.msra.mxu0 0.0
    %2548 = vmatprep.subr.mxu0 0.0
    %2549 = vmatpush1.msra.mxu0 0.0
    %2550 = vmatprep.subr.mxu0 0.0
    %2551 = vmatpush1.msra.mxu0 0.0
    %2552 = vmatprep.subr.mxu0 0.0
    %2553 = vmatpush1.msra.mxu0 0.0
    %2554 = vmatprep.subr.mxu0 0.0
    %2555 = vmatpush1.msra.mxu0 0.0
    %2556 = vmatprep.subr.mxu0 0.0
    %2557 = vmatpush1.msra.mxu0 0.0
    %2558 = vmatprep.subr.mxu0 0.0
    %2559 = vmatpush1.msra.mxu0 0.0
    %2560 = vmatprep.subr.mxu0 0.0
    %2561 = vmatpush1.msra.mxu0 0.0
    %2562 = vmatprep.subr.mxu0 0.0
    %2563 = vmatpush1.msra.mxu0 0.0
    %2564 = vmatprep.subr.mxu0 0.0
    %2565 = vmatpush1.msra.mxu0 0.0
    %2566 = vmatprep.subr.mxu0 0.0
    %2567 = vmatpush1.msra.mxu0 0.0
    %2568 = vmatprep.subr.mxu0 0.0
    %2569 = vmatpush1.msra.mxu0 0.0
    %2570 = vmatprep.subr.mxu0 0.0
    %2571 = vmatpush1.msra.mxu0 0.0
    %2572 = vmatprep.subr.mxu0 0.0
    %2573 = vmatpush1.msra.mxu0 0.0
    %2574 = vmatprep.subr.mxu0 0.0
    %2575 = vmatpush1.msra.mxu0 0.0
    %2576 = vmatprep.subr.mxu0 0.0
    %2577 = vmatpush1.msra.mxu0 0.0
    %2578 = vmatprep.subr.mxu0 0.0
    %2579 = vmatpush1.msra.mxu0 0.0
    %2580 = vmatprep.subr.mxu0 0.0
    %2581 = vmatpush1.msra.mxu0 0.0
    %2582 = vmatprep.subr.mxu0 0.0
    %2583 = vmatpush1.msra.mxu0 0.0
    %2584 = vmatprep.subr.mxu0 0.0
    %2585 = vmatpush1.msra.mxu0 0.0
    %2586 = vmatprep.subr.mxu0 0.0
    %2587 = vmatpush1.msra.mxu0 0.0
    %2588 = vmatprep.subr.mxu0 0.0
    %2589 = vmatpush1.msra.mxu0 0.0
    %2590 = vmatprep.subr.mxu0 0.0
    %2591 = vmatpush1.msra.mxu0 0.0
    %2592 = vmatprep.subr.mxu0 0.0
    %2593 = vmatpush1.msra.mxu0 0.0
    %2594 = vmatprep.subr.mxu0 0.0
    %2595 = vmatpush1.msra.mxu0 0.0
    %2596 = vmatprep.subr.mxu0 0.0
    %2597 = vmatpush1.msra.mxu0 0.0
    %2598 = vmatprep.subr.mxu0 0.0
    %2599 = vmatpush1.msra.mxu0 0.0
    %2600 = vmatprep.mubr.f32.mxu0 0.0
    %2601 = vmatmul.mubr.f32.gmra.mrb[0].mxu0 %v2531
    %v2602 = vpop.f32.mrb[0].mxu0
    %v2603 = vadd.f32 0.0, %v2602
    %v2604 = vpop.f32.mrb[0].mxu0
    %2605 = vdwg.mxu0
    %v2606 = vadd.f32 %v2522, %v2603
    %s2607 = scalar_lea.vmem %s5, 352
    %v2608 = vld [vmem:[%s2607] sm:$0xff]
    %v2609 = vld [vmem:[%s2607 + $0x8] sm:$0xff]
    %v2610 = vld [vmem:[%s2607 + $0x10] sm:$0xff]
    %v2611 = vld [vmem:[%s2607 + $0x18] sm:$0xf]
    %v2612 = vrot.slane %v1675, 6
    %v2613 = vrot.slane %v1679, 5
    %v2614 = vsel %vm1694, %v2613, %v2612
    %v2615 = vsel %vm1509, %v2614, 0
    %v2618 = vsel %vm1698, %v2611, 0
    %2620 = vmatprep.subr.mxu0 0.0
    %2621 = vmatpush1.msra.mxu0 %v2608
    %2622 = vmatprep.subr.mxu0 0.0
    %2623 = vmatpush1.msra.mxu0 %v2609
    %2624 = vmatprep.subr.mxu0 0.0
    %2625 = vmatpush1.msra.mxu0 %v2610
    %2626 = vmatprep.subr.mxu0 0.0
    %2627 = vmatpush1.msra.mxu0 %v2618
    %2628 = vmatprep.subr.mxu0 0.0
    %2629 = vmatpush1.msra.mxu0 0.0
    %2630 = vmatprep.subr.mxu0 0.0
    %2631 = vmatpush1.msra.mxu0 0.0
    %2632 = vmatprep.subr.mxu0 0.0
    %2633 = vmatpush1.msra.mxu0 0.0
    %2634 = vmatprep.subr.mxu0 0.0
    %2635 = vmatpush1.msra.mxu0 0.0
    %2636 = vmatprep.subr.mxu0 0.0
    %2637 = vmatpush1.msra.mxu0 0.0
    %2638 = vmatprep.subr.mxu0 0.0
    %2639 = vmatpush1.msra.mxu0 0.0
    %2640 = vmatprep.subr.mxu0 0.0
    %2641 = vmatpush1.msra.mxu0 0.0
    %2642 = vmatprep.subr.mxu0 0.0
    %2643 = vmatpush1.msra.mxu0 0.0
    %2644 = vmatprep.subr.mxu0 0.0
    %2645 = vmatpush1.msra.mxu0 0.0
    %2646 = vmatprep.subr.mxu0 0.0
    %2647 = vmatpush1.msra.mxu0 0.0
    %2648 = vmatprep.subr.mxu0 0.0
    %2649 = vmatpush1.msra.mxu0 0.0
    %2650 = vmatprep.subr.mxu0 0.0
    %2651 = vmatpush1.msra.mxu0 0.0
    %2652 = vmatprep.subr.mxu0 0.0
    %2653 = vmatpush1.msra.mxu0 0.0
    %2654 = vmatprep.subr.mxu0 0.0
    %2655 = vmatpush1.msra.mxu0 0.0
    %2656 = vmatprep.subr.mxu0 0.0
    %2657 = vmatpush1.msra.mxu0 0.0
    %2658 = vmatprep.subr.mxu0 0.0
    %2659 = vmatpush1.msra.mxu0 0.0
    %2660 = vmatprep.subr.mxu0 0.0
    %2661 = vmatpush1.msra.mxu0 0.0
    %2662 = vmatprep.subr.mxu0 0.0
    %2663 = vmatpush1.msra.mxu0 0.0
    %2664 = vmatprep.subr.mxu0 0.0
    %2665 = vmatpush1.msra.mxu0 0.0
    %2666 = vmatprep.subr.mxu0 0.0
    %2667 = vmatpush1.msra.mxu0 0.0
    %2668 = vmatprep.subr.mxu0 0.0
    %2669 = vmatpush1.msra.mxu0 0.0
    %2670 = vmatprep.subr.mxu0 0.0
    %2671 = vmatpush1.msra.mxu0 0.0
    %2672 = vmatprep.subr.mxu0 0.0
    %2673 = vmatpush1.msra.mxu0 0.0
    %2674 = vmatprep.subr.mxu0 0.0
    %2675 = vmatpush1.msra.mxu0 0.0
    %2676 = vmatprep.subr.mxu0 0.0
    %2677 = vmatpush1.msra.mxu0 0.0
    %2678 = vmatprep.subr.mxu0 0.0
    %2679 = vmatpush1.msra.mxu0 0.0
    %2680 = vmatprep.subr.mxu0 0.0
    %2681 = vmatpush1.msra.mxu0 0.0
    %2682 = vmatprep.subr.mxu0 0.0
    %2683 = vmatpush1.msra.mxu0 0.0
    %2684 = vmatprep.mubr.f32.mxu0 0.0
    %2685 = vmatmul.mubr.f32.gmra.mrb[0].mxu0 %v2615
    %v2686 = vpop.f32.mrb[0].mxu0
    %v2687 = vadd.f32 0.0, %v2686
    %v2688 = vpop.f32.mrb[0].mxu0
    %2689 = vdwg.mxu0
    %v2690 = vadd.f32 %v2606, %v2687
    %s2691 = scalar_lea.vmem %s5, 384
    %v2692 = vld [vmem:[%s2691] sm:$0xff]
    %v2693 = vld [vmem:[%s2691 + $0x8] sm:$0xff]
    %v2694 = vld [vmem:[%s2691 + $0x10] sm:$0xff]
    %v2695 = vld [vmem:[%s2691 + $0x18] sm:$0xf]
    %v2698 = vrot.slane %v1680, 7
    %v2699 = vsel %vm1694, %v2698, %v1676
    %v2700 = vsel %vm1509, %v2699, 0
    %v2703 = vsel %vm1698, %v2695, 0
    %2705 = vmatprep.subr.mxu0 0.0
    %2706 = vmatpush1.msra.mxu0 %v2692
    %2707 = vmatprep.subr.mxu0 0.0
    %2708 = vmatpush1.msra.mxu0 %v2693
    %2709 = vmatprep.subr.mxu0 0.0
    %2710 = vmatpush1.msra.mxu0 %v2694
    %2711 = vmatprep.subr.mxu0 0.0
    %2712 = vmatpush1.msra.mxu0 %v2703
    %2713 = vmatprep.subr.mxu0 0.0
    %2714 = vmatpush1.msra.mxu0 0.0
    %2715 = vmatprep.subr.mxu0 0.0
    %2716 = vmatpush1.msra.mxu0 0.0
    %2717 = vmatprep.subr.mxu0 0.0
    %2718 = vmatpush1.msra.mxu0 0.0
    %2719 = vmatprep.subr.mxu0 0.0
    %2720 = vmatpush1.msra.mxu0 0.0
    %2721 = vmatprep.subr.mxu0 0.0
    %2722 = vmatpush1.msra.mxu0 0.0
    %2723 = vmatprep.subr.mxu0 0.0
    %2724 = vmatpush1.msra.mxu0 0.0
    %2725 = vmatprep.subr.mxu0 0.0
    %2726 = vmatpush1.msra.mxu0 0.0
    %2727 = vmatprep.subr.mxu0 0.0
    %2728 = vmatpush1.msra.mxu0 0.0
    %2729 = vmatprep.subr.mxu0 0.0
    %2730 = vmatpush1.msra.mxu0 0.0
    %2731 = vmatprep.subr.mxu0 0.0
    %2732 = vmatpush1.msra.mxu0 0.0
    %2733 = vmatprep.subr.mxu0 0.0
    %2734 = vmatpush1.msra.mxu0 0.0
    %2735 = vmatprep.subr.mxu0 0.0
    %2736 = vmatpush1.msra.mxu0 0.0
    %2737 = vmatprep.subr.mxu0 0.0
    %2738 = vmatpush1.msra.mxu0 0.0
    %2739 = vmatprep.subr.mxu0 0.0
    %2740 = vmatpush1.msra.mxu0 0.0
    %2741 = vmatprep.subr.mxu0 0.0
    %2742 = vmatpush1.msra.mxu0 0.0
    %2743 = vmatprep.subr.mxu0 0.0
    %2744 = vmatpush1.msra.mxu0 0.0
    %2745 = vmatprep.subr.mxu0 0.0
    %2746 = vmatpush1.msra.mxu0 0.0
    %2747 = vmatprep.subr.mxu0 0.0
    %2748 = vmatpush1.msra.mxu0 0.0
    %2749 = vmatprep.subr.mxu0 0.0
    %2750 = vmatpush1.msra.mxu0 0.0
    %2751 = vmatprep.subr.mxu0 0.0
    %2752 = vmatpush1.msra.mxu0 0.0
    %2753 = vmatprep.subr.mxu0 0.0
    %2754 = vmatpush1.msra.mxu0 0.0
    %2755 = vmatprep.subr.mxu0 0.0
    %2756 = vmatpush1.msra.mxu0 0.0
    %2757 = vmatprep.subr.mxu0 0.0
    %2758 = vmatpush1.msra.mxu0 0.0
    %2759 = vmatprep.subr.mxu0 0.0
    %2760 = vmatpush1.msra.mxu0 0.0
    %2761 = vmatprep.subr.mxu0 0.0
    %2762 = vmatpush1.msra.mxu0 0.0
    %2763 = vmatprep.subr.mxu0 0.0
    %2764 = vmatpush1.msra.mxu0 0.0
    %2765 = vmatprep.subr.mxu0 0.0
    %2766 = vmatpush1.msra.mxu0 0.0
    %2767 = vmatprep.subr.mxu0 0.0
    %2768 = vmatpush1.msra.mxu0 0.0
    %2769 = vmatprep.mubr.f32.mxu0 0.0
    %2770 = vmatmul.mubr.f32.gmra.mrb[0].mxu0 %v2700
    %v2771 = vpop.f32.mrb[0].mxu0
    %v2772 = vadd.f32 0.0, %v2771
    %v2773 = vpop.f32.mrb[0].mxu0
    %2774 = vdwg.mxu0
    %v2775 = vadd.f32 %v2690, %v2772
    %s2776 = scalar_lea.vmem %s5, 416
    %v2777 = vld [vmem:[%s2776] sm:$0xff]
    %v2778 = vld [vmem:[%s2776 + $0x8] sm:$0xff]
    %v2779 = vld [vmem:[%s2776 + $0x10] sm:$0xff]
    %v2780 = vld [vmem:[%s2776 + $0x18] sm:$0xf]
    %v2781 = vrot.slane %v1676, 2
    %v2782 = vrot.slane %v1680, 1
    %v2783 = vsel %vm1694, %v2782, %v2781
    %v2784 = vsel %vm1509, %v2783, 0
    %v2787 = vsel %vm1698, %v2780, 0
    %2789 = vmatprep.subr.mxu0 0.0
    %2790 = vmatpush1.msra.mxu0 %v2777
    %2791 = vmatprep.subr.mxu0 0.0
    %2792 = vmatpush1.msra.mxu0 %v2778
    %2793 = vmatprep.subr.mxu0 0.0
    %2794 = vmatpush1.msra.mxu0 %v2779
    %2795 = vmatprep.subr.mxu0 0.0
    %2796 = vmatpush1.msra.mxu0 %v2787
    %2797 = vmatprep.subr.mxu0 0.0
    %2798 = vmatpush1.msra.mxu0 0.0
    %2799 = vmatprep.subr.mxu0 0.0
    %2800 = vmatpush1.msra.mxu0 0.0
    %2801 = vmatprep.subr.mxu0 0.0
    %2802 = vmatpush1.msra.mxu0 0.0
    %2803 = vmatprep.subr.mxu0 0.0
    %2804 = vmatpush1.msra.mxu0 0.0
    %2805 = vmatprep.subr.mxu0 0.0
    %2806 = vmatpush1.msra.mxu0 0.0
    %2807 = vmatprep.subr.mxu0 0.0
    %2808 = vmatpush1.msra.mxu0 0.0
    %2809 = vmatprep.subr.mxu0 0.0
    %2810 = vmatpush1.msra.mxu0 0.0
    %2811 = vmatprep.subr.mxu0 0.0
    %2812 = vmatpush1.msra.mxu0 0.0
    %2813 = vmatprep.subr.mxu0 0.0
    %2814 = vmatpush1.msra.mxu0 0.0
    %2815 = vmatprep.subr.mxu0 0.0
    %2816 = vmatpush1.msra.mxu0 0.0
    %2817 = vmatprep.subr.mxu0 0.0
    %2818 = vmatpush1.msra.mxu0 0.0
    %2819 = vmatprep.subr.mxu0 0.0
    %2820 = vmatpush1.msra.mxu0 0.0
    %2821 = vmatprep.subr.mxu0 0.0
    %2822 = vmatpush1.msra.mxu0 0.0
    %2823 = vmatprep.subr.mxu0 0.0
    %2824 = vmatpush1.msra.mxu0 0.0
    %2825 = vmatprep.subr.mxu0 0.0
    %2826 = vmatpush1.msra.mxu0 0.0
    %2827 = vmatprep.subr.mxu0 0.0
    %2828 = vmatpush1.msra.mxu0 0.0
    %2829 = vmatprep.subr.mxu0 0.0
    %2830 = vmatpush1.msra.mxu0 0.0
    %2831 = vmatprep.subr.mxu0 0.0
    %2832 = vmatpush1.msra.mxu0 0.0
    %2833 = vmatprep.subr.mxu0 0.0
    %2834 = vmatpush1.msra.mxu0 0.0
    %2835 = vmatprep.subr.mxu0 0.0
    %2836 = vmatpush1.msra.mxu0 0.0
    %2837 = vmatprep.subr.mxu0 0.0
    %2838 = vmatpush1.msra.mxu0 0.0
    %2839 = vmatprep.subr.mxu0 0.0
    %2840 = vmatpush1.msra.mxu0 0.0
    %2841 = vmatprep.subr.mxu0 0.0
    %2842 = vmatpush1.msra.mxu0 0.0
    %2843 = vmatprep.subr.mxu0 0.0
    %2844 = vmatpush1.msra.mxu0 0.0
    %2845 = vmatprep.subr.mxu0 0.0
    %2846 = vmatpush1.msra.mxu0 0.0
    %2847 = vmatprep.subr.mxu0 0.0
    %2848 = vmatpush1.msra.mxu0 0.0
    %2849 = vmatprep.subr.mxu0 0.0
    %2850 = vmatpush1.msra.mxu0 0.0
    %2851 = vmatprep.subr.mxu0 0.0
    %2852 = vmatpush1.msra.mxu0 0.0
    %2853 = vmatprep.mubr.f32.mxu0 0.0
    %2854 = vmatmul.mubr.f32.gmra.mrb[0].mxu0 %v2784
    %v2855 = vpop.f32.mrb[0].mxu0
    %v2856 = vadd.f32 0.0, %v2855
    %v2857 = vpop.f32.mrb[0].mxu0
    %2858 = vdwg.mxu0
    %v2859 = vadd.f32 %v2775, %v2856
    %v2860 = vmax.f32 %v1429, 0.0
    %v2861 = vmax.f32 %v1430, 0.0
    %v2862 = vmax.f32 %v1431, 0.0
    %v2863 = vmax.f32 %v1432, 0.0
    %v2864 = vmax.f32 %v1433, 0.0
    %v2865 = vmax.f32 %v1434, 0.0
    %v2866 = vmax.f32 %v1435, 0.0
    %v2867 = vmax.f32 %v1436, 0.0
    %v2868 = vsel %vm1509, %v2860, 0.0
    %v2869 = vsel %vm1509, %v2861, 0.0
    %v2870 = vadd.f32 %v2868, %v2869
    %v2871 = vsel %vm1509, %v2862, 0.0
    %v2872 = vadd.f32 %v2870, %v2871
    %v2873 = vsel %vm1515, %v2863, 0.0
    %v2874 = vadd.f32 %v2872, %v2873
    %v2875 = vsel %vm1509, %v2864, 0.0
    %v2876 = vadd.f32 %v2874, %v2875
    %v2877 = vsel %vm1509, %v2865, 0.0
    %v2878 = vadd.f32 %v2876, %v2877
    %v2879 = vsel %vm1509, %v2866, 0.0
    %v2880 = vadd.f32 %v2878, %v2879
    %v2881 = vsel %vm1515, %v2867, 0.0
    %v2882 = vadd.f32 %v2880, %v2881
    %2883 = vadd.xlane.f32.xlu0 %v2882
    %v2884 = vpop.xlane.xlu0 %2883
    %v2885 = vrot.slane %v2884, 4
    %v2886 = vadd.f32 %v2884, %v2885
    %v2887 = vrot.slane %v2886, 2
    %v2888 = vadd.f32 %v2886, %v2887
    %v2889 = vrot.slane %v2888, 1
    %v2890 = vadd.f32 %v2888, %v2889
    %s2891 = vtos %v2890
    %v2892 = vrcp.pop 1568.0
    %s2893 = vtos %v2892
    %s2894 = smul.f32 %s2891, %s2893
    %v2895 = vmul.f32 %v2860, %v2860
    %v2896 = vmul.f32 %v2861, %v2861
    %v2897 = vmul.f32 %v2862, %v2862
    %v2898 = vmul.f32 %v2863, %v2863
    %v2899 = vmul.f32 %v2864, %v2864
    %v2900 = vmul.f32 %v2865, %v2865
    %v2901 = vmul.f32 %v2866, %v2866
    %v2902 = vmul.f32 %v2867, %v2867
    %v2903 = vsel %vm1509, %v2895, 0.0
    %v2904 = vsel %vm1509, %v2896, 0.0
    %v2905 = vadd.f32 %v2903, %v2904
    %v2906 = vsel %vm1509, %v2897, 0.0
    %v2907 = vadd.f32 %v2905, %v2906
    %v2908 = vsel %vm1515, %v2898, 0.0
    %v2909 = vadd.f32 %v2907, %v2908
    %v2910 = vsel %vm1509, %v2899, 0.0
    %v2911 = vadd.f32 %v2909, %v2910
    %v2912 = vsel %vm1509, %v2900, 0.0
    %v2913 = vadd.f32 %v2911, %v2912
    %v2914 = vsel %vm1509, %v2901, 0.0
    %v2915 = vadd.f32 %v2913, %v2914
    %v2916 = vsel %vm1515, %v2902, 0.0
    %v2917 = vadd.f32 %v2915, %v2916
    %2918 = vadd.xlane.f32.xlu0 %v2917
    %v2919 = vpop.xlane.xlu0 %2918
    %v2920 = vrot.slane %v2919, 4
    %v2921 = vadd.f32 %v2919, %v2920
    %v2922 = vrot.slane %v2921, 2
    %v2923 = vadd.f32 %v2921, %v2922
    %v2924 = vrot.slane %v2923, 1
    %v2925 = vadd.f32 %v2923, %v2924
    %s2926 = vtos %v2925
    %v2927 = vrcp.pop 1568.0
    %s2928 = vtos %v2927
    %s2929 = smul.f32 %s2926, %s2928
    %s2930 = smul.f32 %s2894, %s2894
    %s2931 = ssub.f32 %s2929, %s2930
    %s2932 = smax.f32 %s2931, 0.0
    %s2933 = sadd.f32 %s2932, 1e-05
    %v2934 = vstv %s2933
    %v2935 = vrsqrt.pop %v2934
    %s2936 = vtos %v2935
    %s2937 = sld [smem:[#allocation7 + $0x1]]
    %s2938 = smul.f32 %s2936, %s2937
    %s2939 = sld [smem:[#allocation8 + $0x1]]
    %s2940 = smul.f32 %s2894, %s2938
    %s2941 = ssub.f32 %s2939, %s2940
    %v2942 = vstv %s2938
    %v2943 = vmul.f32 %v2860, %v2942
    %v2944 = vmul.f32 %v2861, %v2942
    %v2945 = vmul.f32 %v2862, %v2942
    %v2946 = vmul.f32 %v2863, %v2942
    %v2947 = vmul.f32 %v2864, %v2942
    %v2948 = vmul.f32 %v2865, %v2942
    %v2949 = vmul.f32 %v2866, %v2942
    %v2950 = vmul.f32 %v2867, %v2942
    %v2951 = vstv %s2941
    %v2952 = vadd.f32 %v2943, %v2951
    %v2953 = vadd.f32 %v2944, %v2951
    %v2954 = vadd.f32 %v2945, %v2951
    %v2955 = vadd.f32 %v2946, %v2951
    %v2956 = vadd.f32 %v2947, %v2951
    %v2957 = vadd.f32 %v2948, %v2951
    %v2958 = vadd.f32 %v2949, %v2951
    %v2959 = vadd.f32 %v2950, %v2951
    %2968 = vrot.lane.b32.xlu0 %v2952, 127
    %v2969 = vpop.permute.xlu0 %2968
    %2970 = vrot.lane.b32.xlu0 %v2953, 127
    %v2971 = vpop.permute.xlu0 %2970
    %2972 = vrot.lane.b32.xlu0 %v2954, 127
    %v2973 = vpop.permute.xlu0 %2972
    %2974 = vrot.lane.b32.xlu0 %v2955, 127
    %v2975 = vpop.permute.xlu0 %2974
    %2976 = vrot.lane.b32.xlu0 %v2956, 127
    %v2977 = vpop.permute.xlu0 %2976
    %2978 = vrot.lane.b32.xlu0 %v2957, 127
    %v2979 = vpop.permute.xlu0 %2978
    %2980 = vrot.lane.b32.xlu0 %v2958, 127
    %v2981 = vpop.permute.xlu0 %2980
    %2982 = vrot.lane.b32.xlu0 %v2959, 127
    %v2983 = vpop.permute.xlu0 %2982
    %v2992 = vmax.f32 %v2952, %v2969
    %v2993 = vmax.f32 %v2953, %v2971
    %v2994 = vmax.f32 %v2954, %v2973
    %v2995 = vmax.f32 %v2955, %v2975
    %v2996 = vmax.f32 %v2956, %v2977
    %v2997 = vmax.f32 %v2957, %v2979
    %v2998 = vmax.f32 %v2958, %v2981
    %v2999 = vmax.f32 %v2959, %v2983
    %v3008 = vrot.slane %v2992, 1
    %v3009 = vrot.slane %v2993, 1
    %v3010 = vsel %vm461, %v3008, %v3009
    %v3011 = vrot.slane %v2994, 1
    %v3012 = vsel %vm461, %v3009, %v3011
    %v3013 = vrot.slane %v2995, 1
    %v3014 = vsel %vm461, %v3011, %v3013
    %v3015 = vrot.slane %v2996, 1
    %v3016 = vrot.slane %v2997, 1
    %v3017 = vsel %vm461, %v3015, %v3016
    %v3018 = vrot.slane %v2998, 1
    %v3019 = vsel %vm461, %v3016, %v3018
    %v3020 = vrot.slane %v2999, 1
    %v3021 = vsel %vm461, %v3018, %v3020
    %v3030 = vmax.f32 %v2992, %v3010
    %v3031 = vmax.f32 %v2993, %v3012
    %v3032 = vmax.f32 %v2994, %v3014
    %v3033 = vmax.f32 %v2995, %v3013
    %v3034 = vmax.f32 %v2996, %v3017
    %v3035 = vmax.f32 %v2997, %v3019
    %v3036 = vmax.f32 %v2998, %v3021
    %v3037 = vmax.f32 %v2999, %v3020
    %s3038 = scalar_lea.vmem %s5, 448
    %v3039 = vld [vmem:[%s3038] sm:$0xff]
    %v3040 = vld [vmem:[%s3038 + $0x8] sm:$0xff]
    %v3041 = vld [vmem:[%s3038 + $0x10] sm:$0xff]
    %v3042 = vld [vmem:[%s3038 + $0x18] sm:$0xf]
    %v3045 = vrot.slane %v3034, 7
    %v3046 = vsel %vm1694, %v3045, %v3030
    %v3047 = vsel %vm1509, %v3046, 0
    %v3050 = vsel %vm1698, %v3042, 0
    %3052 = vmatprep.subr.mxu0 0.0
    %3053 = vmatpush1.msra.mxu0 %v3039
    %3054 = vmatprep.subr.mxu0 0.0
    %3055 = vmatpush1.msra.mxu0 %v3040
    %3056 = vmatprep.subr.mxu0 0.0
    %3057 = vmatpush1.msra.mxu0 %v3041
    %3058 = vmatprep.subr.mxu0 0.0
    %3059 = vmatpush1.msra.mxu0 %v3050
    %3060 = vmatprep.subr.mxu0 0.0
    %3061 = vmatpush1.msra.mxu0 0.0
    %3062 = vmatprep.subr.mxu0 0.0
    %3063 = vmatpush1.msra.mxu0 0.0
    %3064 = vmatprep.subr.mxu0 0.0
    %3065 = vmatpush1.msra.mxu0 0.0
    %3066 = vmatprep.subr.mxu0 0.0
    %3067 = vmatpush1.msra.mxu0 0.0
    %3068 = vmatprep.subr.mxu0 0.0
    %3069 = vmatpush1.msra.mxu0 0.0
    %3070 = vmatprep.subr.mxu0 0.0
    %3071 = vmatpush1.msra.mxu0 0.0
    %3072 = vmatprep.subr.mxu0 0.0
    %3073 = vmatpush1.msra.mxu0 0.0
    %3074 = vmatprep.subr.mxu0 0.0
    %3075 = vmatpush1.msra.mxu0 0.0
    %3076 = vmatprep.subr.mxu0 0.0
    %3077 = vmatpush1.msra.mxu0 0.0
    %3078 = vmatprep.subr.mxu0 0.0
    %3079 = vmatpush1.msra.mxu0 0.0
    %3080 = vmatprep.subr.mxu0 0.0
    %3081 = vmatpush1.msra.mxu0 0.0
    %3082 = vmatprep.subr.mxu0 0.0
    %3083 = vmatpush1.msra.mxu0 0.0
    %3084 = vmatprep.subr.mxu0 0.0
    %3085 = vmatpush1.msra.mxu0 0.0
    %3086 = vmatprep.subr.mxu0 0.0
    %3087 = vmatpush1.msra.mxu0 0.0
    %3088 = vmatprep.subr.mxu0 0.0
    %3089 = vmatpush1.msra.mxu0 0.0
    %3090 = vmatprep.subr.mxu0 0.0
    %3091 = vmatpush1.msra.mxu0 0.0
    %3092 = vmatprep.subr.mxu0 0.0
    %3093 = vmatpush1.msra.mxu0 0.0
    %3094 = vmatprep.subr.mxu0 0.0
    %3095 = vmatpush1.msra.mxu0 0.0
    %3096 = vmatprep.subr.mxu0 0.0
    %3097 = vmatpush1.msra.mxu0 0.0
    %3098 = vmatprep.subr.mxu0 0.0
    %3099 = vmatpush1.msra.mxu0 0.0
    %3100 = vmatprep.subr.mxu0 0.0
    %3101 = vmatpush1.msra.mxu0 0.0
    %3102 = vmatprep.subr.mxu0 0.0
    %3103 = vmatpush1.msra.mxu0 0.0
    %3104 = vmatprep.subr.mxu0 0.0
    %3105 = vmatpush1.msra.mxu0 0.0
    %3106 = vmatprep.subr.mxu0 0.0
    %3107 = vmatpush1.msra.mxu0 0.0
    %3108 = vmatprep.subr.mxu0 0.0
    %3109 = vmatpush1.msra.mxu0 0.0
    %3110 = vmatprep.subr.mxu0 0.0
    %3111 = vmatpush1.msra.mxu0 0.0
    %3112 = vmatprep.subr.mxu0 0.0
    %3113 = vmatpush1.msra.mxu0 0.0
    %3114 = vmatprep.subr.mxu0 0.0
    %3115 = vmatpush1.msra.mxu0 0.0
    %3116 = vmatprep.mubr.f32.mxu0 0.0
    %3117 = vmatmul.mubr.f32.gmra.mrb[0].mxu0 %v3047
    %v3118 = vpop.f32.mrb[0].mxu0
    %v3119 = vadd.f32 0.0, %v3118
    %v3120 = vpop.f32.mrb[0].mxu0
    %3121 = vdwg.mxu0
    %v3122 = vadd.f32 %v2859, %v3119
    %s3123 = scalar_lea.vmem %s5, 480
    %v3124 = vld [vmem:[%s3123] sm:$0xff]
    %v3125 = vld [vmem:[%s3123 + $0x8] sm:$0xff]
    %v3126 = vld [vmem:[%s3123 + $0x10] sm:$0xff]
    %v3127 = vld [vmem:[%s3123 + $0x18] sm:$0xf]
    %v3128 = vrot.slane %v3030, 2
    %v3129 = vrot.slane %v3034, 1
    %v3130 = vsel %vm1694, %v3129, %v3128
    %v3131 = vsel %vm1509, %v3130, 0
    %v3134 = vsel %vm1698, %v3127, 0
    %3136 = vmatprep.subr.mxu0 0.0
    %3137 = vmatpush1.msra.mxu0 %v3124
    %3138 = vmatprep.subr.mxu0 0.0
    %3139 = vmatpush1.msra.mxu0 %v3125
    %3140 = vmatprep.subr.mxu0 0.0
    %3141 = vmatpush1.msra.mxu0 %v3126
    %3142 = vmatprep.subr.mxu0 0.0
    %3143 = vmatpush1.msra.mxu0 %v3134
    %3144 = vmatprep.subr.mxu0 0.0
    %3145 = vmatpush1.msra.mxu0 0.0
    %3146 = vmatprep.subr.mxu0 0.0
    %3147 = vmatpush1.msra.mxu0 0.0
    %3148 = vmatprep.subr.mxu0 0.0
    %3149 = vmatpush1.msra.mxu0 0.0
    %3150 = vmatprep.subr.mxu0 0.0
    %3151 = vmatpush1.msra.mxu0 0.0
    %3152 = vmatprep.subr.mxu0 0.0
    %3153 = vmatpush1.msra.mxu0 0.0
    %3154 = vmatprep.subr.mxu0 0.0
    %3155 = vmatpush1.msra.mxu0 0.0
    %3156 = vmatprep.subr.mxu0 0.0
    %3157 = vmatpush1.msra.mxu0 0.0
    %3158 = vmatprep.subr.mxu0 0.0
    %3159 = vmatpush1.msra.mxu0 0.0
    %3160 = vmatprep.subr.mxu0 0.0
    %3161 = vmatpush1.msra.mxu0 0.0
    %3162 = vmatprep.subr.mxu0 0.0
    %3163 = vmatpush1.msra.mxu0 0.0
    %3164 = vmatprep.subr.mxu0 0.0
    %3165 = vmatpush1.msra.mxu0 0.0
    %3166 = vmatprep.subr.mxu0 0.0
    %3167 = vmatpush1.msra.mxu0 0.0
    %3168 = vmatprep.subr.mxu0 0.0
    %3169 = vmatpush1.msra.mxu0 0.0
    %3170 = vmatprep.subr.mxu0 0.0
    %3171 = vmatpush1.msra.mxu0 0.0
    %3172 = vmatprep.subr.mxu0 0.0
    %3173 = vmatpush1.msra.mxu0 0.0
    %3174 = vmatprep.subr.mxu0 0.0
    %3175 = vmatpush1.msra.mxu0 0.0
    %3176 = vmatprep.subr.mxu0 0.0
    %3177 = vmatpush1.msra.mxu0 0.0
    %3178 = vmatprep.subr.mxu0 0.0
    %3179 = vmatpush1.msra.mxu0 0.0
    %3180 = vmatprep.subr.mxu0 0.0
    %3181 = vmatpush1.msra.mxu0 0.0
    %3182 = vmatprep.subr.mxu0 0.0
    %3183 = vmatpush1.msra.mxu0 0.0
    %3184 = vmatprep.subr.mxu0 0.0
    %3185 = vmatpush1.msra.mxu0 0.0
    %3186 = vmatprep.subr.mxu0 0.0
    %3187 = vmatpush1.msra.mxu0 0.0
    %3188 = vmatprep.subr.mxu0 0.0
    %3189 = vmatpush1.msra.mxu0 0.0
    %3190 = vmatprep.subr.mxu0 0.0
    %3191 = vmatpush1.msra.mxu0 0.0
    %3192 = vmatprep.subr.mxu0 0.0
    %3193 = vmatpush1.msra.mxu0 0.0
    %3194 = vmatprep.subr.mxu0 0.0
    %3195 = vmatpush1.msra.mxu0 0.0
    %3196 = vmatprep.subr.mxu0 0.0
    %3197 = vmatpush1.msra.mxu0 0.0
    %3198 = vmatprep.subr.mxu0 0.0
    %3199 = vmatpush1.msra.mxu0 0.0
    %3200 = vmatprep.mubr.f32.mxu0 0.0
    %3201 = vmatmul.mubr.f32.gmra.mrb[0].mxu0 %v3131
    %v3202 = vpop.f32.mrb[0].mxu0
    %v3203 = vadd.f32 0.0, %v3202
    %v3204 = vpop.f32.mrb[0].mxu0
    %3205 = vdwg.mxu0
    %v3206 = vadd.f32 %v3122, %v3203
    %s3207 = scalar_lea.vmem %s5, 512
    %v3208 = vld [vmem:[%s3207] sm:$0xff]
    %v3209 = vld [vmem:[%s3207 + $0x8] sm:$0xff]
    %v3210 = vld [vmem:[%s3207 + $0x10] sm:$0xff]
    %v3211 = vld [vmem:[%s3207 + $0x18] sm:$0xf]
    %v3212 = vrot.slane %v3030, 4
    %v3213 = vrot.slane %v3034, 3
    %v3214 = vsel %vm1694, %v3213, %v3212
    %v3215 = vsel %vm1509, %v3214, 0
    %v3218 = vsel %vm1698, %v3211, 0
    %3220 = vmatprep.subr.mxu0 0.0
    %3221 = vmatpush1.msra.mxu0 %v3208
    %3222 = vmatprep.subr.mxu0 0.0
    %3223 = vmatpush1.msra.mxu0 %v3209
    %3224 = vmatprep.subr.mxu0 0.0
    %3225 = vmatpush1.msra.mxu0 %v3210
    %3226 = vmatprep.subr.mxu0 0.0
    %3227 = vmatpush1.msra.mxu0 %v3218
    %3228 = vmatprep.subr.mxu0 0.0
    %3229 = vmatpush1.msra.mxu0 0.0
    %3230 = vmatprep.subr.mxu0 0.0
    %3231 = vmatpush1.msra.mxu0 0.0
    %3232 = vmatprep.subr.mxu0 0.0
    %3233 = vmatpush1.msra.mxu0 0.0
    %3234 = vmatprep.subr.mxu0 0.0
    %3235 = vmatpush1.msra.mxu0 0.0
    %3236 = vmatprep.subr.mxu0 0.0
    %3237 = vmatpush1.msra.mxu0 0.0
    %3238 = vmatprep.subr.mxu0 0.0
    %3239 = vmatpush1.msra.mxu0 0.0
    %3240 = vmatprep.subr.mxu0 0.0
    %3241 = vmatpush1.msra.mxu0 0.0
    %3242 = vmatprep.subr.mxu0 0.0
    %3243 = vmatpush1.msra.mxu0 0.0
    %3244 = vmatprep.subr.mxu0 0.0
    %3245 = vmatpush1.msra.mxu0 0.0
    %3246 = vmatprep.subr.mxu0 0.0
    %3247 = vmatpush1.msra.mxu0 0.0
    %3248 = vmatprep.subr.mxu0 0.0
    %3249 = vmatpush1.msra.mxu0 0.0
    %3250 = vmatprep.subr.mxu0 0.0
    %3251 = vmatpush1.msra.mxu0 0.0
    %3252 = vmatprep.subr.mxu0 0.0
    %3253 = vmatpush1.msra.mxu0 0.0
    %3254 = vmatprep.subr.mxu0 0.0
    %3255 = vmatpush1.msra.mxu0 0.0
    %3256 = vmatprep.subr.mxu0 0.0
    %3257 = vmatpush1.msra.mxu0 0.0
    %3258 = vmatprep.subr.mxu0 0.0
    %3259 = vmatpush1.msra.mxu0 0.0
    %3260 = vmatprep.subr.mxu0 0.0
    %3261 = vmatpush1.msra.mxu0 0.0
    %3262 = vmatprep.subr.mxu0 0.0
    %3263 = vmatpush1.msra.mxu0 0.0
    %3264 = vmatprep.subr.mxu0 0.0
    %3265 = vmatpush1.msra.mxu0 0.0
    %3266 = vmatprep.subr.mxu0 0.0
    %3267 = vmatpush1.msra.mxu0 0.0
    %3268 = vmatprep.subr.mxu0 0.0
    %3269 = vmatpush1.msra.mxu0 0.0
    %3270 = vmatprep.subr.mxu0 0.0
    %3271 = vmatpush1.msra.mxu0 0.0
    %3272 = vmatprep.subr.mxu0 0.0
    %3273 = vmatpush1.msra.mxu0 0.0
    %3274 = vmatprep.subr.mxu0 0.0
    %3275 = vmatpush1.msra.mxu0 0.0
    %3276 = vmatprep.subr.mxu0 0.0
    %3277 = vmatpush1.msra.mxu0 0.0
    %3278 = vmatprep.subr.mxu0 0.0
    %3279 = vmatpush1.msra.mxu0 0.0
    %3280 = vmatprep.subr.mxu0 0.0
    %3281 = vmatpush1.msra.mxu0 0.0
    %3282 = vmatprep.subr.mxu0 0.0
    %3283 = vmatpush1.msra.mxu0 0.0
    %3284 = vmatprep.mubr.f32.mxu0 0.0
    %3285 = vmatmul.mubr.f32.gmra.mrb[0].mxu0 %v3215
    %v3286 = vpop.f32.mrb[0].mxu0
    %v3287 = vadd.f32 0.0, %v3286
    %v3288 = vpop.f32.mrb[0].mxu0
    %3289 = vdwg.mxu0
    %v3290 = vadd.f32 %v3206, %v3287
    %s3291 = scalar_lea.vmem %s5, 544
    %v3292 = vld [vmem:[%s3291] sm:$0xff]
    %v3293 = vld [vmem:[%s3291 + $0x8] sm:$0xff]
    %v3294 = vld [vmem:[%s3291 + $0x10] sm:$0xff]
    %v3295 = vld [vmem:[%s3291 + $0x18] sm:$0xf]
    %v3296 = vrot.slane %v3030, 6
    %v3297 = vrot.slane %v3034, 5
    %v3298 = vsel %vm1694, %v3297, %v3296
    %v3299 = vsel %vm1509, %v3298, 0
    %v3302 = vsel %vm1698, %v3295, 0
    %3304 = vmatprep.subr.mxu0 0.0
    %3305 = vmatpush1.msra.mxu0 %v3292
    %3306 = vmatprep.subr.mxu0 0.0
    %3307 = vmatpush1.msra.mxu0 %v3293
    %3308 = vmatprep.subr.mxu0 0.0
    %3309 = vmatpush1.msra.mxu0 %v3294
    %3310 = vmatprep.subr.mxu0 0.0
    %3311 = vmatpush1.msra.mxu0 %v3302
    %3312 = vmatprep.subr.mxu0 0.0
    %3313 = vmatpush1.msra.mxu0 0.0
    %3314 = vmatprep.subr.mxu0 0.0
    %3315 = vmatpush1.msra.mxu0 0.0
    %3316 = vmatprep.subr.mxu0 0.0
    %3317 = vmatpush1.msra.mxu0 0.0
    %3318 = vmatprep.subr.mxu0 0.0
    %3319 = vmatpush1.msra.mxu0 0.0
    %3320 = vmatprep.subr.mxu0 0.0
    %3321 = vmatpush1.msra.mxu0 0.0
    %3322 = vmatprep.subr.mxu0 0.0
    %3323 = vmatpush1.msra.mxu0 0.0
    %3324 = vmatprep.subr.mxu0 0.0
    %3325 = vmatpush1.msra.mxu0 0.0
    %3326 = vmatprep.subr.mxu0 0.0
    %3327 = vmatpush1.msra.mxu0 0.0
    %3328 = vmatprep.subr.mxu0 0.0
    %3329 = vmatpush1.msra.mxu0 0.0
    %3330 = vmatprep.subr.mxu0 0.0
    %3331 = vmatpush1.msra.mxu0 0.0
    %3332 = vmatprep.subr.mxu0 0.0
    %3333 = vmatpush1.msra.mxu0 0.0
    %3334 = vmatprep.subr.mxu0 0.0
    %3335 = vmatpush1.msra.mxu0 0.0
    %3336 = vmatprep.subr.mxu0 0.0
    %3337 = vmatpush1.msra.mxu0 0.0
    %3338 = vmatprep.subr.mxu0 0.0
    %3339 = vmatpush1.msra.mxu0 0.0
    %3340 = vmatprep.subr.mxu0 0.0
    %3341 = vmatpush1.msra.mxu0 0.0
    %3342 = vmatprep.subr.mxu0 0.0
    %3343 = vmatpush1.msra.mxu0 0.0
    %3344 = vmatprep.subr.mxu0 0.0
    %3345 = vmatpush1.msra.mxu0 0.0
    %3346 = vmatprep.subr.mxu0 0.0
    %3347 = vmatpush1.msra.mxu0 0.0
    %3348 = vmatprep.subr.mxu0 0.0
    %3349 = vmatpush1.msra.mxu0 0.0
    %3350 = vmatprep.subr.mxu0 0.0
    %3351 = vmatpush1.msra.mxu0 0.0
    %3352 = vmatprep.subr.mxu0 0.0
    %3353 = vmatpush1.msra.mxu0 0.0
    %3354 = vmatprep.subr.mxu0 0.0
    %3355 = vmatpush1.msra.mxu0 0.0
    %3356 = vmatprep.subr.mxu0 0.0
    %3357 = vmatpush1.msra.mxu0 0.0
    %3358 = vmatprep.subr.mxu0 0.0
    %3359 = vmatpush1.msra.mxu0 0.0
    %3360 = vmatprep.subr.mxu0 0.0
    %3361 = vmatpush1.msra.mxu0 0.0
    %3362 = vmatprep.subr.mxu0 0.0
    %3363 = vmatpush1.msra.mxu0 0.0
    %3364 = vmatprep.subr.mxu0 0.0
    %3365 = vmatpush1.msra.mxu0 0.0
    %3366 = vmatprep.subr.mxu0 0.0
    %3367 = vmatpush1.msra.mxu0 0.0
    %3368 = vmatprep.mubr.f32.mxu0 0.0
    %3369 = vmatmul.mubr.f32.gmra.mrb[0].mxu0 %v3299
    %v3370 = vpop.f32.mrb[0].mxu0
    %v3371 = vadd.f32 0.0, %v3370
    %v3372 = vpop.f32.mrb[0].mxu0
    %3373 = vdwg.mxu0
    %v3374 = vadd.f32 %v3290, %v3371
    %s3375 = scalar_lea.vmem %s5, 576
    %v3376 = vld [vmem:[%s3375] sm:$0xff]
    %v3377 = vld [vmem:[%s3375 + $0x8] sm:$0xff]
    %v3378 = vld [vmem:[%s3375 + $0x10] sm:$0xff]
    %v3379 = vld [vmem:[%s3375 + $0x18] sm:$0xf]
    %v3382 = vrot.slane %v3035, 7
    %v3383 = vsel %vm1694, %v3382, %v3031
    %v3384 = vsel %vm1509, %v3383, 0
    %v3387 = vsel %vm1698, %v3379, 0
    %3389 = vmatprep.subr.mxu0 0.0
    %3390 = vmatpush1.msra.mxu0 %v3376
    %3391 = vmatprep.subr.mxu0 0.0
    %3392 = vmatpush1.msra.mxu0 %v3377
    %3393 = vmatprep.subr.mxu0 0.0
    %3394 = vmatpush1.msra.mxu0 %v3378
    %3395 = vmatprep.subr.mxu0 0.0
    %3396 = vmatpush1.msra.mxu0 %v3387
    %3397 = vmatprep.subr.mxu0 0.0
    %3398 = vmatpush1.msra.mxu0 0.0
    %3399 = vmatprep.subr.mxu0 0.0
    %3400 = vmatpush1.msra.mxu0 0.0
    %3401 = vmatprep.subr.mxu0 0.0
    %3402 = vmatpush1.msra.mxu0 0.0
    %3403 = vmatprep.subr.mxu0 0.0
    %3404 = vmatpush1.msra.mxu0 0.0
    %3405 = vmatprep.subr.mxu0 0.0
    %3406 = vmatpush1.msra.mxu0 0.0
    %3407 = vmatprep.subr.mxu0 0.0
    %3408 = vmatpush1.msra.mxu0 0.0
    %3409 = vmatprep.subr.mxu0 0.0
    %3410 = vmatpush1.msra.mxu0 0.0
    %3411 = vmatprep.subr.mxu0 0.0
    %3412 = vmatpush1.msra.mxu0 0.0
    %3413 = vmatprep.subr.mxu0 0.0
    %3414 = vmatpush1.msra.mxu0 0.0
    %3415 = vmatprep.subr.mxu0 0.0
    %3416 = vmatpush1.msra.mxu0 0.0
    %3417 = vmatprep.subr.mxu0 0.0
    %3418 = vmatpush1.msra.mxu0 0.0
    %3419 = vmatprep.subr.mxu0 0.0
    %3420 = vmatpush1.msra.mxu0 0.0
    %3421 = vmatprep.subr.mxu0 0.0
    %3422 = vmatpush1.msra.mxu0 0.0
    %3423 = vmatprep.subr.mxu0 0.0
    %3424 = vmatpush1.msra.mxu0 0.0
    %3425 = vmatprep.subr.mxu0 0.0
    %3426 = vmatpush1.msra.mxu0 0.0
    %3427 = vmatprep.subr.mxu0 0.0
    %3428 = vmatpush1.msra.mxu0 0.0
    %3429 = vmatprep.subr.mxu0 0.0
    %3430 = vmatpush1.msra.mxu0 0.0
    %3431 = vmatprep.subr.mxu0 0.0
    %3432 = vmatpush1.msra.mxu0 0.0
    %3433 = vmatprep.subr.mxu0 0.0
    %3434 = vmatpush1.msra.mxu0 0.0
    %3435 = vmatprep.subr.mxu0 0.0
    %3436 = vmatpush1.msra.mxu0 0.0
    %3437 = vmatprep.subr.mxu0 0.0
    %3438 = vmatpush1.msra.mxu0 0.0
    %3439 = vmatprep.subr.mxu0 0.0
    %3440 = vmatpush1.msra.mxu0 0.0
    %3441 = vmatprep.subr.mxu0 0.0
    %3442 = vmatpush1.msra.mxu0 0.0
    %3443 = vmatprep.subr.mxu0 0.0
    %3444 = vmatpush1.msra.mxu0 0.0
    %3445 = vmatprep.subr.mxu0 0.0
    %3446 = vmatpush1.msra.mxu0 0.0
    %3447 = vmatprep.subr.mxu0 0.0
    %3448 = vmatpush1.msra.mxu0 0.0
    %3449 = vmatprep.subr.mxu0 0.0
    %3450 = vmatpush1.msra.mxu0 0.0
    %3451 = vmatprep.subr.mxu0 0.0
    %3452 = vmatpush1.msra.mxu0 0.0
    %3453 = vmatprep.mubr.f32.mxu0 0.0
    %3454 = vmatmul.mubr.f32.gmra.mrb[0].mxu0 %v3384
    %v3455 = vpop.f32.mrb[0].mxu0
    %v3456 = vadd.f32 0.0, %v3455
    %v3457 = vpop.f32.mrb[0].mxu0
    %3458 = vdwg.mxu0
    %v3459 = vadd.f32 %v3374, %v3456
    %s3460 = scalar_lea.vmem %s5, 608
    %v3461 = vld [vmem:[%s3460] sm:$0xff]
    %v3462 = vld [vmem:[%s3460 + $0x8] sm:$0xff]
    %v3463 = vld [vmem:[%s3460 + $0x10] sm:$0xff]
    %v3464 = vld [vmem:[%s3460 + $0x18] sm:$0xf]
    %v3465 = vrot.slane %v3031, 2
    %v3466 = vrot.slane %v3035, 1
    %v3467 = vsel %vm1694, %v3466, %v3465
    %v3468 = vsel %vm1509, %v3467, 0
    %v3471 = vsel %vm1698, %v3464, 0
    %3473 = vmatprep.subr.mxu0 0.0
    %3474 = vmatpush1.msra.mxu0 %v3461
    %3475 = vmatprep.subr.mxu0 0.0
    %3476 = vmatpush1.msra.mxu0 %v3462
    %3477 = vmatprep.subr.mxu0 0.0
    %3478 = vmatpush1.msra.mxu0 %v3463
    %3479 = vmatprep.subr.mxu0 0.0
    %3480 = vmatpush1.msra.mxu0 %v3471
    %3481 = vmatprep.subr.mxu0 0.0
    %3482 = vmatpush1.msra.mxu0 0.0
    %3483 = vmatprep.subr.mxu0 0.0
    %3484 = vmatpush1.msra.mxu0 0.0
    %3485 = vmatprep.subr.mxu0 0.0
    %3486 = vmatpush1.msra.mxu0 0.0
    %3487 = vmatprep.subr.mxu0 0.0
    %3488 = vmatpush1.msra.mxu0 0.0
    %3489 = vmatprep.subr.mxu0 0.0
    %3490 = vmatpush1.msra.mxu0 0.0
    %3491 = vmatprep.subr.mxu0 0.0
    %3492 = vmatpush1.msra.mxu0 0.0
    %3493 = vmatprep.subr.mxu0 0.0
    %3494 = vmatpush1.msra.mxu0 0.0
    %3495 = vmatprep.subr.mxu0 0.0
    %3496 = vmatpush1.msra.mxu0 0.0
    %3497 = vmatprep.subr.mxu0 0.0
    %3498 = vmatpush1.msra.mxu0 0.0
    %3499 = vmatprep.subr.mxu0 0.0
    %3500 = vmatpush1.msra.mxu0 0.0
    %3501 = vmatprep.subr.mxu0 0.0
    %3502 = vmatpush1.msra.mxu0 0.0
    %3503 = vmatprep.subr.mxu0 0.0
    %3504 = vmatpush1.msra.mxu0 0.0
    %3505 = vmatprep.subr.mxu0 0.0
    %3506 = vmatpush1.msra.mxu0 0.0
    %3507 = vmatprep.subr.mxu0 0.0
    %3508 = vmatpush1.msra.mxu0 0.0
    %3509 = vmatprep.subr.mxu0 0.0
    %3510 = vmatpush1.msra.mxu0 0.0
    %3511 = vmatprep.subr.mxu0 0.0
    %3512 = vmatpush1.msra.mxu0 0.0
    %3513 = vmatprep.subr.mxu0 0.0
    %3514 = vmatpush1.msra.mxu0 0.0
    %3515 = vmatprep.subr.mxu0 0.0
    %3516 = vmatpush1.msra.mxu0 0.0
    %3517 = vmatprep.subr.mxu0 0.0
    %3518 = vmatpush1.msra.mxu0 0.0
    %3519 = vmatprep.subr.mxu0 0.0
    %3520 = vmatpush1.msra.mxu0 0.0
    %3521 = vmatprep.subr.mxu0 0.0
    %3522 = vmatpush1.msra.mxu0 0.0
    %3523 = vmatprep.subr.mxu0 0.0
    %3524 = vmatpush1.msra.mxu0 0.0
    %3525 = vmatprep.subr.mxu0 0.0
    %3526 = vmatpush1.msra.mxu0 0.0
    %3527 = vmatprep.subr.mxu0 0.0
    %3528 = vmatpush1.msra.mxu0 0.0
    %3529 = vmatprep.subr.mxu0 0.0
    %3530 = vmatpush1.msra.mxu0 0.0
    %3531 = vmatprep.subr.mxu0 0.0
    %3532 = vmatpush1.msra.mxu0 0.0
    %3533 = vmatprep.subr.mxu0 0.0
    %3534 = vmatpush1.msra.mxu0 0.0
    %3535 = vmatprep.subr.mxu0 0.0
    %3536 = vmatpush1.msra.mxu0 0.0
    %3537 = vmatprep.mubr.f32.mxu0 0.0
    %3538 = vmatmul.mubr.f32.gmra.mrb[0].mxu0 %v3468
    %v3539 = vpop.f32.mrb[0].mxu0
    %v3540 = vadd.f32 0.0, %v3539
    %v3541 = vpop.f32.mrb[0].mxu0
    %3542 = vdwg.mxu0
    %v3543 = vadd.f32 %v3459, %v3540
    %s3544 = scalar_lea.vmem %s5, 640
    %v3545 = vld [vmem:[%s3544] sm:$0xff]
    %v3546 = vld [vmem:[%s3544 + $0x8] sm:$0xff]
    %v3547 = vld [vmem:[%s3544 + $0x10] sm:$0xff]
    %v3548 = vld [vmem:[%s3544 + $0x18] sm:$0xf]
    %v3549 = vrot.slane %v3031, 4
    %v3550 = vrot.slane %v3035, 3
    %v3551 = vsel %vm1694, %v3550, %v3549
    %v3552 = vsel %vm1509, %v3551, 0
    %v3555 = vsel %vm1698, %v3548, 0
    %3557 = vmatprep.subr.mxu0 0.0
    %3558 = vmatpush1.msra.mxu0 %v3545
    %3559 = vmatprep.subr.mxu0 0.0
    %3560 = vmatpush1.msra.mxu0 %v3546
    %3561 = vmatprep.subr.mxu0 0.0
    %3562 = vmatpush1.msra.mxu0 %v3547
    %3563 = vmatprep.subr.mxu0 0.0
    %3564 = vmatpush1.msra.mxu0 %v3555
    %3565 = vmatprep.subr.mxu0 0.0
    %3566 = vmatpush1.msra.mxu0 0.0
    %3567 = vmatprep.subr.mxu0 0.0
    %3568 = vmatpush1.msra.mxu0 0.0
    %3569 = vmatprep.subr.mxu0 0.0
    %3570 = vmatpush1.msra.mxu0 0.0
    %3571 = vmatprep.subr.mxu0 0.0
    %3572 = vmatpush1.msra.mxu0 0.0
    %3573 = vmatprep.subr.mxu0 0.0
    %3574 = vmatpush1.msra.mxu0 0.0
    %3575 = vmatprep.subr.mxu0 0.0
    %3576 = vmatpush1.msra.mxu0 0.0
    %3577 = vmatprep.subr.mxu0 0.0
    %3578 = vmatpush1.msra.mxu0 0.0
    %3579 = vmatprep.subr.mxu0 0.0
    %3580 = vmatpush1.msra.mxu0 0.0
    %3581 = vmatprep.subr.mxu0 0.0
    %3582 = vmatpush1.msra.mxu0 0.0
    %3583 = vmatprep.subr.mxu0 0.0
    %3584 = vmatpush1.msra.mxu0 0.0
    %3585 = vmatprep.subr.mxu0 0.0
    %3586 = vmatpush1.msra.mxu0 0.0
    %3587 = vmatprep.subr.mxu0 0.0
    %3588 = vmatpush1.msra.mxu0 0.0
    %3589 = vmatprep.subr.mxu0 0.0
    %3590 = vmatpush1.msra.mxu0 0.0
    %3591 = vmatprep.subr.mxu0 0.0
    %3592 = vmatpush1.msra.mxu0 0.0
    %3593 = vmatprep.subr.mxu0 0.0
    %3594 = vmatpush1.msra.mxu0 0.0
    %3595 = vmatprep.subr.mxu0 0.0
    %3596 = vmatpush1.msra.mxu0 0.0
    %3597 = vmatprep.subr.mxu0 0.0
    %3598 = vmatpush1.msra.mxu0 0.0
    %3599 = vmatprep.subr.mxu0 0.0
    %3600 = vmatpush1.msra.mxu0 0.0
    %3601 = vmatprep.subr.mxu0 0.0
    %3602 = vmatpush1.msra.mxu0 0.0
    %3603 = vmatprep.subr.mxu0 0.0
    %3604 = vmatpush1.msra.mxu0 0.0
    %3605 = vmatprep.subr.mxu0 0.0
    %3606 = vmatpush1.msra.mxu0 0.0
    %3607 = vmatprep.subr.mxu0 0.0
    %3608 = vmatpush1.msra.mxu0 0.0
    %3609 = vmatprep.subr.mxu0 0.0
    %3610 = vmatpush1.msra.mxu0 0.0
    %3611 = vmatprep.subr.mxu0 0.0
    %3612 = vmatpush1.msra.mxu0 0.0
    %3613 = vmatprep.subr.mxu0 0.0
    %3614 = vmatpush1.msra.mxu0 0.0
    %3615 = vmatprep.subr.mxu0 0.0
    %3616 = vmatpush1.msra.mxu0 0.0
    %3617 = vmatprep.subr.mxu0 0.0
    %3618 = vmatpush1.msra.mxu0 0.0
    %3619 = vmatprep.subr.mxu0 0.0
    %3620 = vmatpush1.msra.mxu0 0.0
    %3621 = vmatprep.mubr.f32.mxu0 0.0
    %3622 = vmatmul.mubr.f32.gmra.mrb[0].mxu0 %v3552
    %v3623 = vpop.f32.mrb[0].mxu0
    %v3624 = vadd.f32 0.0, %v3623
    %v3625 = vpop.f32.mrb[0].mxu0
    %3626 = vdwg.mxu0
    %v3627 = vadd.f32 %v3543, %v3624
    %s3628 = scalar_lea.vmem %s5, 672
    %v3629 = vld [vmem:[%s3628] sm:$0xff]
    %v3630 = vld [vmem:[%s3628 + $0x8] sm:$0xff]
    %v3631 = vld [vmem:[%s3628 + $0x10] sm:$0xff]
    %v3632 = vld [vmem:[%s3628 + $0x18] sm:$0xf]
    %v3633 = vrot.slane %v3031, 6
    %v3634 = vrot.slane %v3035, 5
    %v3635 = vsel %vm1694, %v3634, %v3633
    %v3636 = vsel %vm1509, %v3635, 0
    %v3639 = vsel %vm1698, %v3632, 0
    %3641 = vmatprep.subr.mxu0 0.0
    %3642 = vmatpush1.msra.mxu0 %v3629
    %3643 = vmatprep.subr.mxu0 0.0
    %3644 = vmatpush1.msra.mxu0 %v3630
    %3645 = vmatprep.subr.mxu0 0.0
    %3646 = vmatpush1.msra.mxu0 %v3631
    %3647 = vmatprep.subr.mxu0 0.0
    %3648 = vmatpush1.msra.mxu0 %v3639
    %3649 = vmatprep.subr.mxu0 0.0
    %3650 = vmatpush1.msra.mxu0 0.0
    %3651 = vmatprep.subr.mxu0 0.0
    %3652 = vmatpush1.msra.mxu0 0.0
    %3653 = vmatprep.subr.mxu0 0.0
    %3654 = vmatpush1.msra.mxu0 0.0
    %3655 = vmatprep.subr.mxu0 0.0
    %3656 = vmatpush1.msra.mxu0 0.0
    %3657 = vmatprep.subr.mxu0 0.0
    %3658 = vmatpush1.msra.mxu0 0.0
    %3659 = vmatprep.subr.mxu0 0.0
    %3660 = vmatpush1.msra.mxu0 0.0
    %3661 = vmatprep.subr.mxu0 0.0
    %3662 = vmatpush1.msra.mxu0 0.0
    %3663 = vmatprep.subr.mxu0 0.0
    %3664 = vmatpush1.msra.mxu0 0.0
    %3665 = vmatprep.subr.mxu0 0.0
    %3666 = vmatpush1.msra.mxu0 0.0
    %3667 = vmatprep.subr.mxu0 0.0
    %3668 = vmatpush1.msra.mxu0 0.0
    %3669 = vmatprep.subr.mxu0 0.0
    %3670 = vmatpush1.msra.mxu0 0.0
    %3671 = vmatprep.subr.mxu0 0.0
    %3672 = vmatpush1.msra.mxu0 0.0
    %3673 = vmatprep.subr.mxu0 0.0
    %3674 = vmatpush1.msra.mxu0 0.0
    %3675 = vmatprep.subr.mxu0 0.0
    %3676 = vmatpush1.msra.mxu0 0.0
    %3677 = vmatprep.subr.mxu0 0.0
    %3678 = vmatpush1.msra.mxu0 0.0
    %3679 = vmatprep.subr.mxu0 0.0
    %3680 = vmatpush1.msra.mxu0 0.0
    %3681 = vmatprep.subr.mxu0 0.0
    %3682 = vmatpush1.msra.mxu0 0.0
    %3683 = vmatprep.subr.mxu0 0.0
    %3684 = vmatpush1.msra.mxu0 0.0
    %3685 = vmatprep.subr.mxu0 0.0
    %3686 = vmatpush1.msra.mxu0 0.0
    %3687 = vmatprep.subr.mxu0 0.0
    %3688 = vmatpush1.msra.mxu0 0.0
    %3689 = vmatprep.subr.mxu0 0.0
    %3690 = vmatpush1.msra.mxu0 0.0
    %3691 = vmatprep.subr.mxu0 0.0
    %3692 = vmatpush1.msra.mxu0 0.0
    %3693 = vmatprep.subr.mxu0 0.0
    %3694 = vmatpush1.msra.mxu0 0.0
    %3695 = vmatprep.subr.mxu0 0.0
    %3696 = vmatpush1.msra.mxu0 0.0
    %3697 = vmatprep.subr.mxu0 0.0
    %3698 = vmatpush1.msra.mxu0 0.0
    %3699 = vmatprep.subr.mxu0 0.0
    %3700 = vmatpush1.msra.mxu0 0.0
    %3701 = vmatprep.subr.mxu0 0.0
    %3702 = vmatpush1.msra.mxu0 0.0
    %3703 = vmatprep.subr.mxu0 0.0
    %3704 = vmatpush1.msra.mxu0 0.0
    %3705 = vmatprep.mubr.f32.mxu0 0.0
    %3706 = vmatmul.mubr.f32.gmra.mrb[0].mxu0 %v3636
    %v3707 = vpop.f32.mrb[0].mxu0
    %v3708 = vadd.f32 0.0, %v3707
    %v3709 = vpop.f32.mrb[0].mxu0
    %3710 = vdwg.mxu0
    %v3711 = vadd.f32 %v3627, %v3708
    %s3712 = scalar_lea.vmem %s5, 704
    %v3713 = vld [vmem:[%s3712] sm:$0xff]
    %v3714 = vld [vmem:[%s3712 + $0x8] sm:$0xff]
    %v3715 = vld [vmem:[%s3712 + $0x10] sm:$0xff]
    %v3716 = vld [vmem:[%s3712 + $0x18] sm:$0xf]
    %v3719 = vrot.slane %v3036, 7
    %v3720 = vsel %vm1694, %v3719, %v3032
    %v3721 = vsel %vm1509, %v3720, 0
    %v3724 = vsel %vm1698, %v3716, 0
    %3726 = vmatprep.subr.mxu0 0.0
    %3727 = vmatpush1.msra.mxu0 %v3713
    %3728 = vmatprep.subr.mxu0 0.0
    %3729 = vmatpush1.msra.mxu0 %v3714
    %3730 = vmatprep.subr.mxu0 0.0
    %3731 = vmatpush1.msra.mxu0 %v3715
    %3732 = vmatprep.subr.mxu0 0.0
    %3733 = vmatpush1.msra.mxu0 %v3724
    %3734 = vmatprep.subr.mxu0 0.0
    %3735 = vmatpush1.msra.mxu0 0.0
    %3736 = vmatprep.subr.mxu0 0.0
    %3737 = vmatpush1.msra.mxu0 0.0
    %3738 = vmatprep.subr.mxu0 0.0
    %3739 = vmatpush1.msra.mxu0 0.0
    %3740 = vmatprep.subr.mxu0 0.0
    %3741 = vmatpush1.msra.mxu0 0.0
    %3742 = vmatprep.subr.mxu0 0.0
    %3743 = vmatpush1.msra.mxu0 0.0
    %3744 = vmatprep.subr.mxu0 0.0
    %3745 = vmatpush1.msra.mxu0 0.0
    %3746 = vmatprep.subr.mxu0 0.0
    %3747 = vmatpush1.msra.mxu0 0.0
    %3748 = vmatprep.subr.mxu0 0.0
    %3749 = vmatpush1.msra.mxu0 0.0
    %3750 = vmatprep.subr.mxu0 0.0
    %3751 = vmatpush1.msra.mxu0 0.0
    %3752 = vmatprep.subr.mxu0 0.0
    %3753 = vmatpush1.msra.mxu0 0.0
    %3754 = vmatprep.subr.mxu0 0.0
    %3755 = vmatpush1.msra.mxu0 0.0
    %3756 = vmatprep.subr.mxu0 0.0
    %3757 = vmatpush1.msra.mxu0 0.0
    %3758 = vmatprep.subr.mxu0 0.0
    %3759 = vmatpush1.msra.mxu0 0.0
    %3760 = vmatprep.subr.mxu0 0.0
    %3761 = vmatpush1.msra.mxu0 0.0
    %3762 = vmatprep.subr.mxu0 0.0
    %3763 = vmatpush1.msra.mxu0 0.0
    %3764 = vmatprep.subr.mxu0 0.0
    %3765 = vmatpush1.msra.mxu0 0.0
    %3766 = vmatprep.subr.mxu0 0.0
    %3767 = vmatpush1.msra.mxu0 0.0
    %3768 = vmatprep.subr.mxu0 0.0
    %3769 = vmatpush1.msra.mxu0 0.0
    %3770 = vmatprep.subr.mxu0 0.0
    %3771 = vmatpush1.msra.mxu0 0.0
    %3772 = vmatprep.subr.mxu0 0.0
    %3773 = vmatpush1.msra.mxu0 0.0
    %3774 = vmatprep.subr.mxu0 0.0
    %3775 = vmatpush1.msra.mxu0 0.0
    %3776 = vmatprep.subr.mxu0 0.0
    %3777 = vmatpush1.msra.mxu0 0.0
    %3778 = vmatprep.subr.mxu0 0.0
    %3779 = vmatpush1.msra.mxu0 0.0
    %3780 = vmatprep.subr.mxu0 0.0
    %3781 = vmatpush1.msra.mxu0 0.0
    %3782 = vmatprep.subr.mxu0 0.0
    %3783 = vmatpush1.msra.mxu0 0.0
    %3784 = vmatprep.subr.mxu0 0.0
    %3785 = vmatpush1.msra.mxu0 0.0
    %3786 = vmatprep.subr.mxu0 0.0
    %3787 = vmatpush1.msra.mxu0 0.0
    %3788 = vmatprep.subr.mxu0 0.0
    %3789 = vmatpush1.msra.mxu0 0.0
    %3790 = vmatprep.mubr.f32.mxu0 0.0
    %3791 = vmatmul.mubr.f32.gmra.mrb[0].mxu0 %v3721
    %v3792 = vpop.f32.mrb[0].mxu0
    %v3793 = vadd.f32 0.0, %v3792
    %v3794 = vpop.f32.mrb[0].mxu0
    %3795 = vdwg.mxu0
    %v3796 = vadd.f32 %v3711, %v3793
    %s3797 = scalar_lea.vmem %s5, 736
    %v3798 = vld [vmem:[%s3797] sm:$0xff]
    %v3799 = vld [vmem:[%s3797 + $0x8] sm:$0xff]
    %v3800 = vld [vmem:[%s3797 + $0x10] sm:$0xff]
    %v3801 = vld [vmem:[%s3797 + $0x18] sm:$0xf]
    %v3802 = vrot.slane %v3032, 2
    %v3803 = vrot.slane %v3036, 1
    %v3804 = vsel %vm1694, %v3803, %v3802
    %v3805 = vsel %vm1509, %v3804, 0
    %v3808 = vsel %vm1698, %v3801, 0
    %3810 = vmatprep.subr.mxu0 0.0
    %3811 = vmatpush1.msra.mxu0 %v3798
    %3812 = vmatprep.subr.mxu0 0.0
    %3813 = vmatpush1.msra.mxu0 %v3799
    %3814 = vmatprep.subr.mxu0 0.0
    %3815 = vmatpush1.msra.mxu0 %v3800
    %3816 = vmatprep.subr.mxu0 0.0
    %3817 = vmatpush1.msra.mxu0 %v3808
    %3818 = vmatprep.subr.mxu0 0.0
    %3819 = vmatpush1.msra.mxu0 0.0
    %3820 = vmatprep.subr.mxu0 0.0
    %3821 = vmatpush1.msra.mxu0 0.0
    %3822 = vmatprep.subr.mxu0 0.0
    %3823 = vmatpush1.msra.mxu0 0.0
    %3824 = vmatprep.subr.mxu0 0.0
    %3825 = vmatpush1.msra.mxu0 0.0
    %3826 = vmatprep.subr.mxu0 0.0
    %3827 = vmatpush1.msra.mxu0 0.0
    %3828 = vmatprep.subr.mxu0 0.0
    %3829 = vmatpush1.msra.mxu0 0.0
    %3830 = vmatprep.subr.mxu0 0.0
    %3831 = vmatpush1.msra.mxu0 0.0
    %3832 = vmatprep.subr.mxu0 0.0
    %3833 = vmatpush1.msra.mxu0 0.0
    %3834 = vmatprep.subr.mxu0 0.0
    %3835 = vmatpush1.msra.mxu0 0.0
    %3836 = vmatprep.subr.mxu0 0.0
    %3837 = vmatpush1.msra.mxu0 0.0
    %3838 = vmatprep.subr.mxu0 0.0
    %3839 = vmatpush1.msra.mxu0 0.0
    %3840 = vmatprep.subr.mxu0 0.0
    %3841 = vmatpush1.msra.mxu0 0.0
    %3842 = vmatprep.subr.mxu0 0.0
    %3843 = vmatpush1.msra.mxu0 0.0
    %3844 = vmatprep.subr.mxu0 0.0
    %3845 = vmatpush1.msra.mxu0 0.0
    %3846 = vmatprep.subr.mxu0 0.0
    %3847 = vmatpush1.msra.mxu0 0.0
    %3848 = vmatprep.subr.mxu0 0.0
    %3849 = vmatpush1.msra.mxu0 0.0
    %3850 = vmatprep.subr.mxu0 0.0
    %3851 = vmatpush1.msra.mxu0 0.0
    %3852 = vmatprep.subr.mxu0 0.0
    %3853 = vmatpush1.msra.mxu0 0.0
    %3854 = vmatprep.subr.mxu0 0.0
    %3855 = vmatpush1.msra.mxu0 0.0
    %3856 = vmatprep.subr.mxu0 0.0
    %3857 = vmatpush1.msra.mxu0 0.0
    %3858 = vmatprep.subr.mxu0 0.0
    %3859 = vmatpush1.msra.mxu0 0.0
    %3860 = vmatprep.subr.mxu0 0.0
    %3861 = vmatpush1.msra.mxu0 0.0
    %3862 = vmatprep.subr.mxu0 0.0
    %3863 = vmatpush1.msra.mxu0 0.0
    %3864 = vmatprep.subr.mxu0 0.0
    %3865 = vmatpush1.msra.mxu0 0.0
    %3866 = vmatprep.subr.mxu0 0.0
    %3867 = vmatpush1.msra.mxu0 0.0
    %3868 = vmatprep.subr.mxu0 0.0
    %3869 = vmatpush1.msra.mxu0 0.0
    %3870 = vmatprep.subr.mxu0 0.0
    %3871 = vmatpush1.msra.mxu0 0.0
    %3872 = vmatprep.subr.mxu0 0.0
    %3873 = vmatpush1.msra.mxu0 0.0
    %3874 = vmatprep.mubr.f32.mxu0 0.0
    %3875 = vmatmul.mubr.f32.gmra.mrb[0].mxu0 %v3805
    %v3876 = vpop.f32.mrb[0].mxu0
    %v3877 = vadd.f32 0.0, %v3876
    %v3878 = vpop.f32.mrb[0].mxu0
    %3879 = vdwg.mxu0
    %v3880 = vadd.f32 %v3796, %v3877
    %s3881 = scalar_lea.vmem %s5, 768
    %v3882 = vld [vmem:[%s3881] sm:$0xff]
    %v3883 = vld [vmem:[%s3881 + $0x8] sm:$0xff]
    %v3884 = vld [vmem:[%s3881 + $0x10] sm:$0xff]
    %v3885 = vld [vmem:[%s3881 + $0x18] sm:$0xf]
    %v3886 = vrot.slane %v3032, 4
    %v3887 = vrot.slane %v3036, 3
    %v3888 = vsel %vm1694, %v3887, %v3886
    %v3889 = vsel %vm1509, %v3888, 0
    %v3892 = vsel %vm1698, %v3885, 0
    %3894 = vmatprep.subr.mxu0 0.0
    %3895 = vmatpush1.msra.mxu0 %v3882
    %3896 = vmatprep.subr.mxu0 0.0
    %3897 = vmatpush1.msra.mxu0 %v3883
    %3898 = vmatprep.subr.mxu0 0.0
    %3899 = vmatpush1.msra.mxu0 %v3884
    %3900 = vmatprep.subr.mxu0 0.0
    %3901 = vmatpush1.msra.mxu0 %v3892
    %3902 = vmatprep.subr.mxu0 0.0
    %3903 = vmatpush1.msra.mxu0 0.0
    %3904 = vmatprep.subr.mxu0 0.0
    %3905 = vmatpush1.msra.mxu0 0.0
    %3906 = vmatprep.subr.mxu0 0.0
    %3907 = vmatpush1.msra.mxu0 0.0
    %3908 = vmatprep.subr.mxu0 0.0
    %3909 = vmatpush1.msra.mxu0 0.0
    %3910 = vmatprep.subr.mxu0 0.0
    %3911 = vmatpush1.msra.mxu0 0.0
    %3912 = vmatprep.subr.mxu0 0.0
    %3913 = vmatpush1.msra.mxu0 0.0
    %3914 = vmatprep.subr.mxu0 0.0
    %3915 = vmatpush1.msra.mxu0 0.0
    %3916 = vmatprep.subr.mxu0 0.0
    %3917 = vmatpush1.msra.mxu0 0.0
    %3918 = vmatprep.subr.mxu0 0.0
    %3919 = vmatpush1.msra.mxu0 0.0
    %3920 = vmatprep.subr.mxu0 0.0
    %3921 = vmatpush1.msra.mxu0 0.0
    %3922 = vmatprep.subr.mxu0 0.0
    %3923 = vmatpush1.msra.mxu0 0.0
    %3924 = vmatprep.subr.mxu0 0.0
    %3925 = vmatpush1.msra.mxu0 0.0
    %3926 = vmatprep.subr.mxu0 0.0
    %3927 = vmatpush1.msra.mxu0 0.0
    %3928 = vmatprep.subr.mxu0 0.0
    %3929 = vmatpush1.msra.mxu0 0.0
    %3930 = vmatprep.subr.mxu0 0.0
    %3931 = vmatpush1.msra.mxu0 0.0
    %3932 = vmatprep.subr.mxu0 0.0
    %3933 = vmatpush1.msra.mxu0 0.0
    %3934 = vmatprep.subr.mxu0 0.0
    %3935 = vmatpush1.msra.mxu0 0.0
    %3936 = vmatprep.subr.mxu0 0.0
    %3937 = vmatpush1.msra.mxu0 0.0
    %3938 = vmatprep.subr.mxu0 0.0
    %3939 = vmatpush1.msra.mxu0 0.0
    %3940 = vmatprep.subr.mxu0 0.0
    %3941 = vmatpush1.msra.mxu0 0.0
    %3942 = vmatprep.subr.mxu0 0.0
    %3943 = vmatpush1.msra.mxu0 0.0
    %3944 = vmatprep.subr.mxu0 0.0
    %3945 = vmatpush1.msra.mxu0 0.0
    %3946 = vmatprep.subr.mxu0 0.0
    %3947 = vmatpush1.msra.mxu0 0.0
    %3948 = vmatprep.subr.mxu0 0.0
    %3949 = vmatpush1.msra.mxu0 0.0
    %3950 = vmatprep.subr.mxu0 0.0
    %3951 = vmatpush1.msra.mxu0 0.0
    %3952 = vmatprep.subr.mxu0 0.0
    %3953 = vmatpush1.msra.mxu0 0.0
    %3954 = vmatprep.subr.mxu0 0.0
    %3955 = vmatpush1.msra.mxu0 0.0
    %3956 = vmatprep.subr.mxu0 0.0
    %3957 = vmatpush1.msra.mxu0 0.0
    %3958 = vmatprep.mubr.f32.mxu0 0.0
    %3959 = vmatmul.mubr.f32.gmra.mrb[0].mxu0 %v3889
    %v3960 = vpop.f32.mrb[0].mxu0
    %v3961 = vadd.f32 0.0, %v3960
    %v3962 = vpop.f32.mrb[0].mxu0
    %3963 = vdwg.mxu0
    %v3964 = vadd.f32 %v3880, %v3961
    %s3965 = scalar_lea.vmem %s5, 800
    %v3966 = vld [vmem:[%s3965] sm:$0xff]
    %v3967 = vld [vmem:[%s3965 + $0x8] sm:$0xff]
    %v3968 = vld [vmem:[%s3965 + $0x10] sm:$0xff]
    %v3969 = vld [vmem:[%s3965 + $0x18] sm:$0xf]
    %v3970 = vrot.slane %v3032, 6
    %v3971 = vrot.slane %v3036, 5
    %v3972 = vsel %vm1694, %v3971, %v3970
    %v3973 = vsel %vm1509, %v3972, 0
    %v3976 = vsel %vm1698, %v3969, 0
    %3978 = vmatprep.subr.mxu0 0.0
    %3979 = vmatpush1.msra.mxu0 %v3966
    %3980 = vmatprep.subr.mxu0 0.0
    %3981 = vmatpush1.msra.mxu0 %v3967
    %3982 = vmatprep.subr.mxu0 0.0
    %3983 = vmatpush1.msra.mxu0 %v3968
    %3984 = vmatprep.subr.mxu0 0.0
    %3985 = vmatpush1.msra.mxu0 %v3976
    %3986 = vmatprep.subr.mxu0 0.0
    %3987 = vmatpush1.msra.mxu0 0.0
    %3988 = vmatprep.subr.mxu0 0.0
    %3989 = vmatpush1.msra.mxu0 0.0
    %3990 = vmatprep.subr.mxu0 0.0
    %3991 = vmatpush1.msra.mxu0 0.0
    %3992 = vmatprep.subr.mxu0 0.0
    %3993 = vmatpush1.msra.mxu0 0.0
    %3994 = vmatprep.subr.mxu0 0.0
    %3995 = vmatpush1.msra.mxu0 0.0
    %3996 = vmatprep.subr.mxu0 0.0
    %3997 = vmatpush1.msra.mxu0 0.0
    %3998 = vmatprep.subr.mxu0 0.0
    %3999 = vmatpush1.msra.mxu0 0.0
    %4000 = vmatprep.subr.mxu0 0.0
    %4001 = vmatpush1.msra.mxu0 0.0
    %4002 = vmatprep.subr.mxu0 0.0
    %4003 = vmatpush1.msra.mxu0 0.0
    %4004 = vmatprep.subr.mxu0 0.0
    %4005 = vmatpush1.msra.mxu0 0.0
    %4006 = vmatprep.subr.mxu0 0.0
    %4007 = vmatpush1.msra.mxu0 0.0
    %4008 = vmatprep.subr.mxu0 0.0
    %4009 = vmatpush1.msra.mxu0 0.0
    %4010 = vmatprep.subr.mxu0 0.0
    %4011 = vmatpush1.msra.mxu0 0.0
    %4012 = vmatprep.subr.mxu0 0.0
    %4013 = vmatpush1.msra.mxu0 0.0
    %4014 = vmatprep.subr.mxu0 0.0
    %4015 = vmatpush1.msra.mxu0 0.0
    %4016 = vmatprep.subr.mxu0 0.0
    %4017 = vmatpush1.msra.mxu0 0.0
    %4018 = vmatprep.subr.mxu0 0.0
    %4019 = vmatpush1.msra.mxu0 0.0
    %4020 = vmatprep.subr.mxu0 0.0
    %4021 = vmatpush1.msra.mxu0 0.0
    %4022 = vmatprep.subr.mxu0 0.0
    %4023 = vmatpush1.msra.mxu0 0.0
    %4024 = vmatprep.subr.mxu0 0.0
    %4025 = vmatpush1.msra.mxu0 0.0
    %4026 = vmatprep.subr.mxu0 0.0
    %4027 = vmatpush1.msra.mxu0 0.0
    %4028 = vmatprep.subr.mxu0 0.0
    %4029 = vmatpush1.msra.mxu0 0.0
    %4030 = vmatprep.subr.mxu0 0.0
    %4031 = vmatpush1.msra.mxu0 0.0
    %4032 = vmatprep.subr.mxu0 0.0
    %4033 = vmatpush1.msra.mxu0 0.0
    %4034 = vmatprep.subr.mxu0 0.0
    %4035 = vmatpush1.msra.mxu0 0.0
    %4036 = vmatprep.subr.mxu0 0.0
    %4037 = vmatpush1.msra.mxu0 0.0
    %4038 = vmatprep.subr.mxu0 0.0
    %4039 = vmatpush1.msra.mxu0 0.0
    %4040 = vmatprep.subr.mxu0 0.0
    %4041 = vmatpush1.msra.mxu0 0.0
    %4042 = vmatprep.mubr.f32.mxu0 0.0
    %4043 = vmatmul.mubr.f32.gmra.mrb[0].mxu0 %v3973
    %v4044 = vpop.f32.mrb[0].mxu0
    %v4045 = vadd.f32 0.0, %v4044
    %v4046 = vpop.f32.mrb[0].mxu0
    %4047 = vdwg.mxu0
    %v4048 = vadd.f32 %v3964, %v4045
    %s4049 = scalar_lea.vmem %s5, 832
    %v4050 = vld [vmem:[%s4049] sm:$0xff]
    %v4051 = vld [vmem:[%s4049 + $0x8] sm:$0xff]
    %v4052 = vld [vmem:[%s4049 + $0x10] sm:$0xff]
    %v4053 = vld [vmem:[%s4049 + $0x18] sm:$0xf]
    %v4056 = vrot.slane %v3037, 7
    %v4057 = vsel %vm1694, %v4056, %v3033
    %v4058 = vsel %vm1509, %v4057, 0
    %v4061 = vsel %vm1698, %v4053, 0
    %4063 = vmatprep.subr.mxu0 0.0
    %4064 = vmatpush1.msra.mxu0 %v4050
    %4065 = vmatprep.subr.mxu0 0.0
    %4066 = vmatpush1.msra.mxu0 %v4051
    %4067 = vmatprep.subr.mxu0 0.0
    %4068 = vmatpush1.msra.mxu0 %v4052
    %4069 = vmatprep.subr.mxu0 0.0
    %4070 = vmatpush1.msra.mxu0 %v4061
    %4071 = vmatprep.subr.mxu0 0.0
    %4072 = vmatpush1.msra.mxu0 0.0
    %4073 = vmatprep.subr.mxu0 0.0
    %4074 = vmatpush1.msra.mxu0 0.0
    %4075 = vmatprep.subr.mxu0 0.0
    %4076 = vmatpush1.msra.mxu0 0.0
    %4077 = vmatprep.subr.mxu0 0.0
    %4078 = vmatpush1.msra.mxu0 0.0
    %4079 = vmatprep.subr.mxu0 0.0
    %4080 = vmatpush1.msra.mxu0 0.0
    %4081 = vmatprep.subr.mxu0 0.0
    %4082 = vmatpush1.msra.mxu0 0.0
    %4083 = vmatprep.subr.mxu0 0.0
    %4084 = vmatpush1.msra.mxu0 0.0
    %4085 = vmatprep.subr.mxu0 0.0
    %4086 = vmatpush1.msra.mxu0 0.0
    %4087 = vmatprep.subr.mxu0 0.0
    %4088 = vmatpush1.msra.mxu0 0.0
    %4089 = vmatprep.subr.mxu0 0.0
    %4090 = vmatpush1.msra.mxu0 0.0
    %4091 = vmatprep.subr.mxu0 0.0
    %4092 = vmatpush1.msra.mxu0 0.0
    %4093 = vmatprep.subr.mxu0 0.0
    %4094 = vmatpush1.msra.mxu0 0.0
    %4095 = vmatprep.subr.mxu0 0.0
    %4096 = vmatpush1.msra.mxu0 0.0
    %4097 = vmatprep.subr.mxu0 0.0
    %4098 = vmatpush1.msra.mxu0 0.0
    %4099 = vmatprep.subr.mxu0 0.0
    %4100 = vmatpush1.msra.mxu0 0.0
    %4101 = vmatprep.subr.mxu0 0.0
    %4102 = vmatpush1.msra.mxu0 0.0
    %4103 = vmatprep.subr.mxu0 0.0
    %4104 = vmatpush1.msra.mxu0 0.0
    %4105 = vmatprep.subr.mxu0 0.0
    %4106 = vmatpush1.msra.mxu0 0.0
    %4107 = vmatprep.subr.mxu0 0.0
    %4108 = vmatpush1.msra.mxu0 0.0
    %4109 = vmatprep.subr.mxu0 0.0
    %4110 = vmatpush1.msra.mxu0 0.0
    %4111 = vmatprep.subr.mxu0 0.0
    %4112 = vmatpush1.msra.mxu0 0.0
    %4113 = vmatprep.subr.mxu0 0.0
    %4114 = vmatpush1.msra.mxu0 0.0
    %4115 = vmatprep.subr.mxu0 0.0
    %4116 = vmatpush1.msra.mxu0 0.0
    %4117 = vmatprep.subr.mxu0 0.0
    %4118 = vmatpush1.msra.mxu0 0.0
    %4119 = vmatprep.subr.mxu0 0.0
    %4120 = vmatpush1.msra.mxu0 0.0
    %4121 = vmatprep.subr.mxu0 0.0
    %4122 = vmatpush1.msra.mxu0 0.0
    %4123 = vmatprep.subr.mxu0 0.0
    %4124 = vmatpush1.msra.mxu0 0.0
    %4125 = vmatprep.subr.mxu0 0.0
    %4126 = vmatpush1.msra.mxu0 0.0
    %4127 = vmatprep.mubr.f32.mxu0 0.0
    %4128 = vmatmul.mubr.f32.gmra.mrb[0].mxu0 %v4058
    %v4129 = vpop.f32.mrb[0].mxu0
    %v4130 = vadd.f32 0.0, %v4129
    %v4131 = vpop.f32.mrb[0].mxu0
    %4132 = vdwg.mxu0
    %v4133 = vadd.f32 %v4048, %v4130
    %s4134 = scalar_lea.vmem %s5, 864
    %v4135 = vld [vmem:[%s4134] sm:$0xff]
    %v4136 = vld [vmem:[%s4134 + $0x8] sm:$0xff]
    %v4137 = vld [vmem:[%s4134 + $0x10] sm:$0xff]
    %v4138 = vld [vmem:[%s4134 + $0x18] sm:$0xf]
    %v4139 = vrot.slane %v3033, 2
    %v4140 = vrot.slane %v3037, 1
    %v4141 = vsel %vm1694, %v4140, %v4139
    %v4142 = vsel %vm1509, %v4141, 0
    %v4145 = vsel %vm1698, %v4138, 0
    %4147 = vmatprep.subr.mxu0 0.0
    %4148 = vmatpush1.msra.mxu0 %v4135
    %4149 = vmatprep.subr.mxu0 0.0
    %4150 = vmatpush1.msra.mxu0 %v4136
    %4151 = vmatprep.subr.mxu0 0.0
    %4152 = vmatpush1.msra.mxu0 %v4137
    %4153 = vmatprep.subr.mxu0 0.0
    %4154 = vmatpush1.msra.mxu0 %v4145
    %4155 = vmatprep.subr.mxu0 0.0
    %4156 = vmatpush1.msra.mxu0 0.0
    %4157 = vmatprep.subr.mxu0 0.0
    %4158 = vmatpush1.msra.mxu0 0.0
    %4159 = vmatprep.subr.mxu0 0.0
    %4160 = vmatpush1.msra.mxu0 0.0
    %4161 = vmatprep.subr.mxu0 0.0
    %4162 = vmatpush1.msra.mxu0 0.0
    %4163 = vmatprep.subr.mxu0 0.0
    %4164 = vmatpush1.msra.mxu0 0.0
    %4165 = vmatprep.subr.mxu0 0.0
    %4166 = vmatpush1.msra.mxu0 0.0
    %4167 = vmatprep.subr.mxu0 0.0
    %4168 = vmatpush1.msra.mxu0 0.0
    %4169 = vmatprep.subr.mxu0 0.0
    %4170 = vmatpush1.msra.mxu0 0.0
    %4171 = vmatprep.subr.mxu0 0.0
    %4172 = vmatpush1.msra.mxu0 0.0
    %4173 = vmatprep.subr.mxu0 0.0
    %4174 = vmatpush1.msra.mxu0 0.0
    %4175 = vmatprep.subr.mxu0 0.0
    %4176 = vmatpush1.msra.mxu0 0.0
    %4177 = vmatprep.subr.mxu0 0.0
    %4178 = vmatpush1.msra.mxu0 0.0
    %4179 = vmatprep.subr.mxu0 0.0
    %4180 = vmatpush1.msra.mxu0 0.0
    %4181 = vmatprep.subr.mxu0 0.0
    %4182 = vmatpush1.msra.mxu0 0.0
    %4183 = vmatprep.subr.mxu0 0.0
    %4184 = vmatpush1.msra.mxu0 0.0
    %4185 = vmatprep.subr.mxu0 0.0
    %4186 = vmatpush1.msra.mxu0 0.0
    %4187 = vmatprep.subr.mxu0 0.0
    %4188 = vmatpush1.msra.mxu0 0.0
    %4189 = vmatprep.subr.mxu0 0.0
    %4190 = vmatpush1.msra.mxu0 0.0
    %4191 = vmatprep.subr.mxu0 0.0
    %4192 = vmatpush1.msra.mxu0 0.0
    %4193 = vmatprep.subr.mxu0 0.0
    %4194 = vmatpush1.msra.mxu0 0.0
    %4195 = vmatprep.subr.mxu0 0.0
    %4196 = vmatpush1.msra.mxu0 0.0
    %4197 = vmatprep.subr.mxu0 0.0
    %4198 = vmatpush1.msra.mxu0 0.0
    %4199 = vmatprep.subr.mxu0 0.0
    %4200 = vmatpush1.msra.mxu0 0.0
    %4201 = vmatprep.subr.mxu0 0.0
    %4202 = vmatpush1.msra.mxu0 0.0
    %4203 = vmatprep.subr.mxu0 0.0
    %4204 = vmatpush1.msra.mxu0 0.0
    %4205 = vmatprep.subr.mxu0 0.0
    %4206 = vmatpush1.msra.mxu0 0.0
    %4207 = vmatprep.subr.mxu0 0.0
    %4208 = vmatpush1.msra.mxu0 0.0
    %4209 = vmatprep.subr.mxu0 0.0
    %4210 = vmatpush1.msra.mxu0 0.0
    %4211 = vmatprep.mubr.f32.mxu0 0.0
    %4212 = vmatmul.mubr.f32.gmra.mrb[0].mxu0 %v4142
    %v4213 = vpop.f32.mrb[0].mxu0
    %v4214 = vadd.f32 0.0, %v4213
    %v4215 = vpop.f32.mrb[0].mxu0
    %4216 = vdwg.mxu0
    %v4217 = vadd.f32 %v4133, %v4214
    %v4218 = vmax.f32 %v1493, 0.0
    %v4219 = vmax.f32 %v1494, 0.0
    %v4220 = vmax.f32 %v1495, 0.0
    %v4221 = vmax.f32 %v1496, 0.0
    %v4222 = vmax.f32 %v1497, 0.0
    %v4223 = vmax.f32 %v1498, 0.0
    %v4224 = vmax.f32 %v1499, 0.0
    %v4225 = vmax.f32 %v1500, 0.0
    %v4226 = vsel %vm1509, %v4218, 0.0
    %v4227 = vsel %vm1509, %v4219, 0.0
    %v4228 = vadd.f32 %v4226, %v4227
    %v4229 = vsel %vm1509, %v4220, 0.0
    %v4230 = vadd.f32 %v4228, %v4229
    %v4231 = vsel %vm1515, %v4221, 0.0
    %v4232 = vadd.f32 %v4230, %v4231
    %v4233 = vsel %vm1509, %v4222, 0.0
    %v4234 = vadd.f32 %v4232, %v4233
    %v4235 = vsel %vm1509, %v4223, 0.0
    %v4236 = vadd.f32 %v4234, %v4235
    %v4237 = vsel %vm1509, %v4224, 0.0
    %v4238 = vadd.f32 %v4236, %v4237
    %v4239 = vsel %vm1515, %v4225, 0.0
    %v4240 = vadd.f32 %v4238, %v4239
    %4241 = vadd.xlane.f32.xlu0 %v4240
    %v4242 = vpop.xlane.xlu0 %4241
    %v4243 = vrot.slane %v4242, 4
    %v4244 = vadd.f32 %v4242, %v4243
    %v4245 = vrot.slane %v4244, 2
    %v4246 = vadd.f32 %v4244, %v4245
    %v4247 = vrot.slane %v4246, 1
    %v4248 = vadd.f32 %v4246, %v4247
    %s4249 = vtos %v4248
    %v4250 = vrcp.pop 1568.0
    %s4251 = vtos %v4250
    %s4252 = smul.f32 %s4249, %s4251
    %v4253 = vmul.f32 %v4218, %v4218
    %v4254 = vmul.f32 %v4219, %v4219
    %v4255 = vmul.f32 %v4220, %v4220
    %v4256 = vmul.f32 %v4221, %v4221
    %v4257 = vmul.f32 %v4222, %v4222
    %v4258 = vmul.f32 %v4223, %v4223
    %v4259 = vmul.f32 %v4224, %v4224
    %v4260 = vmul.f32 %v4225, %v4225
    %v4261 = vsel %vm1509, %v4253, 0.0
    %v4262 = vsel %vm1509, %v4254, 0.0
    %v4263 = vadd.f32 %v4261, %v4262
    %v4264 = vsel %vm1509, %v4255, 0.0
    %v4265 = vadd.f32 %v4263, %v4264
    %v4266 = vsel %vm1515, %v4256, 0.0
    %v4267 = vadd.f32 %v4265, %v4266
    %v4268 = vsel %vm1509, %v4257, 0.0
    %v4269 = vadd.f32 %v4267, %v4268
    %v4270 = vsel %vm1509, %v4258, 0.0
    %v4271 = vadd.f32 %v4269, %v4270
    %v4272 = vsel %vm1509, %v4259, 0.0
    %v4273 = vadd.f32 %v4271, %v4272
    %v4274 = vsel %vm1515, %v4260, 0.0
    %v4275 = vadd.f32 %v4273, %v4274
    %4276 = vadd.xlane.f32.xlu0 %v4275
    %v4277 = vpop.xlane.xlu0 %4276
    %v4278 = vrot.slane %v4277, 4
    %v4279 = vadd.f32 %v4277, %v4278
    %v4280 = vrot.slane %v4279, 2
    %v4281 = vadd.f32 %v4279, %v4280
    %v4282 = vrot.slane %v4281, 1
    %v4283 = vadd.f32 %v4281, %v4282
    %s4284 = vtos %v4283
    %v4285 = vrcp.pop 1568.0
    %s4286 = vtos %v4285
    %s4287 = smul.f32 %s4284, %s4286
    %s4288 = smul.f32 %s4252, %s4252
    %s4289 = ssub.f32 %s4287, %s4288
    %s4290 = smax.f32 %s4289, 0.0
    %s4291 = sadd.f32 %s4290, 1e-05
    %v4292 = vstv %s4291
    %v4293 = vrsqrt.pop %v4292
    %s4294 = vtos %v4293
    %s4295 = sld [smem:[#allocation7 + $0x2]]
    %s4296 = smul.f32 %s4294, %s4295
    %s4297 = sld [smem:[#allocation8 + $0x2]]
    %s4298 = smul.f32 %s4252, %s4296
    %s4299 = ssub.f32 %s4297, %s4298
    %v4300 = vstv %s4296
    %v4301 = vmul.f32 %v4218, %v4300
    %v4302 = vmul.f32 %v4219, %v4300
    %v4303 = vmul.f32 %v4220, %v4300
    %v4304 = vmul.f32 %v4221, %v4300
    %v4305 = vmul.f32 %v4222, %v4300
    %v4306 = vmul.f32 %v4223, %v4300
    %v4307 = vmul.f32 %v4224, %v4300
    %v4308 = vmul.f32 %v4225, %v4300
    %v4309 = vstv %s4299
    %v4310 = vadd.f32 %v4301, %v4309
    %v4311 = vadd.f32 %v4302, %v4309
    %v4312 = vadd.f32 %v4303, %v4309
    %v4313 = vadd.f32 %v4304, %v4309
    %v4314 = vadd.f32 %v4305, %v4309
    %v4315 = vadd.f32 %v4306, %v4309
    %v4316 = vadd.f32 %v4307, %v4309
    %v4317 = vadd.f32 %v4308, %v4309
    %4326 = vrot.lane.b32.xlu0 %v4310, 127
    %v4327 = vpop.permute.xlu0 %4326
    %4328 = vrot.lane.b32.xlu0 %v4311, 127
    %v4329 = vpop.permute.xlu0 %4328
    %4330 = vrot.lane.b32.xlu0 %v4312, 127
    %v4331 = vpop.permute.xlu0 %4330
    %4332 = vrot.lane.b32.xlu0 %v4313, 127
    %v4333 = vpop.permute.xlu0 %4332
    %4334 = vrot.lane.b32.xlu0 %v4314, 127
    %v4335 = vpop.permute.xlu0 %4334
    %4336 = vrot.lane.b32.xlu0 %v4315, 127
    %v4337 = vpop.permute.xlu0 %4336
    %4338 = vrot.lane.b32.xlu0 %v4316, 127
    %v4339 = vpop.permute.xlu0 %4338
    %4340 = vrot.lane.b32.xlu0 %v4317, 127
    %v4341 = vpop.permute.xlu0 %4340
    %v4350 = vmax.f32 %v4310, %v4327
    %v4351 = vmax.f32 %v4311, %v4329
    %v4352 = vmax.f32 %v4312, %v4331
    %v4353 = vmax.f32 %v4313, %v4333
    %v4354 = vmax.f32 %v4314, %v4335
    %v4355 = vmax.f32 %v4315, %v4337
    %v4356 = vmax.f32 %v4316, %v4339
    %v4357 = vmax.f32 %v4317, %v4341
    %v4366 = vrot.slane %v4350, 1
    %v4367 = vrot.slane %v4351, 1
    %v4368 = vsel %vm461, %v4366, %v4367
    %v4369 = vrot.slane %v4352, 1
    %v4370 = vsel %vm461, %v4367, %v4369
    %v4371 = vrot.slane %v4353, 1
    %v4372 = vsel %vm461, %v4369, %v4371
    %v4373 = vrot.slane %v4354, 1
    %v4374 = vrot.slane %v4355, 1
    %v4375 = vsel %vm461, %v4373, %v4374
    %v4376 = vrot.slane %v4356, 1
    %v4377 = vsel %vm461, %v4374, %v4376
    %v4378 = vrot.slane %v4357, 1
    %v4379 = vsel %vm461, %v4376, %v4378
    %v4388 = vmax.f32 %v4350, %v4368
    %v4389 = vmax.f32 %v4351, %v4370
    %v4390 = vmax.f32 %v4352, %v4372
    %v4391 = vmax.f32 %v4353, %v4371
    %v4392 = vmax.f32 %v4354, %v4375
    %v4393 = vmax.f32 %v4355, %v4377
    %v4394 = vmax.f32 %v4356, %v4379
    %v4395 = vmax.f32 %v4357, %v4378
    %s4396 = scalar_lea.vmem %s5, 896
    %v4397 = vld [vmem:[%s4396] sm:$0xff]
    %v4398 = vld [vmem:[%s4396 + $0x8] sm:$0xff]
    %v4399 = vld [vmem:[%s4396 + $0x10] sm:$0xff]
    %v4400 = vld [vmem:[%s4396 + $0x18] sm:$0xf]
    %v4403 = vrot.slane %v4392, 7
    %v4404 = vsel %vm1694, %v4403, %v4388
    %v4405 = vsel %vm1509, %v4404, 0
    %v4408 = vsel %vm1698, %v4400, 0
    %4410 = vmatprep.subr.mxu0 0.0
    %4411 = vmatpush1.msra.mxu0 %v4397
    %4412 = vmatprep.subr.mxu0 0.0
    %4413 = vmatpush1.msra.mxu0 %v4398
    %4414 = vmatprep.subr.mxu0 0.0
    %4415 = vmatpush1.msra.mxu0 %v4399
    %4416 = vmatprep.subr.mxu0 0.0
    %4417 = vmatpush1.msra.mxu0 %v4408
    %4418 = vmatprep.subr.mxu0 0.0
    %4419 = vmatpush1.msra.mxu0 0.0
    %4420 = vmatprep.subr.mxu0 0.0
    %4421 = vmatpush1.msra.mxu0 0.0
    %4422 = vmatprep.subr.mxu0 0.0
    %4423 = vmatpush1.msra.mxu0 0.0
    %4424 = vmatprep.subr.mxu0 0.0
    %4425 = vmatpush1.msra.mxu0 0.0
    %4426 = vmatprep.subr.mxu0 0.0
    %4427 = vmatpush1.msra.mxu0 0.0
    %4428 = vmatprep.subr.mxu0 0.0
    %4429 = vmatpush1.msra.mxu0 0.0
    %4430 = vmatprep.subr.mxu0 0.0
    %4431 = vmatpush1.msra.mxu0 0.0
    %4432 = vmatprep.subr.mxu0 0.0
    %4433 = vmatpush1.msra.mxu0 0.0
    %4434 = vmatprep.subr.mxu0 0.0
    %4435 = vmatpush1.msra.mxu0 0.0
    %4436 = vmatprep.subr.mxu0 0.0
    %4437 = vmatpush1.msra.mxu0 0.0
    %4438 = vmatprep.subr.mxu0 0.0
    %4439 = vmatpush1.msra.mxu0 0.0
    %4440 = vmatprep.subr.mxu0 0.0
    %4441 = vmatpush1.msra.mxu0 0.0
    %4442 = vmatprep.subr.mxu0 0.0
    %4443 = vmatpush1.msra.mxu0 0.0
    %4444 = vmatprep.subr.mxu0 0.0
    %4445 = vmatpush1.msra.mxu0 0.0
    %4446 = vmatprep.subr.mxu0 0.0
    %4447 = vmatpush1.msra.mxu0 0.0
    %4448 = vmatprep.subr.mxu0 0.0
    %4449 = vmatpush1.msra.mxu0 0.0
    %4450 = vmatprep.subr.mxu0 0.0
    %4451 = vmatpush1.msra.mxu0 0.0
    %4452 = vmatprep.subr.mxu0 0.0
    %4453 = vmatpush1.msra.mxu0 0.0
    %4454 = vmatprep.subr.mxu0 0.0
    %4455 = vmatpush1.msra.mxu0 0.0
    %4456 = vmatprep.subr.mxu0 0.0
    %4457 = vmatpush1.msra.mxu0 0.0
    %4458 = vmatprep.subr.mxu0 0.0
    %4459 = vmatpush1.msra.mxu0 0.0
    %4460 = vmatprep.subr.mxu0 0.0
    %4461 = vmatpush1.msra.mxu0 0.0
    %4462 = vmatprep.subr.mxu0 0.0
    %4463 = vmatpush1.msra.mxu0 0.0
    %4464 = vmatprep.subr.mxu0 0.0
    %4465 = vmatpush1.msra.mxu0 0.0
    %4466 = vmatprep.subr.mxu0 0.0
    %4467 = vmatpush1.msra.mxu0 0.0
    %4468 = vmatprep.subr.mxu0 0.0
    %4469 = vmatpush1.msra.mxu0 0.0
    %4470 = vmatprep.subr.mxu0 0.0
    %4471 = vmatpush1.msra.mxu0 0.0
    %4472 = vmatprep.subr.mxu0 0.0
    %4473 = vmatpush1.msra.mxu0 0.0
    %4474 = vmatprep.mubr.f32.mxu0 0.0
    %4475 = vmatmul.mubr.f32.gmra.mrb[0].mxu0 %v4405
    %v4476 = vpop.f32.mrb[0].mxu0
    %v4477 = vadd.f32 0.0, %v4476
    %v4478 = vpop.f32.mrb[0].mxu0
    %4479 = vdwg.mxu0
    %v4480 = vadd.f32 %v4217, %v4477
    %s4481 = scalar_lea.vmem %s5, 928
    %v4482 = vld [vmem:[%s4481] sm:$0xff]
    %v4483 = vld [vmem:[%s4481 + $0x8] sm:$0xff]
    %v4484 = vld [vmem:[%s4481 + $0x10] sm:$0xff]
    %v4485 = vld [vmem:[%s4481 + $0x18] sm:$0xf]
    %v4486 = vrot.slane %v4388, 2
    %v4487 = vrot.slane %v4392, 1
    %v4488 = vsel %vm1694, %v4487, %v4486
    %v4489 = vsel %vm1509, %v4488, 0
    %v4492 = vsel %vm1698, %v4485, 0
    %4494 = vmatprep.subr.mxu0 0.0
    %4495 = vmatpush1.msra.mxu0 %v4482
    %4496 = vmatprep.subr.mxu0 0.0
    %4497 = vmatpush1.msra.mxu0 %v4483
    %4498 = vmatprep.subr.mxu0 0.0
    %4499 = vmatpush1.msra.mxu0 %v4484
    %4500 = vmatprep.subr.mxu0 0.0
    %4501 = vmatpush1.msra.mxu0 %v4492
    %4502 = vmatprep.subr.mxu0 0.0
    %4503 = vmatpush1.msra.mxu0 0.0
    %4504 = vmatprep.subr.mxu0 0.0
    %4505 = vmatpush1.msra.mxu0 0.0
    %4506 = vmatprep.subr.mxu0 0.0
    %4507 = vmatpush1.msra.mxu0 0.0
    %4508 = vmatprep.subr.mxu0 0.0
    %4509 = vmatpush1.msra.mxu0 0.0
    %4510 = vmatprep.subr.mxu0 0.0
    %4511 = vmatpush1.msra.mxu0 0.0
    %4512 = vmatprep.subr.mxu0 0.0
    %4513 = vmatpush1.msra.mxu0 0.0
    %4514 = vmatprep.subr.mxu0 0.0
    %4515 = vmatpush1.msra.mxu0 0.0
    %4516 = vmatprep.subr.mxu0 0.0
    %4517 = vmatpush1.msra.mxu0 0.0
    %4518 = vmatprep.subr.mxu0 0.0
    %4519 = vmatpush1.msra.mxu0 0.0
    %4520 = vmatprep.subr.mxu0 0.0
    %4521 = vmatpush1.msra.mxu0 0.0
    %4522 = vmatprep.subr.mxu0 0.0
    %4523 = vmatpush1.msra.mxu0 0.0
    %4524 = vmatprep.subr.mxu0 0.0
    %4525 = vmatpush1.msra.mxu0 0.0
    %4526 = vmatprep.subr.mxu0 0.0
    %4527 = vmatpush1.msra.mxu0 0.0
    %4528 = vmatprep.subr.mxu0 0.0
    %4529 = vmatpush1.msra.mxu0 0.0
    %4530 = vmatprep.subr.mxu0 0.0
    %4531 = vmatpush1.msra.mxu0 0.0
    %4532 = vmatprep.subr.mxu0 0.0
    %4533 = vmatpush1.msra.mxu0 0.0
    %4534 = vmatprep.subr.mxu0 0.0
    %4535 = vmatpush1.msra.mxu0 0.0
    %4536 = vmatprep.subr.mxu0 0.0
    %4537 = vmatpush1.msra.mxu0 0.0
    %4538 = vmatprep.subr.mxu0 0.0
    %4539 = vmatpush1.msra.mxu0 0.0
    %4540 = vmatprep.subr.mxu0 0.0
    %4541 = vmatpush1.msra.mxu0 0.0
    %4542 = vmatprep.subr.mxu0 0.0
    %4543 = vmatpush1.msra.mxu0 0.0
    %4544 = vmatprep.subr.mxu0 0.0
    %4545 = vmatpush1.msra.mxu0 0.0
    %4546 = vmatprep.subr.mxu0 0.0
    %4547 = vmatpush1.msra.mxu0 0.0
    %4548 = vmatprep.subr.mxu0 0.0
    %4549 = vmatpush1.msra.mxu0 0.0
    %4550 = vmatprep.subr.mxu0 0.0
    %4551 = vmatpush1.msra.mxu0 0.0
    %4552 = vmatprep.subr.mxu0 0.0
    %4553 = vmatpush1.msra.mxu0 0.0
    %4554 = vmatprep.subr.mxu0 0.0
    %4555 = vmatpush1.msra.mxu0 0.0
    %4556 = vmatprep.subr.mxu0 0.0
    %4557 = vmatpush1.msra.mxu0 0.0
    %4558 = vmatprep.mubr.f32.mxu0 0.0
    %4559 = vmatmul.mubr.f32.gmra.mrb[0].mxu0 %v4489
    %v4560 = vpop.f32.mrb[0].mxu0
    %v4561 = vadd.f32 0.0, %v4560
    %v4562 = vpop.f32.mrb[0].mxu0
    %4563 = vdwg.mxu0
    %v4564 = vadd.f32 %v4480, %v4561
    %s4565 = scalar_lea.vmem %s5, 960
    %v4566 = vld [vmem:[%s4565] sm:$0xff]
    %v4567 = vld [vmem:[%s4565 + $0x8] sm:$0xff]
    %v4568 = vld [vmem:[%s4565 + $0x10] sm:$0xff]
    %v4569 = vld [vmem:[%s4565 + $0x18] sm:$0xf]
    %v4570 = vrot.slane %v4388, 4
    %v4571 = vrot.slane %v4392, 3
    %v4572 = vsel %vm1694, %v4571, %v4570
    %v4573 = vsel %vm1509, %v4572, 0
    %v4576 = vsel %vm1698, %v4569, 0
    %4578 = vmatprep.subr.mxu0 0.0
    %4579 = vmatpush1.msra.mxu0 %v4566
    %4580 = vmatprep.subr.mxu0 0.0
    %4581 = vmatpush1.msra.mxu0 %v4567
    %4582 = vmatprep.subr.mxu0 0.0
    %4583 = vmatpush1.msra.mxu0 %v4568
    %4584 = vmatprep.subr.mxu0 0.0
    %4585 = vmatpush1.msra.mxu0 %v4576
    %4586 = vmatprep.subr.mxu0 0.0
    %4587 = vmatpush1.msra.mxu0 0.0
    %4588 = vmatprep.subr.mxu0 0.0
    %4589 = vmatpush1.msra.mxu0 0.0
    %4590 = vmatprep.subr.mxu0 0.0
    %4591 = vmatpush1.msra.mxu0 0.0
    %4592 = vmatprep.subr.mxu0 0.0
    %4593 = vmatpush1.msra.mxu0 0.0
    %4594 = vmatprep.subr.mxu0 0.0
    %4595 = vmatpush1.msra.mxu0 0.0
    %4596 = vmatprep.subr.mxu0 0.0
    %4597 = vmatpush1.msra.mxu0 0.0
    %4598 = vmatprep.subr.mxu0 0.0
    %4599 = vmatpush1.msra.mxu0 0.0
    %4600 = vmatprep.subr.mxu0 0.0
    %4601 = vmatpush1.msra.mxu0 0.0
    %4602 = vmatprep.subr.mxu0 0.0
    %4603 = vmatpush1.msra.mxu0 0.0
    %4604 = vmatprep.subr.mxu0 0.0
    %4605 = vmatpush1.msra.mxu0 0.0
    %4606 = vmatprep.subr.mxu0 0.0
    %4607 = vmatpush1.msra.mxu0 0.0
    %4608 = vmatprep.subr.mxu0 0.0
    %4609 = vmatpush1.msra.mxu0 0.0
    %4610 = vmatprep.subr.mxu0 0.0
    %4611 = vmatpush1.msra.mxu0 0.0
    %4612 = vmatprep.subr.mxu0 0.0
    %4613 = vmatpush1.msra.mxu0 0.0
    %4614 = vmatprep.subr.mxu0 0.0
    %4615 = vmatpush1.msra.mxu0 0.0
    %4616 = vmatprep.subr.mxu0 0.0
    %4617 = vmatpush1.msra.mxu0 0.0
    %4618 = vmatprep.subr.mxu0 0.0
    %4619 = vmatpush1.msra.mxu0 0.0
    %4620 = vmatprep.subr.mxu0 0.0
    %4621 = vmatpush1.msra.mxu0 0.0
    %4622 = vmatprep.subr.mxu0 0.0
    %4623 = vmatpush1.msra.mxu0 0.0
    %4624 = vmatprep.subr.mxu0 0.0
    %4625 = vmatpush1.msra.mxu0 0.0
    %4626 = vmatprep.subr.mxu0 0.0
    %4627 = vmatpush1.msra.mxu0 0.0
    %4628 = vmatprep.subr.mxu0 0.0
    %4629 = vmatpush1.msra.mxu0 0.0
    %4630 = vmatprep.subr.mxu0 0.0
    %4631 = vmatpush1.msra.mxu0 0.0
    %4632 = vmatprep.subr.mxu0 0.0
    %4633 = vmatpush1.msra.mxu0 0.0
    %4634 = vmatprep.subr.mxu0 0.0
    %4635 = vmatpush1.msra.mxu0 0.0
    %4636 = vmatprep.subr.mxu0 0.0
    %4637 = vmatpush1.msra.mxu0 0.0
    %4638 = vmatprep.subr.mxu0 0.0
    %4639 = vmatpush1.msra.mxu0 0.0
    %4640 = vmatprep.subr.mxu0 0.0
    %4641 = vmatpush1.msra.mxu0 0.0
    %4642 = vmatprep.mubr.f32.mxu0 0.0
    %4643 = vmatmul.mubr.f32.gmra.mrb[0].mxu0 %v4573
    %v4644 = vpop.f32.mrb[0].mxu0
    %v4645 = vadd.f32 0.0, %v4644
    %v4646 = vpop.f32.mrb[0].mxu0
    %4647 = vdwg.mxu0
    %v4648 = vadd.f32 %v4564, %v4645
    %s4649 = scalar_lea.vmem %s5, 992
    %v4650 = vld [vmem:[%s4649] sm:$0xff]
    %v4651 = vld [vmem:[%s4649 + $0x8] sm:$0xff]
    %v4652 = vld [vmem:[%s4649 + $0x10] sm:$0xff]
    %v4653 = vld [vmem:[%s4649 + $0x18] sm:$0xf]
    %v4654 = vrot.slane %v4388, 6
    %v4655 = vrot.slane %v4392, 5
    %v4656 = vsel %vm1694, %v4655, %v4654
    %v4657 = vsel %vm1509, %v4656, 0
    %v4660 = vsel %vm1698, %v4653, 0
    %4662 = vmatprep.subr.mxu0 0.0
    %4663 = vmatpush1.msra.mxu0 %v4650
    %4664 = vmatprep.subr.mxu0 0.0
    %4665 = vmatpush1.msra.mxu0 %v4651
    %4666 = vmatprep.subr.mxu0 0.0
    %4667 = vmatpush1.msra.mxu0 %v4652
    %4668 = vmatprep.subr.mxu0 0.0
    %4669 = vmatpush1.msra.mxu0 %v4660
    %4670 = vmatprep.subr.mxu0 0.0
    %4671 = vmatpush1.msra.mxu0 0.0
    %4672 = vmatprep.subr.mxu0 0.0
    %4673 = vmatpush1.msra.mxu0 0.0
    %4674 = vmatprep.subr.mxu0 0.0
    %4675 = vmatpush1.msra.mxu0 0.0
    %4676 = vmatprep.subr.mxu0 0.0
    %4677 = vmatpush1.msra.mxu0 0.0
    %4678 = vmatprep.subr.mxu0 0.0
    %4679 = vmatpush1.msra.mxu0 0.0
    %4680 = vmatprep.subr.mxu0 0.0
    %4681 = vmatpush1.msra.mxu0 0.0
    %4682 = vmatprep.subr.mxu0 0.0
    %4683 = vmatpush1.msra.mxu0 0.0
    %4684 = vmatprep.subr.mxu0 0.0
    %4685 = vmatpush1.msra.mxu0 0.0
    %4686 = vmatprep.subr.mxu0 0.0
    %4687 = vmatpush1.msra.mxu0 0.0
    %4688 = vmatprep.subr.mxu0 0.0
    %4689 = vmatpush1.msra.mxu0 0.0
    %4690 = vmatprep.subr.mxu0 0.0
    %4691 = vmatpush1.msra.mxu0 0.0
    %4692 = vmatprep.subr.mxu0 0.0
    %4693 = vmatpush1.msra.mxu0 0.0
    %4694 = vmatprep.subr.mxu0 0.0
    %4695 = vmatpush1.msra.mxu0 0.0
    %4696 = vmatprep.subr.mxu0 0.0
    %4697 = vmatpush1.msra.mxu0 0.0
    %4698 = vmatprep.subr.mxu0 0.0
    %4699 = vmatpush1.msra.mxu0 0.0
    %4700 = vmatprep.subr.mxu0 0.0
    %4701 = vmatpush1.msra.mxu0 0.0
    %4702 = vmatprep.subr.mxu0 0.0
    %4703 = vmatpush1.msra.mxu0 0.0
    %4704 = vmatprep.subr.mxu0 0.0
    %4705 = vmatpush1.msra.mxu0 0.0
    %4706 = vmatprep.subr.mxu0 0.0
    %4707 = vmatpush1.msra.mxu0 0.0
    %4708 = vmatprep.subr.mxu0 0.0
    %4709 = vmatpush1.msra.mxu0 0.0
    %4710 = vmatprep.subr.mxu0 0.0
    %4711 = vmatpush1.msra.mxu0 0.0
    %4712 = vmatprep.subr.mxu0 0.0
    %4713 = vmatpush1.msra.mxu0 0.0
    %4714 = vmatprep.subr.mxu0 0.0
    %4715 = vmatpush1.msra.mxu0 0.0
    %4716 = vmatprep.subr.mxu0 0.0
    %4717 = vmatpush1.msra.mxu0 0.0
    %4718 = vmatprep.subr.mxu0 0.0
    %4719 = vmatpush1.msra.mxu0 0.0
    %4720 = vmatprep.subr.mxu0 0.0
    %4721 = vmatpush1.msra.mxu0 0.0
    %4722 = vmatprep.subr.mxu0 0.0
    %4723 = vmatpush1.msra.mxu0 0.0
    %4724 = vmatprep.subr.mxu0 0.0
    %4725 = vmatpush1.msra.mxu0 0.0
    %4726 = vmatprep.mubr.f32.mxu0 0.0
    %4727 = vmatmul.mubr.f32.gmra.mrb[0].mxu0 %v4657
    %v4728 = vpop.f32.mrb[0].mxu0
    %v4729 = vadd.f32 0.0, %v4728
    %v4730 = vpop.f32.mrb[0].mxu0
    %4731 = vdwg.mxu0
    %v4732 = vadd.f32 %v4648, %v4729
    %s4733 = scalar_lea.vmem %s5, 1024
    %v4734 = vld [vmem:[%s4733] sm:$0xff]
    %v4735 = vld [vmem:[%s4733 + $0x8] sm:$0xff]
    %v4736 = vld [vmem:[%s4733 + $0x10] sm:$0xff]
    %v4737 = vld [vmem:[%s4733 + $0x18] sm:$0xf]
    %v4740 = vrot.slane %v4393, 7
    %v4741 = vsel %vm1694, %v4740, %v4389
    %v4742 = vsel %vm1509, %v4741, 0
    %v4745 = vsel %vm1698, %v4737, 0
    %4747 = vmatprep.subr.mxu0 0.0
    %4748 = vmatpush1.msra.mxu0 %v4734
    %4749 = vmatprep.subr.mxu0 0.0
    %4750 = vmatpush1.msra.mxu0 %v4735
    %4751 = vmatprep.subr.mxu0 0.0
    %4752 = vmatpush1.msra.mxu0 %v4736
    %4753 = vmatprep.subr.mxu0 0.0
    %4754 = vmatpush1.msra.mxu0 %v4745
    %4755 = vmatprep.subr.mxu0 0.0
    %4756 = vmatpush1.msra.mxu0 0.0
    %4757 = vmatprep.subr.mxu0 0.0
    %4758 = vmatpush1.msra.mxu0 0.0
    %4759 = vmatprep.subr.mxu0 0.0
    %4760 = vmatpush1.msra.mxu0 0.0
    %4761 = vmatprep.subr.mxu0 0.0
    %4762 = vmatpush1.msra.mxu0 0.0
    %4763 = vmatprep.subr.mxu0 0.0
    %4764 = vmatpush1.msra.mxu0 0.0
    %4765 = vmatprep.subr.mxu0 0.0
    %4766 = vmatpush1.msra.mxu0 0.0
    %4767 = vmatprep.subr.mxu0 0.0
    %4768 = vmatpush1.msra.mxu0 0.0
    %4769 = vmatprep.subr.mxu0 0.0
    %4770 = vmatpush1.msra.mxu0 0.0
    %4771 = vmatprep.subr.mxu0 0.0
    %4772 = vmatpush1.msra.mxu0 0.0
    %4773 = vmatprep.subr.mxu0 0.0
    %4774 = vmatpush1.msra.mxu0 0.0
    %4775 = vmatprep.subr.mxu0 0.0
    %4776 = vmatpush1.msra.mxu0 0.0
    %4777 = vmatprep.subr.mxu0 0.0
    %4778 = vmatpush1.msra.mxu0 0.0
    %4779 = vmatprep.subr.mxu0 0.0
    %4780 = vmatpush1.msra.mxu0 0.0
    %4781 = vmatprep.subr.mxu0 0.0
    %4782 = vmatpush1.msra.mxu0 0.0
    %4783 = vmatprep.subr.mxu0 0.0
    %4784 = vmatpush1.msra.mxu0 0.0
    %4785 = vmatprep.subr.mxu0 0.0
    %4786 = vmatpush1.msra.mxu0 0.0
    %4787 = vmatprep.subr.mxu0 0.0
    %4788 = vmatpush1.msra.mxu0 0.0
    %4789 = vmatprep.subr.mxu0 0.0
    %4790 = vmatpush1.msra.mxu0 0.0
    %4791 = vmatprep.subr.mxu0 0.0
    %4792 = vmatpush1.msra.mxu0 0.0
    %4793 = vmatprep.subr.mxu0 0.0
    %4794 = vmatpush1.msra.mxu0 0.0
    %4795 = vmatprep.subr.mxu0 0.0
    %4796 = vmatpush1.msra.mxu0 0.0
    %4797 = vmatprep.subr.mxu0 0.0
    %4798 = vmatpush1.msra.mxu0 0.0
    %4799 = vmatprep.subr.mxu0 0.0
    %4800 = vmatpush1.msra.mxu0 0.0
    %4801 = vmatprep.subr.mxu0 0.0
    %4802 = vmatpush1.msra.mxu0 0.0
    %4803 = vmatprep.subr.mxu0 0.0
    %4804 = vmatpush1.msra.mxu0 0.0
    %4805 = vmatprep.subr.mxu0 0.0
    %4806 = vmatpush1.msra.mxu0 0.0
    %4807 = vmatprep.subr.mxu0 0.0
    %4808 = vmatpush1.msra.mxu0 0.0
    %4809 = vmatprep.subr.mxu0 0.0
    %4810 = vmatpush1.msra.mxu0 0.0
    %4811 = vmatprep.mubr.f32.mxu0 0.0
    %4812 = vmatmul.mubr.f32.gmra.mrb[0].mxu0 %v4742
    %v4813 = vpop.f32.mrb[0].mxu0
    %v4814 = vadd.f32 0.0, %v4813
    %v4815 = vpop.f32.mrb[0].mxu0
    %4816 = vdwg.mxu0
    %v4817 = vadd.f32 %v4732, %v4814
    %s4818 = scalar_lea.vmem %s5, 1056
    %v4819 = vld [vmem:[%s4818] sm:$0xff]
    %v4820 = vld [vmem:[%s4818 + $0x8] sm:$0xff]
    %v4821 = vld [vmem:[%s4818 + $0x10] sm:$0xff]
    %v4822 = vld [vmem:[%s4818 + $0x18] sm:$0xf]
    %v4823 = vrot.slane %v4389, 2
    %v4824 = vrot.slane %v4393, 1
    %v4825 = vsel %vm1694, %v4824, %v4823
    %v4826 = vsel %vm1509, %v4825, 0
    %v4829 = vsel %vm1698, %v4822, 0
    %4831 = vmatprep.subr.mxu0 0.0
    %4832 = vmatpush1.msra.mxu0 %v4819
    %4833 = vmatprep.subr.mxu0 0.0
    %4834 = vmatpush1.msra.mxu0 %v4820
    %4835 = vmatprep.subr.mxu0 0.0
    %4836 = vmatpush1.msra.mxu0 %v4821
    %4837 = vmatprep.subr.mxu0 0.0
    %4838 = vmatpush1.msra.mxu0 %v4829
    %4839 = vmatprep.subr.mxu0 0.0
    %4840 = vmatpush1.msra.mxu0 0.0
    %4841 = vmatprep.subr.mxu0 0.0
    %4842 = vmatpush1.msra.mxu0 0.0
    %4843 = vmatprep.subr.mxu0 0.0
    %4844 = vmatpush1.msra.mxu0 0.0
    %4845 = vmatprep.subr.mxu0 0.0
    %4846 = vmatpush1.msra.mxu0 0.0
    %4847 = vmatprep.subr.mxu0 0.0
    %4848 = vmatpush1.msra.mxu0 0.0
    %4849 = vmatprep.subr.mxu0 0.0
    %4850 = vmatpush1.msra.mxu0 0.0
    %4851 = vmatprep.subr.mxu0 0.0
    %4852 = vmatpush1.msra.mxu0 0.0
    %4853 = vmatprep.subr.mxu0 0.0
    %4854 = vmatpush1.msra.mxu0 0.0
    %4855 = vmatprep.subr.mxu0 0.0
    %4856 = vmatpush1.msra.mxu0 0.0
    %4857 = vmatprep.subr.mxu0 0.0
    %4858 = vmatpush1.msra.mxu0 0.0
    %4859 = vmatprep.subr.mxu0 0.0
    %4860 = vmatpush1.msra.mxu0 0.0
    %4861 = vmatprep.subr.mxu0 0.0
    %4862 = vmatpush1.msra.mxu0 0.0
    %4863 = vmatprep.subr.mxu0 0.0
    %4864 = vmatpush1.msra.mxu0 0.0
    %4865 = vmatprep.subr.mxu0 0.0
    %4866 = vmatpush1.msra.mxu0 0.0
    %4867 = vmatprep.subr.mxu0 0.0
    %4868 = vmatpush1.msra.mxu0 0.0
    %4869 = vmatprep.subr.mxu0 0.0
    %4870 = vmatpush1.msra.mxu0 0.0
    %4871 = vmatprep.subr.mxu0 0.0
    %4872 = vmatpush1.msra.mxu0 0.0
    %4873 = vmatprep.subr.mxu0 0.0
    %4874 = vmatpush1.msra.mxu0 0.0
    %4875 = vmatprep.subr.mxu0 0.0
    %4876 = vmatpush1.msra.mxu0 0.0
    %4877 = vmatprep.subr.mxu0 0.0
    %4878 = vmatpush1.msra.mxu0 0.0
    %4879 = vmatprep.subr.mxu0 0.0
    %4880 = vmatpush1.msra.mxu0 0.0
    %4881 = vmatprep.subr.mxu0 0.0
    %4882 = vmatpush1.msra.mxu0 0.0
    %4883 = vmatprep.subr.mxu0 0.0
    %4884 = vmatpush1.msra.mxu0 0.0
    %4885 = vmatprep.subr.mxu0 0.0
    %4886 = vmatpush1.msra.mxu0 0.0
    %4887 = vmatprep.subr.mxu0 0.0
    %4888 = vmatpush1.msra.mxu0 0.0
    %4889 = vmatprep.subr.mxu0 0.0
    %4890 = vmatpush1.msra.mxu0 0.0
    %4891 = vmatprep.subr.mxu0 0.0
    %4892 = vmatpush1.msra.mxu0 0.0
    %4893 = vmatprep.subr.mxu0 0.0
    %4894 = vmatpush1.msra.mxu0 0.0
    %4895 = vmatprep.mubr.f32.mxu0 0.0
    %4896 = vmatmul.mubr.f32.gmra.mrb[0].mxu0 %v4826
    %v4897 = vpop.f32.mrb[0].mxu0
    %v4898 = vadd.f32 0.0, %v4897
    %v4899 = vpop.f32.mrb[0].mxu0
    %4900 = vdwg.mxu0
    %v4901 = vadd.f32 %v4817, %v4898
    %s4902 = scalar_lea.vmem %s5, 1088
    %v4903 = vld [vmem:[%s4902] sm:$0xff]
    %v4904 = vld [vmem:[%s4902 + $0x8] sm:$0xff]
    %v4905 = vld [vmem:[%s4902 + $0x10] sm:$0xff]
    %v4906 = vld [vmem:[%s4902 + $0x18] sm:$0xf]
    %v4907 = vrot.slane %v4389, 4
    %v4908 = vrot.slane %v4393, 3
    %v4909 = vsel %vm1694, %v4908, %v4907
    %v4910 = vsel %vm1509, %v4909, 0
    %v4913 = vsel %vm1698, %v4906, 0
    %4915 = vmatprep.subr.mxu0 0.0
    %4916 = vmatpush1.msra.mxu0 %v4903
    %4917 = vmatprep.subr.mxu0 0.0
    %4918 = vmatpush1.msra.mxu0 %v4904
    %4919 = vmatprep.subr.mxu0 0.0
    %4920 = vmatpush1.msra.mxu0 %v4905
    %4921 = vmatprep.subr.mxu0 0.0
    %4922 = vmatpush1.msra.mxu0 %v4913
    %4923 = vmatprep.subr.mxu0 0.0
    %4924 = vmatpush1.msra.mxu0 0.0
    %4925 = vmatprep.subr.mxu0 0.0
    %4926 = vmatpush1.msra.mxu0 0.0
    %4927 = vmatprep.subr.mxu0 0.0
    %4928 = vmatpush1.msra.mxu0 0.0
    %4929 = vmatprep.subr.mxu0 0.0
    %4930 = vmatpush1.msra.mxu0 0.0
    %4931 = vmatprep.subr.mxu0 0.0
    %4932 = vmatpush1.msra.mxu0 0.0
    %4933 = vmatprep.subr.mxu0 0.0
    %4934 = vmatpush1.msra.mxu0 0.0
    %4935 = vmatprep.subr.mxu0 0.0
    %4936 = vmatpush1.msra.mxu0 0.0
    %4937 = vmatprep.subr.mxu0 0.0
    %4938 = vmatpush1.msra.mxu0 0.0
    %4939 = vmatprep.subr.mxu0 0.0
    %4940 = vmatpush1.msra.mxu0 0.0
    %4941 = vmatprep.subr.mxu0 0.0
    %4942 = vmatpush1.msra.mxu0 0.0
    %4943 = vmatprep.subr.mxu0 0.0
    %4944 = vmatpush1.msra.mxu0 0.0
    %4945 = vmatprep.subr.mxu0 0.0
    %4946 = vmatpush1.msra.mxu0 0.0
    %4947 = vmatprep.subr.mxu0 0.0
    %4948 = vmatpush1.msra.mxu0 0.0
    %4949 = vmatprep.subr.mxu0 0.0
    %4950 = vmatpush1.msra.mxu0 0.0
    %4951 = vmatprep.subr.mxu0 0.0
    %4952 = vmatpush1.msra.mxu0 0.0
    %4953 = vmatprep.subr.mxu0 0.0
    %4954 = vmatpush1.msra.mxu0 0.0
    %4955 = vmatprep.subr.mxu0 0.0
    %4956 = vmatpush1.msra.mxu0 0.0
    %4957 = vmatprep.subr.mxu0 0.0
    %4958 = vmatpush1.msra.mxu0 0.0
    %4959 = vmatprep.subr.mxu0 0.0
    %4960 = vmatpush1.msra.mxu0 0.0
    %4961 = vmatprep.subr.mxu0 0.0
    %4962 = vmatpush1.msra.mxu0 0.0
    %4963 = vmatprep.subr.mxu0 0.0
    %4964 = vmatpush1.msra.mxu0 0.0
    %4965 = vmatprep.subr.mxu0 0.0
    %4966 = vmatpush1.msra.mxu0 0.0
    %4967 = vmatprep.subr.mxu0 0.0
    %4968 = vmatpush1.msra.mxu0 0.0
    %4969 = vmatprep.subr.mxu0 0.0
    %4970 = vmatpush1.msra.mxu0 0.0
    %4971 = vmatprep.subr.mxu0 0.0
    %4972 = vmatpush1.msra.mxu0 0.0
    %4973 = vmatprep.subr.mxu0 0.0
    %4974 = vmatpush1.msra.mxu0 0.0
    %4975 = vmatprep.subr.mxu0 0.0
    %4976 = vmatpush1.msra.mxu0 0.0
    %4977 = vmatprep.subr.mxu0 0.0
    %4978 = vmatpush1.msra.mxu0 0.0
    %4979 = vmatprep.mubr.f32.mxu0 0.0
    %4980 = vmatmul.mubr.f32.gmra.mrb[0].mxu0 %v4910
    %v4981 = vpop.f32.mrb[0].mxu0
    %v4982 = vadd.f32 0.0, %v4981
    %v4983 = vpop.f32.mrb[0].mxu0
    %4984 = vdwg.mxu0
    %v4985 = vadd.f32 %v4901, %v4982
    %s4986 = scalar_lea.vmem %s5, 1120
    %v4987 = vld [vmem:[%s4986] sm:$0xff]
    %v4988 = vld [vmem:[%s4986 + $0x8] sm:$0xff]
    %v4989 = vld [vmem:[%s4986 + $0x10] sm:$0xff]
    %v4990 = vld [vmem:[%s4986 + $0x18] sm:$0xf]
    %v4991 = vrot.slane %v4389, 6
    %v4992 = vrot.slane %v4393, 5
    %v4993 = vsel %vm1694, %v4992, %v4991
    %v4994 = vsel %vm1509, %v4993, 0
    %v4997 = vsel %vm1698, %v4990, 0
    %4999 = vmatprep.subr.mxu0 0.0
    %5000 = vmatpush1.msra.mxu0 %v4987
    %5001 = vmatprep.subr.mxu0 0.0
    %5002 = vmatpush1.msra.mxu0 %v4988
    %5003 = vmatprep.subr.mxu0 0.0
    %5004 = vmatpush1.msra.mxu0 %v4989
    %5005 = vmatprep.subr.mxu0 0.0
    %5006 = vmatpush1.msra.mxu0 %v4997
    %5007 = vmatprep.subr.mxu0 0.0
    %5008 = vmatpush1.msra.mxu0 0.0
    %5009 = vmatprep.subr.mxu0 0.0
    %5010 = vmatpush1.msra.mxu0 0.0
    %5011 = vmatprep.subr.mxu0 0.0
    %5012 = vmatpush1.msra.mxu0 0.0
    %5013 = vmatprep.subr.mxu0 0.0
    %5014 = vmatpush1.msra.mxu0 0.0
    %5015 = vmatprep.subr.mxu0 0.0
    %5016 = vmatpush1.msra.mxu0 0.0
    %5017 = vmatprep.subr.mxu0 0.0
    %5018 = vmatpush1.msra.mxu0 0.0
    %5019 = vmatprep.subr.mxu0 0.0
    %5020 = vmatpush1.msra.mxu0 0.0
    %5021 = vmatprep.subr.mxu0 0.0
    %5022 = vmatpush1.msra.mxu0 0.0
    %5023 = vmatprep.subr.mxu0 0.0
    %5024 = vmatpush1.msra.mxu0 0.0
    %5025 = vmatprep.subr.mxu0 0.0
    %5026 = vmatpush1.msra.mxu0 0.0
    %5027 = vmatprep.subr.mxu0 0.0
    %5028 = vmatpush1.msra.mxu0 0.0
    %5029 = vmatprep.subr.mxu0 0.0
    %5030 = vmatpush1.msra.mxu0 0.0
    %5031 = vmatprep.subr.mxu0 0.0
    %5032 = vmatpush1.msra.mxu0 0.0
    %5033 = vmatprep.subr.mxu0 0.0
    %5034 = vmatpush1.msra.mxu0 0.0
    %5035 = vmatprep.subr.mxu0 0.0
    %5036 = vmatpush1.msra.mxu0 0.0
    %5037 = vmatprep.subr.mxu0 0.0
    %5038 = vmatpush1.msra.mxu0 0.0
    %5039 = vmatprep.subr.mxu0 0.0
    %5040 = vmatpush1.msra.mxu0 0.0
    %5041 = vmatprep.subr.mxu0 0.0
    %5042 = vmatpush1.msra.mxu0 0.0
    %5043 = vmatprep.subr.mxu0 0.0
    %5044 = vmatpush1.msra.mxu0 0.0
    %5045 = vmatprep.subr.mxu0 0.0
    %5046 = vmatpush1.msra.mxu0 0.0
    %5047 = vmatprep.subr.mxu0 0.0
    %5048 = vmatpush1.msra.mxu0 0.0
    %5049 = vmatprep.subr.mxu0 0.0
    %5050 = vmatpush1.msra.mxu0 0.0
    %5051 = vmatprep.subr.mxu0 0.0
    %5052 = vmatpush1.msra.mxu0 0.0
    %5053 = vmatprep.subr.mxu0 0.0
    %5054 = vmatpush1.msra.mxu0 0.0
    %5055 = vmatprep.subr.mxu0 0.0
    %5056 = vmatpush1.msra.mxu0 0.0
    %5057 = vmatprep.subr.mxu0 0.0
    %5058 = vmatpush1.msra.mxu0 0.0
    %5059 = vmatprep.subr.mxu0 0.0
    %5060 = vmatpush1.msra.mxu0 0.0
    %5061 = vmatprep.subr.mxu0 0.0
    %5062 = vmatpush1.msra.mxu0 0.0
    %5063 = vmatprep.mubr.f32.mxu0 0.0
    %5064 = vmatmul.mubr.f32.gmra.mrb[0].mxu0 %v4994
    %v5065 = vpop.f32.mrb[0].mxu0
    %v5066 = vadd.f32 0.0, %v5065
    %v5067 = vpop.f32.mrb[0].mxu0
    %5068 = vdwg.mxu0
    %v5069 = vadd.f32 %v4985, %v5066
    %s5070 = scalar_lea.vmem %s5, 1152
    %v5071 = vld [vmem:[%s5070] sm:$0xff]
    %v5072 = vld [vmem:[%s5070 + $0x8] sm:$0xff]
    %v5073 = vld [vmem:[%s5070 + $0x10] sm:$0xff]
    %v5074 = vld [vmem:[%s5070 + $0x18] sm:$0xf]
    %v5077 = vrot.slane %v4394, 7
    %v5078 = vsel %vm1694, %v5077, %v4390
    %v5079 = vsel %vm1509, %v5078, 0
    %v5082 = vsel %vm1698, %v5074, 0
    %5084 = vmatprep.subr.mxu0 0.0
    %5085 = vmatpush1.msra.mxu0 %v5071
    %5086 = vmatprep.subr.mxu0 0.0
    %5087 = vmatpush1.msra.mxu0 %v5072
    %5088 = vmatprep.subr.mxu0 0.0
    %5089 = vmatpush1.msra.mxu0 %v5073
    %5090 = vmatprep.subr.mxu0 0.0
    %5091 = vmatpush1.msra.mxu0 %v5082
    %5092 = vmatprep.subr.mxu0 0.0
    %5093 = vmatpush1.msra.mxu0 0.0
    %5094 = vmatprep.subr.mxu0 0.0
    %5095 = vmatpush1.msra.mxu0 0.0
    %5096 = vmatprep.subr.mxu0 0.0
    %5097 = vmatpush1.msra.mxu0 0.0
    %5098 = vmatprep.subr.mxu0 0.0
    %5099 = vmatpush1.msra.mxu0 0.0
    %5100 = vmatprep.subr.mxu0 0.0
    %5101 = vmatpush1.msra.mxu0 0.0
    %5102 = vmatprep.subr.mxu0 0.0
    %5103 = vmatpush1.msra.mxu0 0.0
    %5104 = vmatprep.subr.mxu0 0.0
    %5105 = vmatpush1.msra.mxu0 0.0
    %5106 = vmatprep.subr.mxu0 0.0
    %5107 = vmatpush1.msra.mxu0 0.0
    %5108 = vmatprep.subr.mxu0 0.0
    %5109 = vmatpush1.msra.mxu0 0.0
    %5110 = vmatprep.subr.mxu0 0.0
    %5111 = vmatpush1.msra.mxu0 0.0
    %5112 = vmatprep.subr.mxu0 0.0
    %5113 = vmatpush1.msra.mxu0 0.0
    %5114 = vmatprep.subr.mxu0 0.0
    %5115 = vmatpush1.msra.mxu0 0.0
    %5116 = vmatprep.subr.mxu0 0.0
    %5117 = vmatpush1.msra.mxu0 0.0
    %5118 = vmatprep.subr.mxu0 0.0
    %5119 = vmatpush1.msra.mxu0 0.0
    %5120 = vmatprep.subr.mxu0 0.0
    %5121 = vmatpush1.msra.mxu0 0.0
    %5122 = vmatprep.subr.mxu0 0.0
    %5123 = vmatpush1.msra.mxu0 0.0
    %5124 = vmatprep.subr.mxu0 0.0
    %5125 = vmatpush1.msra.mxu0 0.0
    %5126 = vmatprep.subr.mxu0 0.0
    %5127 = vmatpush1.msra.mxu0 0.0
    %5128 = vmatprep.subr.mxu0 0.0
    %5129 = vmatpush1.msra.mxu0 0.0
    %5130 = vmatprep.subr.mxu0 0.0
    %5131 = vmatpush1.msra.mxu0 0.0
    %5132 = vmatprep.subr.mxu0 0.0
    %5133 = vmatpush1.msra.mxu0 0.0
    %5134 = vmatprep.subr.mxu0 0.0
    %5135 = vmatpush1.msra.mxu0 0.0
    %5136 = vmatprep.subr.mxu0 0.0
    %5137 = vmatpush1.msra.mxu0 0.0
    %5138 = vmatprep.subr.mxu0 0.0
    %5139 = vmatpush1.msra.mxu0 0.0
    %5140 = vmatprep.subr.mxu0 0.0
    %5141 = vmatpush1.msra.mxu0 0.0
    %5142 = vmatprep.subr.mxu0 0.0
    %5143 = vmatpush1.msra.mxu0 0.0
    %5144 = vmatprep.subr.mxu0 0.0
    %5145 = vmatpush1.msra.mxu0 0.0
    %5146 = vmatprep.subr.mxu0 0.0
    %5147 = vmatpush1.msra.mxu0 0.0
    %5148 = vmatprep.mubr.f32.mxu0 0.0
    %5149 = vmatmul.mubr.f32.gmra.mrb[0].mxu0 %v5079
    %v5150 = vpop.f32.mrb[0].mxu0
    %v5151 = vadd.f32 0.0, %v5150
    %v5152 = vpop.f32.mrb[0].mxu0
    %5153 = vdwg.mxu0
    %v5154 = vadd.f32 %v5069, %v5151
    %s5155 = scalar_lea.vmem %s5, 1184
    %v5156 = vld [vmem:[%s5155] sm:$0xff]
    %v5157 = vld [vmem:[%s5155 + $0x8] sm:$0xff]
    %v5158 = vld [vmem:[%s5155 + $0x10] sm:$0xff]
    %v5159 = vld [vmem:[%s5155 + $0x18] sm:$0xf]
    %v5160 = vrot.slane %v4390, 2
    %v5161 = vrot.slane %v4394, 1
    %v5162 = vsel %vm1694, %v5161, %v5160
    %v5163 = vsel %vm1509, %v5162, 0
    %v5166 = vsel %vm1698, %v5159, 0
    %5168 = vmatprep.subr.mxu0 0.0
    %5169 = vmatpush1.msra.mxu0 %v5156
    %5170 = vmatprep.subr.mxu0 0.0
    %5171 = vmatpush1.msra.mxu0 %v5157
    %5172 = vmatprep.subr.mxu0 0.0
    %5173 = vmatpush1.msra.mxu0 %v5158
    %5174 = vmatprep.subr.mxu0 0.0
    %5175 = vmatpush1.msra.mxu0 %v5166
    %5176 = vmatprep.subr.mxu0 0.0
    %5177 = vmatpush1.msra.mxu0 0.0
    %5178 = vmatprep.subr.mxu0 0.0
    %5179 = vmatpush1.msra.mxu0 0.0
    %5180 = vmatprep.subr.mxu0 0.0
    %5181 = vmatpush1.msra.mxu0 0.0
    %5182 = vmatprep.subr.mxu0 0.0
    %5183 = vmatpush1.msra.mxu0 0.0
    %5184 = vmatprep.subr.mxu0 0.0
    %5185 = vmatpush1.msra.mxu0 0.0
    %5186 = vmatprep.subr.mxu0 0.0
    %5187 = vmatpush1.msra.mxu0 0.0
    %5188 = vmatprep.subr.mxu0 0.0
    %5189 = vmatpush1.msra.mxu0 0.0
    %5190 = vmatprep.subr.mxu0 0.0
    %5191 = vmatpush1.msra.mxu0 0.0
    %5192 = vmatprep.subr.mxu0 0.0
    %5193 = vmatpush1.msra.mxu0 0.0
    %5194 = vmatprep.subr.mxu0 0.0
    %5195 = vmatpush1.msra.mxu0 0.0
    %5196 = vmatprep.subr.mxu0 0.0
    %5197 = vmatpush1.msra.mxu0 0.0
    %5198 = vmatprep.subr.mxu0 0.0
    %5199 = vmatpush1.msra.mxu0 0.0
    %5200 = vmatprep.subr.mxu0 0.0
    %5201 = vmatpush1.msra.mxu0 0.0
    %5202 = vmatprep.subr.mxu0 0.0
    %5203 = vmatpush1.msra.mxu0 0.0
    %5204 = vmatprep.subr.mxu0 0.0
    %5205 = vmatpush1.msra.mxu0 0.0
    %5206 = vmatprep.subr.mxu0 0.0
    %5207 = vmatpush1.msra.mxu0 0.0
    %5208 = vmatprep.subr.mxu0 0.0
    %5209 = vmatpush1.msra.mxu0 0.0
    %5210 = vmatprep.subr.mxu0 0.0
    %5211 = vmatpush1.msra.mxu0 0.0
    %5212 = vmatprep.subr.mxu0 0.0
    %5213 = vmatpush1.msra.mxu0 0.0
    %5214 = vmatprep.subr.mxu0 0.0
    %5215 = vmatpush1.msra.mxu0 0.0
    %5216 = vmatprep.subr.mxu0 0.0
    %5217 = vmatpush1.msra.mxu0 0.0
    %5218 = vmatprep.subr.mxu0 0.0
    %5219 = vmatpush1.msra.mxu0 0.0
    %5220 = vmatprep.subr.mxu0 0.0
    %5221 = vmatpush1.msra.mxu0 0.0
    %5222 = vmatprep.subr.mxu0 0.0
    %5223 = vmatpush1.msra.mxu0 0.0
    %5224 = vmatprep.subr.mxu0 0.0
    %5225 = vmatpush1.msra.mxu0 0.0
    %5226 = vmatprep.subr.mxu0 0.0
    %5227 = vmatpush1.msra.mxu0 0.0
    %5228 = vmatprep.subr.mxu0 0.0
    %5229 = vmatpush1.msra.mxu0 0.0
    %5230 = vmatprep.subr.mxu0 0.0
    %5231 = vmatpush1.msra.mxu0 0.0
    %5232 = vmatprep.mubr.f32.mxu0 0.0
    %5233 = vmatmul.mubr.f32.gmra.mrb[0].mxu0 %v5163
    %v5234 = vpop.f32.mrb[0].mxu0
    %v5235 = vadd.f32 0.0, %v5234
    %v5236 = vpop.f32.mrb[0].mxu0
    %5237 = vdwg.mxu0
    %v5238 = vadd.f32 %v5154, %v5235
    %s5239 = scalar_lea.vmem %s5, 1216
    %v5240 = vld [vmem:[%s5239] sm:$0xff]
    %v5241 = vld [vmem:[%s5239 + $0x8] sm:$0xff]
    %v5242 = vld [vmem:[%s5239 + $0x10] sm:$0xff]
    %v5243 = vld [vmem:[%s5239 + $0x18] sm:$0xf]
    %v5244 = vrot.slane %v4390, 4
    %v5245 = vrot.slane %v4394, 3
    %v5246 = vsel %vm1694, %v5245, %v5244
    %v5247 = vsel %vm1509, %v5246, 0
    %v5250 = vsel %vm1698, %v5243, 0
    %5252 = vmatprep.subr.mxu0 0.0
    %5253 = vmatpush1.msra.mxu0 %v5240
    %5254 = vmatprep.subr.mxu0 0.0
    %5255 = vmatpush1.msra.mxu0 %v5241
    %5256 = vmatprep.subr.mxu0 0.0
    %5257 = vmatpush1.msra.mxu0 %v5242
    %5258 = vmatprep.subr.mxu0 0.0
    %5259 = vmatpush1.msra.mxu0 %v5250
    %5260 = vmatprep.subr.mxu0 0.0
    %5261 = vmatpush1.msra.mxu0 0.0
    %5262 = vmatprep.subr.mxu0 0.0
    %5263 = vmatpush1.msra.mxu0 0.0
    %5264 = vmatprep.subr.mxu0 0.0
    %5265 = vmatpush1.msra.mxu0 0.0
    %5266 = vmatprep.subr.mxu0 0.0
    %5267 = vmatpush1.msra.mxu0 0.0
    %5268 = vmatprep.subr.mxu0 0.0
    %5269 = vmatpush1.msra.mxu0 0.0
    %5270 = vmatprep.subr.mxu0 0.0
    %5271 = vmatpush1.msra.mxu0 0.0
    %5272 = vmatprep.subr.mxu0 0.0
    %5273 = vmatpush1.msra.mxu0 0.0
    %5274 = vmatprep.subr.mxu0 0.0
    %5275 = vmatpush1.msra.mxu0 0.0
    %5276 = vmatprep.subr.mxu0 0.0
    %5277 = vmatpush1.msra.mxu0 0.0
    %5278 = vmatprep.subr.mxu0 0.0
    %5279 = vmatpush1.msra.mxu0 0.0
    %5280 = vmatprep.subr.mxu0 0.0
    %5281 = vmatpush1.msra.mxu0 0.0
    %5282 = vmatprep.subr.mxu0 0.0
    %5283 = vmatpush1.msra.mxu0 0.0
    %5284 = vmatprep.subr.mxu0 0.0
    %5285 = vmatpush1.msra.mxu0 0.0
    %5286 = vmatprep.subr.mxu0 0.0
    %5287 = vmatpush1.msra.mxu0 0.0
    %5288 = vmatprep.subr.mxu0 0.0
    %5289 = vmatpush1.msra.mxu0 0.0
    %5290 = vmatprep.subr.mxu0 0.0
    %5291 = vmatpush1.msra.mxu0 0.0
    %5292 = vmatprep.subr.mxu0 0.0
    %5293 = vmatpush1.msra.mxu0 0.0
    %5294 = vmatprep.subr.mxu0 0.0
    %5295 = vmatpush1.msra.mxu0 0.0
    %5296 = vmatprep.subr.mxu0 0.0
    %5297 = vmatpush1.msra.mxu0 0.0
    %5298 = vmatprep.subr.mxu0 0.0
    %5299 = vmatpush1.msra.mxu0 0.0
    %5300 = vmatprep.subr.mxu0 0.0
    %5301 = vmatpush1.msra.mxu0 0.0
    %5302 = vmatprep.subr.mxu0 0.0
    %5303 = vmatpush1.msra.mxu0 0.0
    %5304 = vmatprep.subr.mxu0 0.0
    %5305 = vmatpush1.msra.mxu0 0.0
    %5306 = vmatprep.subr.mxu0 0.0
    %5307 = vmatpush1.msra.mxu0 0.0
    %5308 = vmatprep.subr.mxu0 0.0
    %5309 = vmatpush1.msra.mxu0 0.0
    %5310 = vmatprep.subr.mxu0 0.0
    %5311 = vmatpush1.msra.mxu0 0.0
    %5312 = vmatprep.subr.mxu0 0.0
    %5313 = vmatpush1.msra.mxu0 0.0
    %5314 = vmatprep.subr.mxu0 0.0
    %5315 = vmatpush1.msra.mxu0 0.0
    %5316 = vmatprep.mubr.f32.mxu0 0.0
    %5317 = vmatmul.mubr.f32.gmra.mrb[0].mxu0 %v5247
    %v5318 = vpop.f32.mrb[0].mxu0
    %v5319 = vadd.f32 0.0, %v5318
    %v5320 = vpop.f32.mrb[0].mxu0
    %5321 = vdwg.mxu0
    %v5322 = vadd.f32 %v5238, %v5319
    %s5323 = scalar_lea.vmem %s5, 1248
    %v5324 = vld [vmem:[%s5323] sm:$0xff]
    %v5325 = vld [vmem:[%s5323 + $0x8] sm:$0xff]
    %v5326 = vld [vmem:[%s5323 + $0x10] sm:$0xff]
    %v5327 = vld [vmem:[%s5323 + $0x18] sm:$0xf]
    %v5328 = vrot.slane %v4390, 6
    %v5329 = vrot.slane %v4394, 5
    %v5330 = vsel %vm1694, %v5329, %v5328
    %v5331 = vsel %vm1509, %v5330, 0
    %v5334 = vsel %vm1698, %v5327, 0
    %5336 = vmatprep.subr.mxu0 0.0
    %5337 = vmatpush1.msra.mxu0 %v5324
    %5338 = vmatprep.subr.mxu0 0.0
    %5339 = vmatpush1.msra.mxu0 %v5325
    %5340 = vmatprep.subr.mxu0 0.0
    %5341 = vmatpush1.msra.mxu0 %v5326
    %5342 = vmatprep.subr.mxu0 0.0
    %5343 = vmatpush1.msra.mxu0 %v5334
    %5344 = vmatprep.subr.mxu0 0.0
    %5345 = vmatpush1.msra.mxu0 0.0
    %5346 = vmatprep.subr.mxu0 0.0
    %5347 = vmatpush1.msra.mxu0 0.0
    %5348 = vmatprep.subr.mxu0 0.0
    %5349 = vmatpush1.msra.mxu0 0.0
    %5350 = vmatprep.subr.mxu0 0.0
    %5351 = vmatpush1.msra.mxu0 0.0
    %5352 = vmatprep.subr.mxu0 0.0
    %5353 = vmatpush1.msra.mxu0 0.0
    %5354 = vmatprep.subr.mxu0 0.0
    %5355 = vmatpush1.msra.mxu0 0.0
    %5356 = vmatprep.subr.mxu0 0.0
    %5357 = vmatpush1.msra.mxu0 0.0
    %5358 = vmatprep.subr.mxu0 0.0
    %5359 = vmatpush1.msra.mxu0 0.0
    %5360 = vmatprep.subr.mxu0 0.0
    %5361 = vmatpush1.msra.mxu0 0.0
    %5362 = vmatprep.subr.mxu0 0.0
    %5363 = vmatpush1.msra.mxu0 0.0
    %5364 = vmatprep.subr.mxu0 0.0
    %5365 = vmatpush1.msra.mxu0 0.0
    %5366 = vmatprep.subr.mxu0 0.0
    %5367 = vmatpush1.msra.mxu0 0.0
    %5368 = vmatprep.subr.mxu0 0.0
    %5369 = vmatpush1.msra.mxu0 0.0
    %5370 = vmatprep.subr.mxu0 0.0
    %5371 = vmatpush1.msra.mxu0 0.0
    %5372 = vmatprep.subr.mxu0 0.0
    %5373 = vmatpush1.msra.mxu0 0.0
    %5374 = vmatprep.subr.mxu0 0.0
    %5375 = vmatpush1.msra.mxu0 0.0
    %5376 = vmatprep.subr.mxu0 0.0
    %5377 = vmatpush1.msra.mxu0 0.0
    %5378 = vmatprep.subr.mxu0 0.0
    %5379 = vmatpush1.msra.mxu0 0.0
    %5380 = vmatprep.subr.mxu0 0.0
    %5381 = vmatpush1.msra.mxu0 0.0
    %5382 = vmatprep.subr.mxu0 0.0
    %5383 = vmatpush1.msra.mxu0 0.0
    %5384 = vmatprep.subr.mxu0 0.0
    %5385 = vmatpush1.msra.mxu0 0.0
    %5386 = vmatprep.subr.mxu0 0.0
    %5387 = vmatpush1.msra.mxu0 0.0
    %5388 = vmatprep.subr.mxu0 0.0
    %5389 = vmatpush1.msra.mxu0 0.0
    %5390 = vmatprep.subr.mxu0 0.0
    %5391 = vmatpush1.msra.mxu0 0.0
    %5392 = vmatprep.subr.mxu0 0.0
    %5393 = vmatpush1.msra.mxu0 0.0
    %5394 = vmatprep.subr.mxu0 0.0
    %5395 = vmatpush1.msra.mxu0 0.0
    %5396 = vmatprep.subr.mxu0 0.0
    %5397 = vmatpush1.msra.mxu0 0.0
    %5398 = vmatprep.subr.mxu0 0.0
    %5399 = vmatpush1.msra.mxu0 0.0
    %5400 = vmatprep.mubr.f32.mxu0 0.0
    %5401 = vmatmul.mubr.f32.gmra.mrb[0].mxu0 %v5331
    %v5402 = vpop.f32.mrb[0].mxu0
    %v5403 = vadd.f32 0.0, %v5402
    %v5404 = vpop.f32.mrb[0].mxu0
    %5405 = vdwg.mxu0
    %v5406 = vadd.f32 %v5322, %v5403
    %s5407 = scalar_lea.vmem %s5, 1280
    %v5408 = vld [vmem:[%s5407] sm:$0xff]
    %v5409 = vld [vmem:[%s5407 + $0x8] sm:$0xff]
    %v5410 = vld [vmem:[%s5407 + $0x10] sm:$0xff]
    %v5411 = vld [vmem:[%s5407 + $0x18] sm:$0xf]
    %v5414 = vrot.slane %v4395, 7
    %v5415 = vsel %vm1694, %v5414, %v4391
    %v5416 = vsel %vm1509, %v5415, 0
    %v5419 = vsel %vm1698, %v5411, 0
    %5421 = vmatprep.subr.mxu0 0.0
    %5422 = vmatpush1.msra.mxu0 %v5408
    %5423 = vmatprep.subr.mxu0 0.0
    %5424 = vmatpush1.msra.mxu0 %v5409
    %5425 = vmatprep.subr.mxu0 0.0
    %5426 = vmatpush1.msra.mxu0 %v5410
    %5427 = vmatprep.subr.mxu0 0.0
    %5428 = vmatpush1.msra.mxu0 %v5419
    %5429 = vmatprep.subr.mxu0 0.0
    %5430 = vmatpush1.msra.mxu0 0.0
    %5431 = vmatprep.subr.mxu0 0.0
    %5432 = vmatpush1.msra.mxu0 0.0
    %5433 = vmatprep.subr.mxu0 0.0
    %5434 = vmatpush1.msra.mxu0 0.0
    %5435 = vmatprep.subr.mxu0 0.0
    %5436 = vmatpush1.msra.mxu0 0.0
    %5437 = vmatprep.subr.mxu0 0.0
    %5438 = vmatpush1.msra.mxu0 0.0
    %5439 = vmatprep.subr.mxu0 0.0
    %5440 = vmatpush1.msra.mxu0 0.0
    %5441 = vmatprep.subr.mxu0 0.0
    %5442 = vmatpush1.msra.mxu0 0.0
    %5443 = vmatprep.subr.mxu0 0.0
    %5444 = vmatpush1.msra.mxu0 0.0
    %5445 = vmatprep.subr.mxu0 0.0
    %5446 = vmatpush1.msra.mxu0 0.0
    %5447 = vmatprep.subr.mxu0 0.0
    %5448 = vmatpush1.msra.mxu0 0.0
    %5449 = vmatprep.subr.mxu0 0.0
    %5450 = vmatpush1.msra.mxu0 0.0
    %5451 = vmatprep.subr.mxu0 0.0
    %5452 = vmatpush1.msra.mxu0 0.0
    %5453 = vmatprep.subr.mxu0 0.0
    %5454 = vmatpush1.msra.mxu0 0.0
    %5455 = vmatprep.subr.mxu0 0.0
    %5456 = vmatpush1.msra.mxu0 0.0
    %5457 = vmatprep.subr.mxu0 0.0
    %5458 = vmatpush1.msra.mxu0 0.0
    %5459 = vmatprep.subr.mxu0 0.0
    %5460 = vmatpush1.msra.mxu0 0.0
    %5461 = vmatprep.subr.mxu0 0.0
    %5462 = vmatpush1.msra.mxu0 0.0
    %5463 = vmatprep.subr.mxu0 0.0
    %5464 = vmatpush1.msra.mxu0 0.0
    %5465 = vmatprep.subr.mxu0 0.0
    %5466 = vmatpush1.msra.mxu0 0.0
    %5467 = vmatprep.subr.mxu0 0.0
    %5468 = vmatpush1.msra.mxu0 0.0
    %5469 = vmatprep.subr.mxu0 0.0
    %5470 = vmatpush1.msra.mxu0 0.0
    %5471 = vmatprep.subr.mxu0 0.0
    %5472 = vmatpush1.msra.mxu0 0.0
    %5473 = vmatprep.subr.mxu0 0.0
    %5474 = vmatpush1.msra.mxu0 0.0
    %5475 = vmatprep.subr.mxu0 0.0
    %5476 = vmatpush1.msra.mxu0 0.0
    %5477 = vmatprep.subr.mxu0 0.0
    %5478 = vmatpush1.msra.mxu0 0.0
    %5479 = vmatprep.subr.mxu0 0.0
    %5480 = vmatpush1.msra.mxu0 0.0
    %5481 = vmatprep.subr.mxu0 0.0
    %5482 = vmatpush1.msra.mxu0 0.0
    %5483 = vmatprep.subr.mxu0 0.0
    %5484 = vmatpush1.msra.mxu0 0.0
    %5485 = vmatprep.mubr.f32.mxu0 0.0
    %5486 = vmatmul.mubr.f32.gmra.mrb[0].mxu0 %v5416
    %v5487 = vpop.f32.mrb[0].mxu0
    %v5488 = vadd.f32 0.0, %v5487
    %v5489 = vpop.f32.mrb[0].mxu0
    %5490 = vdwg.mxu0
    %v5491 = vadd.f32 %v5406, %v5488
    %s5492 = scalar_lea.vmem %s5, 1312
    %v5493 = vld [vmem:[%s5492] sm:$0xff]
    %v5494 = vld [vmem:[%s5492 + $0x8] sm:$0xff]
    %v5495 = vld [vmem:[%s5492 + $0x10] sm:$0xff]
    %v5496 = vld [vmem:[%s5492 + $0x18] sm:$0xf]
    %v5497 = vrot.slane %v4391, 2
    %v5498 = vrot.slane %v4395, 1
    %v5499 = vsel %vm1694, %v5498, %v5497
    %v5500 = vsel %vm1509, %v5499, 0
    %v5503 = vsel %vm1698, %v5496, 0
    %5505 = vmatprep.subr.mxu0 0.0
    %5506 = vmatpush1.msra.mxu0 %v5493
    %5507 = vmatprep.subr.mxu0 0.0
    %5508 = vmatpush1.msra.mxu0 %v5494
    %5509 = vmatprep.subr.mxu0 0.0
    %5510 = vmatpush1.msra.mxu0 %v5495
    %5511 = vmatprep.subr.mxu0 0.0
    %5512 = vmatpush1.msra.mxu0 %v5503
    %5513 = vmatprep.subr.mxu0 0.0
    %5514 = vmatpush1.msra.mxu0 0.0
    %5515 = vmatprep.subr.mxu0 0.0
    %5516 = vmatpush1.msra.mxu0 0.0
    %5517 = vmatprep.subr.mxu0 0.0
    %5518 = vmatpush1.msra.mxu0 0.0
    %5519 = vmatprep.subr.mxu0 0.0
    %5520 = vmatpush1.msra.mxu0 0.0
    %5521 = vmatprep.subr.mxu0 0.0
    %5522 = vmatpush1.msra.mxu0 0.0
    %5523 = vmatprep.subr.mxu0 0.0
    %5524 = vmatpush1.msra.mxu0 0.0
    %5525 = vmatprep.subr.mxu0 0.0
    %5526 = vmatpush1.msra.mxu0 0.0
    %5527 = vmatprep.subr.mxu0 0.0
    %5528 = vmatpush1.msra.mxu0 0.0
    %5529 = vmatprep.subr.mxu0 0.0
    %5530 = vmatpush1.msra.mxu0 0.0
    %5531 = vmatprep.subr.mxu0 0.0
    %5532 = vmatpush1.msra.mxu0 0.0
    %5533 = vmatprep.subr.mxu0 0.0
    %5534 = vmatpush1.msra.mxu0 0.0
    %5535 = vmatprep.subr.mxu0 0.0
    %5536 = vmatpush1.msra.mxu0 0.0
    %5537 = vmatprep.subr.mxu0 0.0
    %5538 = vmatpush1.msra.mxu0 0.0
    %5539 = vmatprep.subr.mxu0 0.0
    %5540 = vmatpush1.msra.mxu0 0.0
    %5541 = vmatprep.subr.mxu0 0.0
    %5542 = vmatpush1.msra.mxu0 0.0
    %5543 = vmatprep.subr.mxu0 0.0
    %5544 = vmatpush1.msra.mxu0 0.0
    %5545 = vmatprep.subr.mxu0 0.0
    %5546 = vmatpush1.msra.mxu0 0.0
    %5547 = vmatprep.subr.mxu0 0.0
    %5548 = vmatpush1.msra.mxu0 0.0
    %5549 = vmatprep.subr.mxu0 0.0
    %5550 = vmatpush1.msra.mxu0 0.0
    %5551 = vmatprep.subr.mxu0 0.0
    %5552 = vmatpush1.msra.mxu0 0.0
    %5553 = vmatprep.subr.mxu0 0.0
    %5554 = vmatpush1.msra.mxu0 0.0
    %5555 = vmatprep.subr.mxu0 0.0
    %5556 = vmatpush1.msra.mxu0 0.0
    %5557 = vmatprep.subr.mxu0 0.0
    %5558 = vmatpush1.msra.mxu0 0.0
    %5559 = vmatprep.subr.mxu0 0.0
    %5560 = vmatpush1.msra.mxu0 0.0
    %5561 = vmatprep.subr.mxu0 0.0
    %5562 = vmatpush1.msra.mxu0 0.0
    %5563 = vmatprep.subr.mxu0 0.0
    %5564 = vmatpush1.msra.mxu0 0.0
    %5565 = vmatprep.subr.mxu0 0.0
    %5566 = vmatpush1.msra.mxu0 0.0
    %5567 = vmatprep.subr.mxu0 0.0
    %5568 = vmatpush1.msra.mxu0 0.0
    %5569 = vmatprep.mubr.f32.mxu0 0.0
    %5570 = vmatmul.mubr.f32.gmra.mrb[0].mxu0 %v5500
    %v5571 = vpop.f32.mrb[0].mxu0
    %v5572 = vadd.f32 0.0, %v5571
    %v5573 = vpop.f32.mrb[0].mxu0
    %5574 = vdwg.mxu0
    %v5575 = vadd.f32 %v5491, %v5572
    %v5576 = vld [vmem:[%s6] sm:$0x1]
    %v5578 = vlaneseq
    %v5579 = vshrl.u32 %v5578, 7
    %v5580 = vsub.s32 0, %v5579
    %v5581 = vrot.slane %v5576, %v5580
    %v5583 = vadd.f32 %v5575, %v5581
    %vm5584 = vcmask 74752
    %5585 = vst.msk [vmem:[#allocation10] sm:$0x3] %vm5584, %v5583
    // Predicated region
    $region46: #{net_forward.1} parent=1 // pred_check
      _
    $region47: #{net_forward.1} parent=1 // pred_check_branch
      %5587 = sbr.rel (0) target = $region49
    $region48: #{net_forward.1} parent=1 // pred_region
      %s5589 = ssub.s32 32, 32
      %5590 = vsyncadd [#allocation3], %s5589
      %s5592 = sshll.u32 [#allocation10], 4
      %s5593 = int_to_ptr.vmem [resolvable:$true] %s5592
      %5595 = dma.vmem_to_hbm [thread:$0]  %s5593, 32, %s7, [#allocation3]
    $region49: #{net_forward.1} parent=1 // pred_fallthru
      _
    // Predicated region
    $region50: #{net_forward.1} parent=1 // pred_check
      _
    $region51: #{net_forward.1} parent=1 // pred_check_branch
      %5597 = sbr.rel (0) target = $region53
    $region52: #{net_forward.1} parent=1 // pred_region
      %5598 = dma.done [#allocation3], 32
    $region53: #{net_forward.1} parent=1 // pred_fallthru
      _
    %5599 = vsyncpa [#allocation3], 1
    %5600 = vsyncpa [#allocation4], 1
    %5601 = vsyncpa [#allocation6], 1
    %5602 = vsyncpa [#allocation9], 1

</llo_original>
